<compile_context>
chip_gen: v5e
topology: v5e:2x2
jax: 0.10.0
libtpu: 0.0.40
codegen_flags: <defaults>
</compile_context>

<pallas_src>
import jax
import jax.numpy as jnp
from jax.experimental import pallas as pl
from jax.experimental.pallas import tpu as pltpu


# ------------------------------------------------------------------ kernel ---

def _make_inception_kernel(cin, H, W):
    """Build the fused inception kernel for a fixed (Cin, H, W)."""
    assert (W & (W - 1)) == 0, "W must be a power of two (mask uses bit-and)"
    HW = H * W
    # zero margin around the flattened image; covers the largest shift
    # (5x5 conv: 2 rows + 2 cols = 2*W+2 lanes), rounded up to 128 so the
    # interior store is lane-aligned.
    M = ((2 * W + 2 + 127) // 128) * 128

    def kernel(x_ref, w1_ref, w2_ref, w5_ref, w3a_ref, w3b_ref,
               b1_ref, b2_ref, b5_ref, b3a_ref, b3b_ref,
               o_ref, xpad, n2pad, n3apad, pbuf):
        f32 = jnp.float32

        # masks that zero out taps which would wrap across a row boundary
        col = jax.lax.broadcasted_iota(jnp.int32, (1, HW), 1)
        colx = jnp.bitwise_and(col, W - 1)                       # x coordinate
        masks = {ox: jnp.logical_and(colx + ox >= 0,
                                     colx + ox <= W - 1).astype(f32)
                 for ox in (-2, -1, 1, 2)}

        def tap(pad_ref, oy, ox):
            """Zero-padded image shifted by (oy, ox), flat (C, HW)."""
            d = oy * W + ox
            v = pad_ref[:, M + d:M + d + HW]
            if ox != 0:
                v = v * masks[ox]        # kill row-wrap columns
            return v

        def fill_padded(pad_ref, val):
            pad_ref[...] = jnp.zeros(pad_ref.shape, f32)
            pad_ref[:, M:M + HW] = val

        def conv_im2col(pad_ref, k, c_in, w_ref, b_ref):
            """k x k 'same' conv as ONE (Cout, k*k*c_in) @ (k*k*c_in, HW) matmul."""
            p = (k - 1) // 2
            i = 0
            for dy in range(k):
                for dx in range(k):
                    pbuf[i * c_in:(i + 1) * c_in, :] = tap(pad_ref, dy - p, dx - p)
                    i += 1
            kk = k * k * c_in
            return (jnp.dot(w_ref[...], pbuf[0:kk, :],
                            preferred_element_type=f32) + b_ref[...])

        x = x_ref[0]                                             # (Cin, HW)

        # ---- branch 2: 1x1 conv (Cin -> 16); also feeds branches 3 and 4 --
        net2 = jnp.dot(w2_ref[...], x, preferred_element_type=f32) + b2_ref[...]
        o_ref[0, 24:40, :] = net2

        # ---- branch 1: 3x3 avg pool (count_include_pad) -> 1x1 conv (->24) -
        fill_padded(xpad, x)
        acc = tap(xpad, -1, -1)
        for oy, ox in ((-1, 0), (-1, 1), (0, -1), (0, 0), (0, 1),
                       (1, -1), (1, 0), (1, 1)):
            acc = acc + tap(xpad, oy, ox)
        pooled = acc * (1.0 / 9.0)
        net1 = jnp.dot(w1_ref[...], pooled,
                       preferred_element_type=f32) + b1_ref[...]
        o_ref[0, 0:24, :] = net1

        # ---- branch 3: 5x5 conv (16 -> 24) on net2 -------------------------
        fill_padded(n2pad, net2)
        net3 = conv_im2col(n2pad, 5, 16, w5_ref, b5_ref)
        o_ref[0, 40:64, :] = net3

        # ---- branch 4: 3x3 (16 -> 24) then 3x3 (24 -> 24) on net2 ----------
        mid = conv_im2col(n2pad, 3, 16, w3a_ref, b3a_ref)
        fill_padded(n3apad, mid)
        net4 = conv_im2col(n3apad, 3, 24, w3b_ref, b3b_ref)
        o_ref[0, 64:88, :] = net4

    return kernel, M


# ----------------------------------------------------------------- wrapper ---

def inception_forward(x_nchw, params):
    """x_nchw: (N, Cin, H, W) f32 -> (N, 88, H, W), matching torch.cat order."""
    N, Cin, H, W = x_nchw.shape
    HW = H * W
    x_fl = x_nchw.reshape(N, Cin, HW).astype(jnp.float32)   # free XLA reshape

    def flat_w(w):               # (Cout, kH, kW, Cin) -> (Cout, kH*kW*Cin)
        return w.reshape(w.shape[0], -1)

    def col_b(b):                # (Cout,) -> (Cout, 1)
        return b.reshape(-1, 1)

    w1, b1 = params["branch1x1_1"]
    w2, b2 = params["branch1x1_2"]
    w5, b5 = params["branch5x5"]
    w3a, b3a = params["branch3x3_1"]
    w3b, b3b = params["branch3x3_2"]

    kernel, margin = _make_inception_kernel(Cin, H, W)

    def full(shape):
        nd = len(shape)
        return pl.BlockSpec(shape, lambda n: (0,) * nd)

    out = pl.pallas_call(
        kernel,
        out_shape=jax.ShapeDtypeStruct((N, 88, HW), jnp.float32),
        grid=(N,),
        in_specs=[
            pl.BlockSpec((1, Cin, HW), lambda n: (n, 0, 0)),     # x (flat)
            full((24, Cin)),                                     # w1 (1x1)
            full((16, Cin)),                                     # w2 (1x1)
            full((24, 5 * 5 * 16)),                              # w5 (5x5)
            full((24, 3 * 3 * 16)),                              # w3a (3x3)
            full((24, 3 * 3 * 24)),                              # w3b (3x3)
            full((24, 1)), full((16, 1)), full((24, 1)),         # b1 b2 b5
            full((24, 1)), full((24, 1)),                        # b3a b3b
        ],
        out_specs=pl.BlockSpec((1, 88, HW), lambda n: (n, 0, 0)),
        scratch_shapes=[
            pltpu.VMEM((Cin, HW + 2 * margin), jnp.float32),     # x, zero-margin
            pltpu.VMEM((16, HW + 2 * margin), jnp.float32),      # net2, zero-margin
            pltpu.VMEM((24, HW + 2 * margin), jnp.float32),      # 3x3 mid, zero-margin
            pltpu.VMEM((5 * 5 * 16, HW), jnp.float32),           # shared im2col buffer
        ],
        compiler_params=pltpu.CompilerParams(
            dimension_semantics=("parallel",)),
    )(x_fl,
      flat_w(w1), flat_w(w2), flat_w(w5), flat_w(w3a), flat_w(w3b),
      col_b(b1), col_b(b2), col_b(b5), col_b(b3a), col_b(b3b))

    return out.reshape(N, 88, H, W)                              # already NCHW


# -------------------------------------------------------------- parameters ---

def init_params(in_channels, key):
    """Same layer shapes / torch-style uniform init; weights kept as
    (Cout, kH, kW, Cin) so that flattening matches the kernel's (dy, dx, c)
    im2col ordering."""
    def conv_init(k, kh, kw, cin, cout):
        kkey, bkey = jax.random.split(k)
        bound = float((cin * kh * kw) ** -0.5)
        w = jax.random.uniform(kkey, (cout, kh, kw, cin),
                               minval=-bound, maxval=bound, dtype=jnp.float32)
        b = jax.random.uniform(bkey, (cout,),
                               minval=-bound, maxval=bound, dtype=jnp.float32)
        return w, b

    keys = jax.random.split(key, 5)
    return {
        "branch1x1_1": conv_init(keys[0], 1, 1, in_channels, 24),
        "branch1x1_2": conv_init(keys[1], 1, 1, in_channels, 16),
        "branch5x5":   conv_init(keys[2], 5, 5, 16, 24),
        "branch3x3_1": conv_init(keys[3], 3, 3, 16, 24),
        "branch3x3_2": conv_init(keys[4], 3, 3, 24, 24),
    }


# --------------------------------------------------------- pure-JAX reference

def reference_forward(x_nchw, params):
    def conv(x, wb, pad):
        w, b = wb
        w_oihw = jnp.transpose(w, (0, 3, 1, 2))
        y = jax.lax.conv_general_dilated(
            x, w_oihw, window_strides=(1, 1),
            padding=((pad, pad), (pad, pad)),
            dimension_numbers=("NCHW", "OIHW", "NCHW"),
            precision=jax.lax.Precision.HIGHEST)
        return y + b[None, :, None, None]

    def avgpool(x):
        _, _, H, W = x.shape
        xp = jnp.pad(x, ((0, 0), (0, 0), (1, 1), (1, 1)))
        s = 0.0
        for dy in range(3):
            for dx in range(3):
                s = s + xp[:, :, dy:dy + H, dx:dx + W]
        return s / 9.0

    net1 = conv(avgpool(x_nchw), params["branch1x1_1"], 0)
    net2 = conv(x_nchw, params["branch1x1_2"], 0)
    net3 = conv(net2, params["branch5x5"], 2)
    net4 = conv(conv(net2, params["branch3x3_1"], 1), params["branch3x3_2"], 1)
    return jnp.concatenate([net1, net2, net3, net4], axis=1)


# -------------------------------------------------------------------- main ----

if __name__ == "__main__":
    key = jax.random.PRNGKey(0)
    xkey, pkey = jax.random.split(key)

    N, C_IN, H, W = 2, 4, 16, 16
    x = jax.random.normal(xkey, (N, C_IN, H, W), dtype=jnp.float32)  # NCHW
    params = init_params(C_IN, pkey)

    out = jax.jit(inception_forward)(x, params)
    out = jax.block_until_ready(out)
    assert out.shape == (N, 24 + 16 + 24 + 24, H, W), out.shape

    ref = jax.block_until_ready(jax.jit(reference_forward)(x, params))
    max_err = float(jnp.max(jnp.abs(out - ref)))
    assert max_err < 5e-2, f"mismatch vs reference: max abs err {max_err}"

    print("KERNEL_OK")
</pallas_src>

<mosaic_0001>
module attributes {stable_mosaic.version = 11 : i64} {
  func.func @kernel(%arg0: i32, %arg1: memref<1x4x256xf32, #tpu.memory_space<vmem>>, %arg2: memref<24x4xf32, #tpu.memory_space<vmem>>, %arg3: memref<16x4xf32, #tpu.memory_space<vmem>>, %arg4: memref<24x400xf32, #tpu.memory_space<vmem>>, %arg5: memref<24x144xf32, #tpu.memory_space<vmem>>, %arg6: memref<24x216xf32, #tpu.memory_space<vmem>>, %arg7: memref<24x1xf32, #tpu.memory_space<vmem>>, %arg8: memref<16x1xf32, #tpu.memory_space<vmem>>, %arg9: memref<24x1xf32, #tpu.memory_space<vmem>>, %arg10: memref<24x1xf32, #tpu.memory_space<vmem>>, %arg11: memref<24x1xf32, #tpu.memory_space<vmem>>, %arg12: memref<1x88x256xf32, #tpu.memory_space<vmem>>, %arg13: memref<4x512xf32, #tpu.memory_space<vmem>>, %arg14: memref<16x512xf32, #tpu.memory_space<vmem>>, %arg15: memref<24x512xf32, #tpu.memory_space<vmem>>, %arg16: memref<400x256xf32, #tpu.memory_space<vmem>>) attributes {dimension_semantics = [#tpu.dimension_semantics<parallel>], iteration_bounds = array<i64: 2>, scalar_prefetch = 0 : i64, scratch_operands = 4 : i64, tpu.core_type = #tpu.core_type<tc>, window_params = [{transform_indices = @transform_0, window_bounds = array<i64: 1, 4, 256>}, {pipeline_mode = #tpu.pipeline_mode<synchronous>, transform_indices = @transform_1, window_bounds = array<i64: 24, 4>}, {pipeline_mode = #tpu.pipeline_mode<synchronous>, transform_indices = @transform_2, window_bounds = array<i64: 16, 4>}, {pipeline_mode = #tpu.pipeline_mode<synchronous>, transform_indices = @transform_3, window_bounds = array<i64: 24, 400>}, {pipeline_mode = #tpu.pipeline_mode<synchronous>, transform_indices = @transform_4, window_bounds = array<i64: 24, 144>}, {pipeline_mode = #tpu.pipeline_mode<synchronous>, transform_indices = @transform_5, window_bounds = array<i64: 24, 216>}, {pipeline_mode = #tpu.pipeline_mode<synchronous>, transform_indices = @transform_6, window_bounds = array<i64: 24, 1>}, {pipeline_mode = #tpu.pipeline_mode<synchronous>, transform_indices = @transform_7, window_bounds = array<i64: 16, 1>}, {pipeline_mode = #tpu.pipeline_mode<synchronous>, transform_indices = @transform_8, window_bounds = array<i64: 24, 1>}, {pipeline_mode = #tpu.pipeline_mode<synchronous>, transform_indices = @transform_9, window_bounds = array<i64: 24, 1>}, {pipeline_mode = #tpu.pipeline_mode<synchronous>, transform_indices = @transform_10, window_bounds = array<i64: 24, 1>}, {transform_indices = @transform_11, window_bounds = array<i64: 1, 88, 256>}]} {
    %0 = tpu.iota {dimensions = array<i32: 1>} : vector<1x256xi32>
    %c15_i32 = arith.constant 15 : i32
    %1 = vector.broadcast %c15_i32 : i32 to vector<1x256xi32>
    %2 = arith.andi %0, %1 : vector<1x256xi32>
    %c-2_i32 = arith.constant -2 : i32
    %3 = vector.broadcast %c-2_i32 : i32 to vector<1x256xi32>
    %4 = arith.addi %2, %3 : vector<1x256xi32>
    %c0_i32 = arith.constant 0 : i32
    %5 = vector.broadcast %c0_i32 : i32 to vector<1x256xi32>
    %6 = arith.cmpi sge, %4, %5 : vector<1x256xi32>
    %c-2_i32_0 = arith.constant -2 : i32
    %7 = vector.broadcast %c-2_i32_0 : i32 to vector<1x256xi32>
    %8 = arith.addi %2, %7 : vector<1x256xi32>
    %c15_i32_1 = arith.constant 15 : i32
    %9 = vector.broadcast %c15_i32_1 : i32 to vector<1x256xi32>
    %10 = arith.cmpi sle, %8, %9 : vector<1x256xi32>
    %11 = arith.andi %6, %10 : vector<1x256xi1>
    %12 = arith.extui %11 : vector<1x256xi1> to vector<1x256xi32>
    %13 = arith.sitofp %12 : vector<1x256xi32> to vector<1x256xf32>
    %c-1_i32 = arith.constant -1 : i32
    %14 = vector.broadcast %c-1_i32 : i32 to vector<1x256xi32>
    %15 = arith.addi %2, %14 : vector<1x256xi32>
    %c0_i32_2 = arith.constant 0 : i32
    %16 = vector.broadcast %c0_i32_2 : i32 to vector<1x256xi32>
    %17 = arith.cmpi sge, %15, %16 : vector<1x256xi32>
    %c-1_i32_3 = arith.constant -1 : i32
    %18 = vector.broadcast %c-1_i32_3 : i32 to vector<1x256xi32>
    %19 = arith.addi %2, %18 : vector<1x256xi32>
    %c15_i32_4 = arith.constant 15 : i32
    %20 = vector.broadcast %c15_i32_4 : i32 to vector<1x256xi32>
    %21 = arith.cmpi sle, %19, %20 : vector<1x256xi32>
    %22 = arith.andi %17, %21 : vector<1x256xi1>
    %23 = arith.extui %22 : vector<1x256xi1> to vector<1x256xi32>
    %24 = arith.sitofp %23 : vector<1x256xi32> to vector<1x256xf32>
    %c1_i32 = arith.constant 1 : i32
    %25 = vector.broadcast %c1_i32 : i32 to vector<1x256xi32>
    %26 = arith.addi %2, %25 : vector<1x256xi32>
    %c0_i32_5 = arith.constant 0 : i32
    %27 = vector.broadcast %c0_i32_5 : i32 to vector<1x256xi32>
    %28 = arith.cmpi sge, %26, %27 : vector<1x256xi32>
    %c1_i32_6 = arith.constant 1 : i32
    %29 = vector.broadcast %c1_i32_6 : i32 to vector<1x256xi32>
    %30 = arith.addi %2, %29 : vector<1x256xi32>
    %c15_i32_7 = arith.constant 15 : i32
    %31 = vector.broadcast %c15_i32_7 : i32 to vector<1x256xi32>
    %32 = arith.cmpi sle, %30, %31 : vector<1x256xi32>
    %33 = arith.andi %28, %32 : vector<1x256xi1>
    %34 = arith.extui %33 : vector<1x256xi1> to vector<1x256xi32>
    %35 = arith.sitofp %34 : vector<1x256xi32> to vector<1x256xf32>
    %c2_i32 = arith.constant 2 : i32
    %36 = vector.broadcast %c2_i32 : i32 to vector<1x256xi32>
    %37 = arith.addi %2, %36 : vector<1x256xi32>
    %c0_i32_8 = arith.constant 0 : i32
    %38 = vector.broadcast %c0_i32_8 : i32 to vector<1x256xi32>
    %39 = arith.cmpi sge, %37, %38 : vector<1x256xi32>
    %c2_i32_9 = arith.constant 2 : i32
    %40 = vector.broadcast %c2_i32_9 : i32 to vector<1x256xi32>
    %41 = arith.addi %2, %40 : vector<1x256xi32>
    %c15_i32_10 = arith.constant 15 : i32
    %42 = vector.broadcast %c15_i32_10 : i32 to vector<1x256xi32>
    %43 = arith.cmpi sle, %41, %42 : vector<1x256xi32>
    %44 = arith.andi %39, %43 : vector<1x256xi1>
    %45 = arith.extui %44 : vector<1x256xi1> to vector<1x256xi32>
    %46 = arith.sitofp %45 : vector<1x256xi32> to vector<1x256xf32>
    %c0 = arith.constant 0 : index
    %c0_11 = arith.constant 0 : index
    %c0_12 = arith.constant 0 : index
    %47 = vector.load %arg1[%c0, %c0_11, %c0_12] : memref<1x4x256xf32, #tpu.memory_space<vmem>>, vector<1x4x256xf32>
    %48 = vector.shape_cast %47 : vector<1x4x256xf32> to vector<4x256xf32>
    %c0_13 = arith.constant 0 : index
    %c0_14 = arith.constant 0 : index
    %49 = vector.load %arg3[%c0_13, %c0_14] : memref<16x4xf32, #tpu.memory_space<vmem>>, vector<16x4xf32>
    %cst = arith.constant dense<0.000000e+00> : vector<16x256xf32>
    %50 = tpu.matmul %49, %48, %cst {dimension_numbers = #tpu.dot_dimension_numbers<[1], [0], [0], [1], [0, 0, 1, 1], [], []>} : vector<16x4xf32>, vector<4x256xf32>, vector<16x256xf32> -> vector<16x256xf32>
    %c0_15 = arith.constant 0 : index
    %c0_16 = arith.constant 0 : index
    %51 = vector.load %arg8[%c0_15, %c0_16] : memref<16x1xf32, #tpu.memory_space<vmem>>, vector<16x1xf32>
    %52 = vector.broadcast %51 : vector<16x1xf32> to vector<16x256xf32>
    %53 = arith.addf %50, %52 : vector<16x256xf32>
    %c0_17 = arith.constant 0 : index
    %c24 = arith.constant 24 : index
    %c0_18 = arith.constant 0 : index
    %54 = vector.load %arg12[%c0_17, %c24, %c0_18] : memref<1x88x256xf32, #tpu.memory_space<vmem>>, vector<1x16x256xf32>
    %55 = vector.shape_cast %54 : vector<1x16x256xf32> to vector<16x256xf32>
    %56 = vector.shape_cast %53 : vector<16x256xf32> to vector<1x16x256xf32>
    tpu.vector_store %arg12[%c0_17, %c24, %c0_18], %56 {strides = array<i32>} : memref<1x88x256xf32, #tpu.memory_space<vmem>>, vector<1x16x256xf32>,
    %cst_19 = arith.constant 0.000000e+00 : f32
    %57 = vector.broadcast %cst_19 : f32 to vector<4x512xf32>
    %c0_20 = arith.constant 0 : index
    %c0_21 = arith.constant 0 : index
    %58 = vector.load %arg13[%c0_20, %c0_21] : memref<4x512xf32, #tpu.memory_space<vmem>>, vector<4x512xf32>
    tpu.vector_store %arg13[%c0_20, %c0_21], %57 {strides = array<i32>} : memref<4x512xf32, #tpu.memory_space<vmem>>, vector<4x512xf32>,
    %c0_22 = arith.constant 0 : index
    %c128 = arith.constant 128 : index
    %59 = vector.load %arg13[%c0_22, %c128] : memref<4x512xf32, #tpu.memory_space<vmem>>, vector<4x256xf32>
    tpu.vector_store %arg13[%c0_22, %c128], %48 {strides = array<i32>} : memref<4x512xf32, #tpu.memory_space<vmem>>, vector<4x256xf32>,
    %c0_23 = arith.constant 0 : index
    %c111 = arith.constant 111 : index
    %60 = vector.load %arg13[%c0_23, %c111] : memref<4x512xf32, #tpu.memory_space<vmem>>, vector<4x256xf32>
    %61 = vector.broadcast %24 : vector<1x256xf32> to vector<4x256xf32>
    %62 = arith.mulf %60, %61 : vector<4x256xf32>
    %c0_24 = arith.constant 0 : index
    %c112 = arith.constant 112 : index
    %63 = vector.load %arg13[%c0_24, %c112] : memref<4x512xf32, #tpu.memory_space<vmem>>, vector<4x256xf32>
    %64 = arith.addf %62, %63 : vector<4x256xf32>
    %c0_25 = arith.constant 0 : index
    %c113 = arith.constant 113 : index
    %65 = vector.load %arg13[%c0_25, %c113] : memref<4x512xf32, #tpu.memory_space<vmem>>, vector<4x256xf32>
    %66 = vector.broadcast %35 : vector<1x256xf32> to vector<4x256xf32>
    %67 = arith.mulf %65, %66 : vector<4x256xf32>
    %68 = arith.addf %64, %67 : vector<4x256xf32>
    %c0_26 = arith.constant 0 : index
    %c127 = arith.constant 127 : index
    %69 = vector.load %arg13[%c0_26, %c127] : memref<4x512xf32, #tpu.memory_space<vmem>>, vector<4x256xf32>
    %70 = vector.broadcast %24 : vector<1x256xf32> to vector<4x256xf32>
    %71 = arith.mulf %69, %70 : vector<4x256xf32>
    %72 = arith.addf %68, %71 : vector<4x256xf32>
    %c0_27 = arith.constant 0 : index
    %c128_28 = arith.constant 128 : index
    %73 = vector.load %arg13[%c0_27, %c128_28] : memref<4x512xf32, #tpu.memory_space<vmem>>, vector<4x256xf32>
    %74 = arith.addf %72, %73 : vector<4x256xf32>
    %c0_29 = arith.constant 0 : index
    %c129 = arith.constant 129 : index
    %75 = vector.load %arg13[%c0_29, %c129] : memref<4x512xf32, #tpu.memory_space<vmem>>, vector<4x256xf32>
    %76 = vector.broadcast %35 : vector<1x256xf32> to vector<4x256xf32>
    %77 = arith.mulf %75, %76 : vector<4x256xf32>
    %78 = arith.addf %74, %77 : vector<4x256xf32>
    %c0_30 = arith.constant 0 : index
    %c143 = arith.constant 143 : index
    %79 = vector.load %arg13[%c0_30, %c143] : memref<4x512xf32, #tpu.memory_space<vmem>>, vector<4x256xf32>
    %80 = vector.broadcast %24 : vector<1x256xf32> to vector<4x256xf32>
    %81 = arith.mulf %79, %80 : vector<4x256xf32>
    %82 = arith.addf %78, %81 : vector<4x256xf32>
    %c0_31 = arith.constant 0 : index
    %c144 = arith.constant 144 : index
    %83 = vector.load %arg13[%c0_31, %c144] : memref<4x512xf32, #tpu.memory_space<vmem>>, vector<4x256xf32>
    %84 = arith.addf %82, %83 : vector<4x256xf32>
    %c0_32 = arith.constant 0 : index
    %c145 = arith.constant 145 : index
    %85 = vector.load %arg13[%c0_32, %c145] : memref<4x512xf32, #tpu.memory_space<vmem>>, vector<4x256xf32>
    %86 = vector.broadcast %35 : vector<1x256xf32> to vector<4x256xf32>
    %87 = arith.mulf %85, %86 : vector<4x256xf32>
    %88 = arith.addf %84, %87 : vector<4x256xf32>
    %cst_33 = arith.constant 0.111111112 : f32
    %89 = vector.broadcast %cst_33 : f32 to vector<4x256xf32>
    %90 = arith.mulf %88, %89 : vector<4x256xf32>
    %c0_34 = arith.constant 0 : index
    %c0_35 = arith.constant 0 : index
    %91 = vector.load %arg2[%c0_34, %c0_35] : memref<24x4xf32, #tpu.memory_space<vmem>>, vector<24x4xf32>
    %cst_36 = arith.constant dense<0.000000e+00> : vector<24x256xf32>
    %92 = tpu.matmul %91, %90, %cst_36 {dimension_numbers = #tpu.dot_dimension_numbers<[1], [0], [0], [1], [0, 0, 1, 1], [], []>} : vector<24x4xf32>, vector<4x256xf32>, vector<24x256xf32> -> vector<24x256xf32>
    %c0_37 = arith.constant 0 : index
    %c0_38 = arith.constant 0 : index
    %93 = vector.load %arg7[%c0_37, %c0_38] : memref<24x1xf32, #tpu.memory_space<vmem>>, vector<24x1xf32>
    %94 = vector.broadcast %93 : vector<24x1xf32> to vector<24x256xf32>
    %95 = arith.addf %92, %94 : vector<24x256xf32>
    %c0_39 = arith.constant 0 : index
    %c0_40 = arith.constant 0 : index
    %c0_41 = arith.constant 0 : index
    %96 = vector.load %arg12[%c0_39, %c0_40, %c0_41] : memref<1x88x256xf32, #tpu.memory_space<vmem>>, vector<1x24x256xf32>
    %97 = vector.shape_cast %96 : vector<1x24x256xf32> to vector<24x256xf32>
    %98 = vector.shape_cast %95 : vector<24x256xf32> to vector<1x24x256xf32>
    tpu.vector_store %arg12[%c0_39, %c0_40, %c0_41], %98 {strides = array<i32>} : memref<1x88x256xf32, #tpu.memory_space<vmem>>, vector<1x24x256xf32>,
    %cst_42 = arith.constant 0.000000e+00 : f32
    %99 = vector.broadcast %cst_42 : f32 to vector<16x512xf32>
    %c0_43 = arith.constant 0 : index
    %c0_44 = arith.constant 0 : index
    %100 = vector.load %arg14[%c0_43, %c0_44] : memref<16x512xf32, #tpu.memory_space<vmem>>, vector<16x512xf32>
    tpu.vector_store %arg14[%c0_43, %c0_44], %99 {strides = array<i32>} : memref<16x512xf32, #tpu.memory_space<vmem>>, vector<16x512xf32>,
    %c0_45 = arith.constant 0 : index
    %c128_46 = arith.constant 128 : index
    %101 = vector.load %arg14[%c0_45, %c128_46] : memref<16x512xf32, #tpu.memory_space<vmem>>, vector<16x256xf32>
    tpu.vector_store %arg14[%c0_45, %c128_46], %53 {strides = array<i32>} : memref<16x512xf32, #tpu.memory_space<vmem>>, vector<16x256xf32>,
    %c0_47 = arith.constant 0 : index
    %c94 = arith.constant 94 : index
    %102 = vector.load %arg14[%c0_47, %c94] : memref<16x512xf32, #tpu.memory_space<vmem>>, vector<16x256xf32>
    %103 = vector.broadcast %13 : vector<1x256xf32> to vector<16x256xf32>
    %104 = arith.mulf %102, %103 : vector<16x256xf32>
    %c0_48 = arith.constant 0 : index
    %c0_49 = arith.constant 0 : index
    %105 = vector.load %arg16[%c0_48, %c0_49] : memref<400x256xf32, #tpu.memory_space<vmem>>, vector<16x256xf32>
    tpu.vector_store %arg16[%c0_48, %c0_49], %104 {strides = array<i32>} : memref<400x256xf32, #tpu.memory_space<vmem>>, vector<16x256xf32>,
    %c0_50 = arith.constant 0 : index
    %c95 = arith.constant 95 : index
    %106 = vector.load %arg14[%c0_50, %c95] : memref<16x512xf32, #tpu.memory_space<vmem>>, vector<16x256xf32>
    %107 = vector.broadcast %24 : vector<1x256xf32> to vector<16x256xf32>
    %108 = arith.mulf %106, %107 : vector<16x256xf32>
    %c16 = arith.constant 16 : index
    %c0_51 = arith.constant 0 : index
    %109 = vector.load %arg16[%c16, %c0_51] : memref<400x256xf32, #tpu.memory_space<vmem>>, vector<16x256xf32>
    tpu.vector_store %arg16[%c16, %c0_51], %108 {strides = array<i32>} : memref<400x256xf32, #tpu.memory_space<vmem>>, vector<16x256xf32>,
    %c0_52 = arith.constant 0 : index
    %c96 = arith.constant 96 : index
    %110 = vector.load %arg14[%c0_52, %c96] : memref<16x512xf32, #tpu.memory_space<vmem>>, vector<16x256xf32>
    %c32 = arith.constant 32 : index
    %c0_53 = arith.constant 0 : index
    %111 = vector.load %arg16[%c32, %c0_53] : memref<400x256xf32, #tpu.memory_space<vmem>>, vector<16x256xf32>
    tpu.vector_store %arg16[%c32, %c0_53], %110 {strides = array<i32>} : memref<400x256xf32, #tpu.memory_space<vmem>>, vector<16x256xf32>,
    %c0_54 = arith.constant 0 : index
    %c97 = arith.constant 97 : index
    %112 = vector.load %arg14[%c0_54, %c97] : memref<16x512xf32, #tpu.memory_space<vmem>>, vector<16x256xf32>
    %113 = vector.broadcast %35 : vector<1x256xf32> to vector<16x256xf32>
    %114 = arith.mulf %112, %113 : vector<16x256xf32>
    %c48 = arith.constant 48 : index
    %c0_55 = arith.constant 0 : index
    %115 = vector.load %arg16[%c48, %c0_55] : memref<400x256xf32, #tpu.memory_space<vmem>>, vector<16x256xf32>
    tpu.vector_store %arg16[%c48, %c0_55], %114 {strides = array<i32>} : memref<400x256xf32, #tpu.memory_space<vmem>>, vector<16x256xf32>,
    %c0_56 = arith.constant 0 : index
    %c98 = arith.constant 98 : index
    %116 = vector.load %arg14[%c0_56, %c98] : memref<16x512xf32, #tpu.memory_space<vmem>>, vector<16x256xf32>
    %117 = vector.broadcast %46 : vector<1x256xf32> to vector<16x256xf32>
    %118 = arith.mulf %116, %117 : vector<16x256xf32>
    %c64 = arith.constant 64 : index
    %c0_57 = arith.constant 0 : index
    %119 = vector.load %arg16[%c64, %c0_57] : memref<400x256xf32, #tpu.memory_space<vmem>>, vector<16x256xf32>
    tpu.vector_store %arg16[%c64, %c0_57], %118 {strides = array<i32>} : memref<400x256xf32, #tpu.memory_space<vmem>>, vector<16x256xf32>,
    %c0_58 = arith.constant 0 : index
    %c110 = arith.constant 110 : index
    %120 = vector.load %arg14[%c0_58, %c110] : memref<16x512xf32, #tpu.memory_space<vmem>>, vector<16x256xf32>
    %121 = vector.broadcast %13 : vector<1x256xf32> to vector<16x256xf32>
    %122 = arith.mulf %120, %121 : vector<16x256xf32>
    %c80 = arith.constant 80 : index
    %c0_59 = arith.constant 0 : index
    %123 = vector.load %arg16[%c80, %c0_59] : memref<400x256xf32, #tpu.memory_space<vmem>>, vector<16x256xf32>
    tpu.vector_store %arg16[%c80, %c0_59], %122 {strides = array<i32>} : memref<400x256xf32, #tpu.memory_space<vmem>>, vector<16x256xf32>,
    %c0_60 = arith.constant 0 : index
    %c111_61 = arith.constant 111 : index
    %124 = vector.load %arg14[%c0_60, %c111_61] : memref<16x512xf32, #tpu.memory_space<vmem>>, vector<16x256xf32>
    %125 = vector.broadcast %24 : vector<1x256xf32> to vector<16x256xf32>
    %126 = arith.mulf %124, %125 : vector<16x256xf32>
    %c96_62 = arith.constant 96 : index
    %c0_63 = arith.constant 0 : index
    %127 = vector.load %arg16[%c96_62, %c0_63] : memref<400x256xf32, #tpu.memory_space<vmem>>, vector<16x256xf32>
    tpu.vector_store %arg16[%c96_62, %c0_63], %126 {strides = array<i32>} : memref<400x256xf32, #tpu.memory_space<vmem>>, vector<16x256xf32>,
    %c0_64 = arith.constant 0 : index
    %c112_65 = arith.constant 112 : index
    %128 = vector.load %arg14[%c0_64, %c112_65] : memref<16x512xf32, #tpu.memory_space<vmem>>, vector<16x256xf32>
    %c112_66 = arith.constant 112 : index
    %c0_67 = arith.constant 0 : index
    %129 = vector.load %arg16[%c112_66, %c0_67] : memref<400x256xf32, #tpu.memory_space<vmem>>, vector<16x256xf32>
    tpu.vector_store %arg16[%c112_66, %c0_67], %128 {strides = array<i32>} : memref<400x256xf32, #tpu.memory_space<vmem>>, vector<16x256xf32>,
    %c0_68 = arith.constant 0 : index
    %c113_69 = arith.constant 113 : index
    %130 = vector.load %arg14[%c0_68, %c113_69] : memref<16x512xf32, #tpu.memory_space<vmem>>, vector<16x256xf32>
    %131 = vector.broadcast %35 : vector<1x256xf32> to vector<16x256xf32>
    %132 = arith.mulf %130, %131 : vector<16x256xf32>
    %c128_70 = arith.constant 128 : index
    %c0_71 = arith.constant 0 : index
    %133 = vector.load %arg16[%c128_70, %c0_71] : memref<400x256xf32, #tpu.memory_space<vmem>>, vector<16x256xf32>
    tpu.vector_store %arg16[%c128_70, %c0_71], %132 {strides = array<i32>} : memref<400x256xf32, #tpu.memory_space<vmem>>, vector<16x256xf32>,
    %c0_72 = arith.constant 0 : index
    %c114 = arith.constant 114 : index
    %134 = vector.load %arg14[%c0_72, %c114] : memref<16x512xf32, #tpu.memory_space<vmem>>, vector<16x256xf32>
    %135 = vector.broadcast %46 : vector<1x256xf32> to vector<16x256xf32>
    %136 = arith.mulf %134, %135 : vector<16x256xf32>
    %c144_73 = arith.constant 144 : index
    %c0_74 = arith.constant 0 : index
    %137 = vector.load %arg16[%c144_73, %c0_74] : memref<400x256xf32, #tpu.memory_space<vmem>>, vector<16x256xf32>
    tpu.vector_store %arg16[%c144_73, %c0_74], %136 {strides = array<i32>} : memref<400x256xf32, #tpu.memory_space<vmem>>, vector<16x256xf32>,
    %c0_75 = arith.constant 0 : index
    %c126 = arith.constant 126 : index
    %138 = vector.load %arg14[%c0_75, %c126] : memref<16x512xf32, #tpu.memory_space<vmem>>, vector<16x256xf32>
    %139 = vector.broadcast %13 : vector<1x256xf32> to vector<16x256xf32>
    %140 = arith.mulf %138, %139 : vector<16x256xf32>
    %c160 = arith.constant 160 : index
    %c0_76 = arith.constant 0 : index
    %141 = vector.load %arg16[%c160, %c0_76] : memref<400x256xf32, #tpu.memory_space<vmem>>, vector<16x256xf32>
    tpu.vector_store %arg16[%c160, %c0_76], %140 {strides = array<i32>} : memref<400x256xf32, #tpu.memory_space<vmem>>, vector<16x256xf32>,
    %c0_77 = arith.constant 0 : index
    %c127_78 = arith.constant 127 : index
    %142 = vector.load %arg14[%c0_77, %c127_78] : memref<16x512xf32, #tpu.memory_space<vmem>>, vector<16x256xf32>
    %143 = vector.broadcast %24 : vector<1x256xf32> to vector<16x256xf32>
    %144 = arith.mulf %142, %143 : vector<16x256xf32>
    %c176 = arith.constant 176 : index
    %c0_79 = arith.constant 0 : index
    %145 = vector.load %arg16[%c176, %c0_79] : memref<400x256xf32, #tpu.memory_space<vmem>>, vector<16x256xf32>
    tpu.vector_store %arg16[%c176, %c0_79], %144 {strides = array<i32>} : memref<400x256xf32, #tpu.memory_space<vmem>>, vector<16x256xf32>,
    %c0_80 = arith.constant 0 : index
    %c128_81 = arith.constant 128 : index
    %146 = vector.load %arg14[%c0_80, %c128_81] : memref<16x512xf32, #tpu.memory_space<vmem>>, vector<16x256xf32>
    %c192 = arith.constant 192 : index
    %c0_82 = arith.constant 0 : index
    %147 = vector.load %arg16[%c192, %c0_82] : memref<400x256xf32, #tpu.memory_space<vmem>>, vector<16x256xf32>
    tpu.vector_store %arg16[%c192, %c0_82], %146 {strides = array<i32>} : memref<400x256xf32, #tpu.memory_space<vmem>>, vector<16x256xf32>,
    %c0_83 = arith.constant 0 : index
    %c129_84 = arith.constant 129 : index
    %148 = vector.load %arg14[%c0_83, %c129_84] : memref<16x512xf32, #tpu.memory_space<vmem>>, vector<16x256xf32>
    %149 = vector.broadcast %35 : vector<1x256xf32> to vector<16x256xf32>
    %150 = arith.mulf %148, %149 : vector<16x256xf32>
    %c208 = arith.constant 208 : index
    %c0_85 = arith.constant 0 : index
    %151 = vector.load %arg16[%c208, %c0_85] : memref<400x256xf32, #tpu.memory_space<vmem>>, vector<16x256xf32>
    tpu.vector_store %arg16[%c208, %c0_85], %150 {strides = array<i32>} : memref<400x256xf32, #tpu.memory_space<vmem>>, vector<16x256xf32>,
    %c0_86 = arith.constant 0 : index
    %c130 = arith.constant 130 : index
    %152 = vector.load %arg14[%c0_86, %c130] : memref<16x512xf32, #tpu.memory_space<vmem>>, vector<16x256xf32>
    %153 = vector.broadcast %46 : vector<1x256xf32> to vector<16x256xf32>
    %154 = arith.mulf %152, %153 : vector<16x256xf32>
    %c224 = arith.constant 224 : index
    %c0_87 = arith.constant 0 : index
    %155 = vector.load %arg16[%c224, %c0_87] : memref<400x256xf32, #tpu.memory_space<vmem>>, vector<16x256xf32>
    tpu.vector_store %arg16[%c224, %c0_87], %154 {strides = array<i32>} : memref<400x256xf32, #tpu.memory_space<vmem>>, vector<16x256xf32>,
    %c0_88 = arith.constant 0 : index
    %c142 = arith.constant 142 : index
    %156 = vector.load %arg14[%c0_88, %c142] : memref<16x512xf32, #tpu.memory_space<vmem>>, vector<16x256xf32>
    %157 = vector.broadcast %13 : vector<1x256xf32> to vector<16x256xf32>
    %158 = arith.mulf %156, %157 : vector<16x256xf32>
    %c240 = arith.constant 240 : index
    %c0_89 = arith.constant 0 : index
    %159 = vector.load %arg16[%c240, %c0_89] : memref<400x256xf32, #tpu.memory_space<vmem>>, vector<16x256xf32>
    tpu.vector_store %arg16[%c240, %c0_89], %158 {strides = array<i32>} : memref<400x256xf32, #tpu.memory_space<vmem>>, vector<16x256xf32>,
    %c0_90 = arith.constant 0 : index
    %c143_91 = arith.constant 143 : index
    %160 = vector.load %arg14[%c0_90, %c143_91] : memref<16x512xf32, #tpu.memory_space<vmem>>, vector<16x256xf32>
    %161 = vector.broadcast %24 : vector<1x256xf32> to vector<16x256xf32>
    %162 = arith.mulf %160, %161 : vector<16x256xf32>
    %c256 = arith.constant 256 : index
    %c0_92 = arith.constant 0 : index
    %163 = vector.load %arg16[%c256, %c0_92] : memref<400x256xf32, #tpu.memory_space<vmem>>, vector<16x256xf32>
    tpu.vector_store %arg16[%c256, %c0_92], %162 {strides = array<i32>} : memref<400x256xf32, #tpu.memory_space<vmem>>, vector<16x256xf32>,
    %c0_93 = arith.constant 0 : index
    %c144_94 = arith.constant 144 : index
    %164 = vector.load %arg14[%c0_93, %c144_94] : memref<16x512xf32, #tpu.memory_space<vmem>>, vector<16x256xf32>
    %c272 = arith.constant 272 : index
    %c0_95 = arith.constant 0 : index
    %165 = vector.load %arg16[%c272, %c0_95] : memref<400x256xf32, #tpu.memory_space<vmem>>, vector<16x256xf32>
    tpu.vector_store %arg16[%c272, %c0_95], %164 {strides = array<i32>} : memref<400x256xf32, #tpu.memory_space<vmem>>, vector<16x256xf32>,
    %c0_96 = arith.constant 0 : index
    %c145_97 = arith.constant 145 : index
    %166 = vector.load %arg14[%c0_96, %c145_97] : memref<16x512xf32, #tpu.memory_space<vmem>>, vector<16x256xf32>
    %167 = vector.broadcast %35 : vector<1x256xf32> to vector<16x256xf32>
    %168 = arith.mulf %166, %167 : vector<16x256xf32>
    %c288 = arith.constant 288 : index
    %c0_98 = arith.constant 0 : index
    %169 = vector.load %arg16[%c288, %c0_98] : memref<400x256xf32, #tpu.memory_space<vmem>>, vector<16x256xf32>
    tpu.vector_store %arg16[%c288, %c0_98], %168 {strides = array<i32>} : memref<400x256xf32, #tpu.memory_space<vmem>>, vector<16x256xf32>,
    %c0_99 = arith.constant 0 : index
    %c146 = arith.constant 146 : index
    %170 = vector.load %arg14[%c0_99, %c146] : memref<16x512xf32, #tpu.memory_space<vmem>>, vector<16x256xf32>
    %171 = vector.broadcast %46 : vector<1x256xf32> to vector<16x256xf32>
    %172 = arith.mulf %170, %171 : vector<16x256xf32>
    %c304 = arith.constant 304 : index
    %c0_100 = arith.constant 0 : index
    %173 = vector.load %arg16[%c304, %c0_100] : memref<400x256xf32, #tpu.memory_space<vmem>>, vector<16x256xf32>
    tpu.vector_store %arg16[%c304, %c0_100], %172 {strides = array<i32>} : memref<400x256xf32, #tpu.memory_space<vmem>>, vector<16x256xf32>,
    %c0_101 = arith.constant 0 : index
    %c158 = arith.constant 158 : index
    %174 = vector.load %arg14[%c0_101, %c158] : memref<16x512xf32, #tpu.memory_space<vmem>>, vector<16x256xf32>
    %175 = vector.broadcast %13 : vector<1x256xf32> to vector<16x256xf32>
    %176 = arith.mulf %174, %175 : vector<16x256xf32>
    %c320 = arith.constant 320 : index
    %c0_102 = arith.constant 0 : index
    %177 = vector.load %arg16[%c320, %c0_102] : memref<400x256xf32, #tpu.memory_space<vmem>>, vector<16x256xf32>
    tpu.vector_store %arg16[%c320, %c0_102], %176 {strides = array<i32>} : memref<400x256xf32, #tpu.memory_space<vmem>>, vector<16x256xf32>,
    %c0_103 = arith.constant 0 : index
    %c159 = arith.constant 159 : index
    %178 = vector.load %arg14[%c0_103, %c159] : memref<16x512xf32, #tpu.memory_space<vmem>>, vector<16x256xf32>
    %179 = vector.broadcast %24 : vector<1x256xf32> to vector<16x256xf32>
    %180 = arith.mulf %178, %179 : vector<16x256xf32>
    %c336 = arith.constant 336 : index
    %c0_104 = arith.constant 0 : index
    %181 = vector.load %arg16[%c336, %c0_104] : memref<400x256xf32, #tpu.memory_space<vmem>>, vector<16x256xf32>
    tpu.vector_store %arg16[%c336, %c0_104], %180 {strides = array<i32>} : memref<400x256xf32, #tpu.memory_space<vmem>>, vector<16x256xf32>,
    %c0_105 = arith.constant 0 : index
    %c160_106 = arith.constant 160 : index
    %182 = vector.load %arg14[%c0_105, %c160_106] : memref<16x512xf32, #tpu.memory_space<vmem>>, vector<16x256xf32>
    %c352 = arith.constant 352 : index
    %c0_107 = arith.constant 0 : index
    %183 = vector.load %arg16[%c352, %c0_107] : memref<400x256xf32, #tpu.memory_space<vmem>>, vector<16x256xf32>
    tpu.vector_store %arg16[%c352, %c0_107], %182 {strides = array<i32>} : memref<400x256xf32, #tpu.memory_space<vmem>>, vector<16x256xf32>,
    %c0_108 = arith.constant 0 : index
    %c161 = arith.constant 161 : index
    %184 = vector.load %arg14[%c0_108, %c161] : memref<16x512xf32, #tpu.memory_space<vmem>>, vector<16x256xf32>
    %185 = vector.broadcast %35 : vector<1x256xf32> to vector<16x256xf32>
    %186 = arith.mulf %184, %185 : vector<16x256xf32>
    %c368 = arith.constant 368 : index
    %c0_109 = arith.constant 0 : index
    %187 = vector.load %arg16[%c368, %c0_109] : memref<400x256xf32, #tpu.memory_space<vmem>>, vector<16x256xf32>
    tpu.vector_store %arg16[%c368, %c0_109], %186 {strides = array<i32>} : memref<400x256xf32, #tpu.memory_space<vmem>>, vector<16x256xf32>,
    %c0_110 = arith.constant 0 : index
    %c162 = arith.constant 162 : index
    %188 = vector.load %arg14[%c0_110, %c162] : memref<16x512xf32, #tpu.memory_space<vmem>>, vector<16x256xf32>
    %189 = vector.broadcast %46 : vector<1x256xf32> to vector<16x256xf32>
    %190 = arith.mulf %188, %189 : vector<16x256xf32>
    %c384 = arith.constant 384 : index
    %c0_111 = arith.constant 0 : index
    %191 = vector.load %arg16[%c384, %c0_111] : memref<400x256xf32, #tpu.memory_space<vmem>>, vector<16x256xf32>
    tpu.vector_store %arg16[%c384, %c0_111], %190 {strides = array<i32>} : memref<400x256xf32, #tpu.memory_space<vmem>>, vector<16x256xf32>,
    %c0_112 = arith.constant 0 : index
    %c0_113 = arith.constant 0 : index
    %192 = vector.load %arg4[%c0_112, %c0_113] : memref<24x400xf32, #tpu.memory_space<vmem>>, vector<24x400xf32>
    %c0_114 = arith.constant 0 : index
    %c0_115 = arith.constant 0 : index
    %193 = vector.load %arg16[%c0_114, %c0_115] : memref<400x256xf32, #tpu.memory_space<vmem>>, vector<400x256xf32>
    %cst_116 = arith.constant dense<0.000000e+00> : vector<24x256xf32>
    %194 = tpu.matmul %192, %193, %cst_116 {dimension_numbers = #tpu.dot_dimension_numbers<[1], [0], [0], [1], [0, 0, 1, 1], [], []>} : vector<24x400xf32>, vector<400x256xf32>, vector<24x256xf32> -> vector<24x256xf32>
    %c0_117 = arith.constant 0 : index
    %c0_118 = arith.constant 0 : index
    %195 = vector.load %arg9[%c0_117, %c0_118] : memref<24x1xf32, #tpu.memory_space<vmem>>, vector<24x1xf32>
    %196 = vector.broadcast %195 : vector<24x1xf32> to vector<24x256xf32>
    %197 = arith.addf %194, %196 : vector<24x256xf32>
    %c0_119 = arith.constant 0 : index
    %c40 = arith.constant 40 : index
    %c0_120 = arith.constant 0 : index
    %198 = vector.load %arg12[%c0_119, %c40, %c0_120] : memref<1x88x256xf32, #tpu.memory_space<vmem>>, vector<1x24x256xf32>
    %199 = vector.shape_cast %198 : vector<1x24x256xf32> to vector<24x256xf32>
    %200 = vector.shape_cast %197 : vector<24x256xf32> to vector<1x24x256xf32>
    tpu.vector_store %arg12[%c0_119, %c40, %c0_120], %200 {strides = array<i32>} : memref<1x88x256xf32, #tpu.memory_space<vmem>>, vector<1x24x256xf32>,
    %c0_121 = arith.constant 0 : index
    %c111_122 = arith.constant 111 : index
    %201 = vector.load %arg14[%c0_121, %c111_122] : memref<16x512xf32, #tpu.memory_space<vmem>>, vector<16x256xf32>
    %202 = vector.broadcast %24 : vector<1x256xf32> to vector<16x256xf32>
    %203 = arith.mulf %201, %202 : vector<16x256xf32>
    %c0_123 = arith.constant 0 : index
    %c0_124 = arith.constant 0 : index
    %204 = vector.load %arg16[%c0_123, %c0_124] : memref<400x256xf32, #tpu.memory_space<vmem>>, vector<16x256xf32>
    tpu.vector_store %arg16[%c0_123, %c0_124], %203 {strides = array<i32>} : memref<400x256xf32, #tpu.memory_space<vmem>>, vector<16x256xf32>,
    %c0_125 = arith.constant 0 : index
    %c112_126 = arith.constant 112 : index
    %205 = vector.load %arg14[%c0_125, %c112_126] : memref<16x512xf32, #tpu.memory_space<vmem>>, vector<16x256xf32>
    %c16_127 = arith.constant 16 : index
    %c0_128 = arith.constant 0 : index
    %206 = vector.load %arg16[%c16_127, %c0_128] : memref<400x256xf32, #tpu.memory_space<vmem>>, vector<16x256xf32>
    tpu.vector_store %arg16[%c16_127, %c0_128], %205 {strides = array<i32>} : memref<400x256xf32, #tpu.memory_space<vmem>>, vector<16x256xf32>,
    %c0_129 = arith.constant 0 : index
    %c113_130 = arith.constant 113 : index
    %207 = vector.load %arg14[%c0_129, %c113_130] : memref<16x512xf32, #tpu.memory_space<vmem>>, vector<16x256xf32>
    %208 = vector.broadcast %35 : vector<1x256xf32> to vector<16x256xf32>
    %209 = arith.mulf %207, %208 : vector<16x256xf32>
    %c32_131 = arith.constant 32 : index
    %c0_132 = arith.constant 0 : index
    %210 = vector.load %arg16[%c32_131, %c0_132] : memref<400x256xf32, #tpu.memory_space<vmem>>, vector<16x256xf32>
    tpu.vector_store %arg16[%c32_131, %c0_132], %209 {strides = array<i32>} : memref<400x256xf32, #tpu.memory_space<vmem>>, vector<16x256xf32>,
    %c0_133 = arith.constant 0 : index
    %c127_134 = arith.constant 127 : index
    %211 = vector.load %arg14[%c0_133, %c127_134] : memref<16x512xf32, #tpu.memory_space<vmem>>, vector<16x256xf32>
    %212 = vector.broadcast %24 : vector<1x256xf32> to vector<16x256xf32>
    %213 = arith.mulf %211, %212 : vector<16x256xf32>
    %c48_135 = arith.constant 48 : index
    %c0_136 = arith.constant 0 : index
    %214 = vector.load %arg16[%c48_135, %c0_136] : memref<400x256xf32, #tpu.memory_space<vmem>>, vector<16x256xf32>
    tpu.vector_store %arg16[%c48_135, %c0_136], %213 {strides = array<i32>} : memref<400x256xf32, #tpu.memory_space<vmem>>, vector<16x256xf32>,
    %c0_137 = arith.constant 0 : index
    %c128_138 = arith.constant 128 : index
    %215 = vector.load %arg14[%c0_137, %c128_138] : memref<16x512xf32, #tpu.memory_space<vmem>>, vector<16x256xf32>
    %c64_139 = arith.constant 64 : index
    %c0_140 = arith.constant 0 : index
    %216 = vector.load %arg16[%c64_139, %c0_140] : memref<400x256xf32, #tpu.memory_space<vmem>>, vector<16x256xf32>
    tpu.vector_store %arg16[%c64_139, %c0_140], %215 {strides = array<i32>} : memref<400x256xf32, #tpu.memory_space<vmem>>, vector<16x256xf32>,
    %c0_141 = arith.constant 0 : index
    %c129_142 = arith.constant 129 : index
    %217 = vector.load %arg14[%c0_141, %c129_142] : memref<16x512xf32, #tpu.memory_space<vmem>>, vector<16x256xf32>
    %218 = vector.broadcast %35 : vector<1x256xf32> to vector<16x256xf32>
    %219 = arith.mulf %217, %218 : vector<16x256xf32>
    %c80_143 = arith.constant 80 : index
    %c0_144 = arith.constant 0 : index
    %220 = vector.load %arg16[%c80_143, %c0_144] : memref<400x256xf32, #tpu.memory_space<vmem>>, vector<16x256xf32>
    tpu.vector_store %arg16[%c80_143, %c0_144], %219 {strides = array<i32>} : memref<400x256xf32, #tpu.memory_space<vmem>>, vector<16x256xf32>,
    %c0_145 = arith.constant 0 : index
    %c143_146 = arith.constant 143 : index
    %221 = vector.load %arg14[%c0_145, %c143_146] : memref<16x512xf32, #tpu.memory_space<vmem>>, vector<16x256xf32>
    %222 = vector.broadcast %24 : vector<1x256xf32> to vector<16x256xf32>
    %223 = arith.mulf %221, %222 : vector<16x256xf32>
    %c96_147 = arith.constant 96 : index
    %c0_148 = arith.constant 0 : index
    %224 = vector.load %arg16[%c96_147, %c0_148] : memref<400x256xf32, #tpu.memory_space<vmem>>, vector<16x256xf32>
    tpu.vector_store %arg16[%c96_147, %c0_148], %223 {strides = array<i32>} : memref<400x256xf32, #tpu.memory_space<vmem>>, vector<16x256xf32>,
    %c0_149 = arith.constant 0 : index
    %c144_150 = arith.constant 144 : index
    %225 = vector.load %arg14[%c0_149, %c144_150] : memref<16x512xf32, #tpu.memory_space<vmem>>, vector<16x256xf32>
    %c112_151 = arith.constant 112 : index
    %c0_152 = arith.constant 0 : index
    %226 = vector.load %arg16[%c112_151, %c0_152] : memref<400x256xf32, #tpu.memory_space<vmem>>, vector<16x256xf32>
    tpu.vector_store %arg16[%c112_151, %c0_152], %225 {strides = array<i32>} : memref<400x256xf32, #tpu.memory_space<vmem>>, vector<16x256xf32>,
    %c0_153 = arith.constant 0 : index
    %c145_154 = arith.constant 145 : index
    %227 = vector.load %arg14[%c0_153, %c145_154] : memref<16x512xf32, #tpu.memory_space<vmem>>, vector<16x256xf32>
    %228 = vector.broadcast %35 : vector<1x256xf32> to vector<16x256xf32>
    %229 = arith.mulf %227, %228 : vector<16x256xf32>
    %c128_155 = arith.constant 128 : index
    %c0_156 = arith.constant 0 : index
    %230 = vector.load %arg16[%c128_155, %c0_156] : memref<400x256xf32, #tpu.memory_space<vmem>>, vector<16x256xf32>
    tpu.vector_store %arg16[%c128_155, %c0_156], %229 {strides = array<i32>} : memref<400x256xf32, #tpu.memory_space<vmem>>, vector<16x256xf32>,
    %c0_157 = arith.constant 0 : index
    %c0_158 = arith.constant 0 : index
    %231 = vector.load %arg5[%c0_157, %c0_158] : memref<24x144xf32, #tpu.memory_space<vmem>>, vector<24x144xf32>
    %c0_159 = arith.constant 0 : index
    %c0_160 = arith.constant 0 : index
    %232 = vector.load %arg16[%c0_159, %c0_160] : memref<400x256xf32, #tpu.memory_space<vmem>>, vector<144x256xf32>
    %cst_161 = arith.constant dense<0.000000e+00> : vector<24x256xf32>
    %233 = tpu.matmul %231, %232, %cst_161 {dimension_numbers = #tpu.dot_dimension_numbers<[1], [0], [0], [1], [0, 0, 1, 1], [], []>} : vector<24x144xf32>, vector<144x256xf32>, vector<24x256xf32> -> vector<24x256xf32>
    %c0_162 = arith.constant 0 : index
    %c0_163 = arith.constant 0 : index
    %234 = vector.load %arg10[%c0_162, %c0_163] : memref<24x1xf32, #tpu.memory_space<vmem>>, vector<24x1xf32>
    %235 = vector.broadcast %234 : vector<24x1xf32> to vector<24x256xf32>
    %236 = arith.addf %233, %235 : vector<24x256xf32>
    %cst_164 = arith.constant 0.000000e+00 : f32
    %237 = vector.broadcast %cst_164 : f32 to vector<24x512xf32>
    %c0_165 = arith.constant 0 : index
    %c0_166 = arith.constant 0 : index
    %238 = vector.load %arg15[%c0_165, %c0_166] : memref<24x512xf32, #tpu.memory_space<vmem>>, vector<24x512xf32>
    tpu.vector_store %arg15[%c0_165, %c0_166], %237 {strides = array<i32>} : memref<24x512xf32, #tpu.memory_space<vmem>>, vector<24x512xf32>,
    %c0_167 = arith.constant 0 : index
    %c128_168 = arith.constant 128 : index
    %239 = vector.load %arg15[%c0_167, %c128_168] : memref<24x512xf32, #tpu.memory_space<vmem>>, vector<24x256xf32>
    tpu.vector_store %arg15[%c0_167, %c128_168], %236 {strides = array<i32>} : memref<24x512xf32, #tpu.memory_space<vmem>>, vector<24x256xf32>,
    %c0_169 = arith.constant 0 : index
    %c111_170 = arith.constant 111 : index
    %240 = vector.load %arg15[%c0_169, %c111_170] : memref<24x512xf32, #tpu.memory_space<vmem>>, vector<24x256xf32>
    %241 = vector.broadcast %24 : vector<1x256xf32> to vector<24x256xf32>
    %242 = arith.mulf %240, %241 : vector<24x256xf32>
    %c0_171 = arith.constant 0 : index
    %c0_172 = arith.constant 0 : index
    %243 = vector.load %arg16[%c0_171, %c0_172] : memref<400x256xf32, #tpu.memory_space<vmem>>, vector<24x256xf32>
    tpu.vector_store %arg16[%c0_171, %c0_172], %242 {strides = array<i32>} : memref<400x256xf32, #tpu.memory_space<vmem>>, vector<24x256xf32>,
    %c0_173 = arith.constant 0 : index
    %c112_174 = arith.constant 112 : index
    %244 = vector.load %arg15[%c0_173, %c112_174] : memref<24x512xf32, #tpu.memory_space<vmem>>, vector<24x256xf32>
    %c24_175 = arith.constant 24 : index
    %c0_176 = arith.constant 0 : index
    %245 = vector.load %arg16[%c24_175, %c0_176] : memref<400x256xf32, #tpu.memory_space<vmem>>, vector<24x256xf32>
    tpu.vector_store %arg16[%c24_175, %c0_176], %244 {strides = array<i32>} : memref<400x256xf32, #tpu.memory_space<vmem>>, vector<24x256xf32>,
    %c0_177 = arith.constant 0 : index
    %c113_178 = arith.constant 113 : index
    %246 = vector.load %arg15[%c0_177, %c113_178] : memref<24x512xf32, #tpu.memory_space<vmem>>, vector<24x256xf32>
    %247 = vector.broadcast %35 : vector<1x256xf32> to vector<24x256xf32>
    %248 = arith.mulf %246, %247 : vector<24x256xf32>
    %c48_179 = arith.constant 48 : index
    %c0_180 = arith.constant 0 : index
    %249 = vector.load %arg16[%c48_179, %c0_180] : memref<400x256xf32, #tpu.memory_space<vmem>>, vector<24x256xf32>
    tpu.vector_store %arg16[%c48_179, %c0_180], %248 {strides = array<i32>} : memref<400x256xf32, #tpu.memory_space<vmem>>, vector<24x256xf32>,
    %c0_181 = arith.constant 0 : index
    %c127_182 = arith.constant 127 : index
    %250 = vector.load %arg15[%c0_181, %c127_182] : memref<24x512xf32, #tpu.memory_space<vmem>>, vector<24x256xf32>
    %251 = vector.broadcast %24 : vector<1x256xf32> to vector<24x256xf32>
    %252 = arith.mulf %250, %251 : vector<24x256xf32>
    %c72 = arith.constant 72 : index
    %c0_183 = arith.constant 0 : index
    %253 = vector.load %arg16[%c72, %c0_183] : memref<400x256xf32, #tpu.memory_space<vmem>>, vector<24x256xf32>
    tpu.vector_store %arg16[%c72, %c0_183], %252 {strides = array<i32>} : memref<400x256xf32, #tpu.memory_space<vmem>>, vector<24x256xf32>,
    %c0_184 = arith.constant 0 : index
    %c128_185 = arith.constant 128 : index
    %254 = vector.load %arg15[%c0_184, %c128_185] : memref<24x512xf32, #tpu.memory_space<vmem>>, vector<24x256xf32>
    %c96_186 = arith.constant 96 : index
    %c0_187 = arith.constant 0 : index
    %255 = vector.load %arg16[%c96_186, %c0_187] : memref<400x256xf32, #tpu.memory_space<vmem>>, vector<24x256xf32>
    tpu.vector_store %arg16[%c96_186, %c0_187], %254 {strides = array<i32>} : memref<400x256xf32, #tpu.memory_space<vmem>>, vector<24x256xf32>,
    %c0_188 = arith.constant 0 : index
    %c129_189 = arith.constant 129 : index
    %256 = vector.load %arg15[%c0_188, %c129_189] : memref<24x512xf32, #tpu.memory_space<vmem>>, vector<24x256xf32>
    %257 = vector.broadcast %35 : vector<1x256xf32> to vector<24x256xf32>
    %258 = arith.mulf %256, %257 : vector<24x256xf32>
    %c120 = arith.constant 120 : index
    %c0_190 = arith.constant 0 : index
    %259 = vector.load %arg16[%c120, %c0_190] : memref<400x256xf32, #tpu.memory_space<vmem>>, vector<24x256xf32>
    tpu.vector_store %arg16[%c120, %c0_190], %258 {strides = array<i32>} : memref<400x256xf32, #tpu.memory_space<vmem>>, vector<24x256xf32>,
    %c0_191 = arith.constant 0 : index
    %c143_192 = arith.constant 143 : index
    %260 = vector.load %arg15[%c0_191, %c143_192] : memref<24x512xf32, #tpu.memory_space<vmem>>, vector<24x256xf32>
    %261 = vector.broadcast %24 : vector<1x256xf32> to vector<24x256xf32>
    %262 = arith.mulf %260, %261 : vector<24x256xf32>
    %c144_193 = arith.constant 144 : index
    %c0_194 = arith.constant 0 : index
    %263 = vector.load %arg16[%c144_193, %c0_194] : memref<400x256xf32, #tpu.memory_space<vmem>>, vector<24x256xf32>
    tpu.vector_store %arg16[%c144_193, %c0_194], %262 {strides = array<i32>} : memref<400x256xf32, #tpu.memory_space<vmem>>, vector<24x256xf32>,
    %c0_195 = arith.constant 0 : index
    %c144_196 = arith.constant 144 : index
    %264 = vector.load %arg15[%c0_195, %c144_196] : memref<24x512xf32, #tpu.memory_space<vmem>>, vector<24x256xf32>
    %c168 = arith.constant 168 : index
    %c0_197 = arith.constant 0 : index
    %265 = vector.load %arg16[%c168, %c0_197] : memref<400x256xf32, #tpu.memory_space<vmem>>, vector<24x256xf32>
    tpu.vector_store %arg16[%c168, %c0_197], %264 {strides = array<i32>} : memref<400x256xf32, #tpu.memory_space<vmem>>, vector<24x256xf32>,
    %c0_198 = arith.constant 0 : index
    %c145_199 = arith.constant 145 : index
    %266 = vector.load %arg15[%c0_198, %c145_199] : memref<24x512xf32, #tpu.memory_space<vmem>>, vector<24x256xf32>
    %267 = vector.broadcast %35 : vector<1x256xf32> to vector<24x256xf32>
    %268 = arith.mulf %266, %267 : vector<24x256xf32>
    %c192_200 = arith.constant 192 : index
    %c0_201 = arith.constant 0 : index
    %269 = vector.load %arg16[%c192_200, %c0_201] : memref<400x256xf32, #tpu.memory_space<vmem>>, vector<24x256xf32>
    tpu.vector_store %arg16[%c192_200, %c0_201], %268 {strides = array<i32>} : memref<400x256xf32, #tpu.memory_space<vmem>>, vector<24x256xf32>,
    %c0_202 = arith.constant 0 : index
    %c0_203 = arith.constant 0 : index
    %270 = vector.load %arg6[%c0_202, %c0_203] : memref<24x216xf32, #tpu.memory_space<vmem>>, vector<24x216xf32>
    %c0_204 = arith.constant 0 : index
    %c0_205 = arith.constant 0 : index
    %271 = vector.load %arg16[%c0_204, %c0_205] : memref<400x256xf32, #tpu.memory_space<vmem>>, vector<216x256xf32>
    %cst_206 = arith.constant dense<0.000000e+00> : vector<24x256xf32>
    %272 = tpu.matmul %270, %271, %cst_206 {dimension_numbers = #tpu.dot_dimension_numbers<[1], [0], [0], [1], [0, 0, 1, 1], [], []>} : vector<24x216xf32>, vector<216x256xf32>, vector<24x256xf32> -> vector<24x256xf32>
    %c0_207 = arith.constant 0 : index
    %c0_208 = arith.constant 0 : index
    %273 = vector.load %arg11[%c0_207, %c0_208] : memref<24x1xf32, #tpu.memory_space<vmem>>, vector<24x1xf32>
    %274 = vector.broadcast %273 : vector<24x1xf32> to vector<24x256xf32>
    %275 = arith.addf %272, %274 : vector<24x256xf32>
    %c0_209 = arith.constant 0 : index
    %c64_210 = arith.constant 64 : index
    %c0_211 = arith.constant 0 : index
    %276 = vector.load %arg12[%c0_209, %c64_210, %c0_211] : memref<1x88x256xf32, #tpu.memory_space<vmem>>, vector<1x24x256xf32>
    %277 = vector.shape_cast %276 : vector<1x24x256xf32> to vector<24x256xf32>
    %278 = vector.shape_cast %275 : vector<24x256xf32> to vector<1x24x256xf32>
    tpu.vector_store %arg12[%c0_209, %c64_210, %c0_211], %278 {strides = array<i32>} : memref<1x88x256xf32, #tpu.memory_space<vmem>>, vector<1x24x256xf32>,
    return
  }
  func.func @transform_0(%arg0: i32) -> (i32, i32, i32) {
    %c0_i32 = arith.constant 0 : i32
    %c0_i32_0 = arith.constant 0 : i32
    %c0_i32_1 = arith.constant 0 : i32
    return %arg0, %c0_i32, %c0_i32_0 : i32, i32, i32
  }
  func.func @transform_1(%arg0: i32) -> (i32, i32) {
    %c0_i32 = arith.constant 0 : i32
    %c0_i32_0 = arith.constant 0 : i32
    %c0_i32_1 = arith.constant 0 : i32
    return %c0_i32, %c0_i32_0 : i32, i32
  }
  func.func @transform_2(%arg0: i32) -> (i32, i32) {
    %c0_i32 = arith.constant 0 : i32
    %c0_i32_0 = arith.constant 0 : i32
    %c0_i32_1 = arith.constant 0 : i32
    return %c0_i32, %c0_i32_0 : i32, i32
  }
  func.func @transform_3(%arg0: i32) -> (i32, i32) {
    %c0_i32 = arith.constant 0 : i32
    %c0_i32_0 = arith.constant 0 : i32
    %c0_i32_1 = arith.constant 0 : i32
    return %c0_i32, %c0_i32_0 : i32, i32
  }
  func.func @transform_4(%arg0: i32) -> (i32, i32) {
    %c0_i32 = arith.constant 0 : i32
    %c0_i32_0 = arith.constant 0 : i32
    %c0_i32_1 = arith.constant 0 : i32
    return %c0_i32, %c0_i32_0 : i32, i32
  }
  func.func @transform_5(%arg0: i32) -> (i32, i32) {
    %c0_i32 = arith.constant 0 : i32
    %c0_i32_0 = arith.constant 0 : i32
    %c0_i32_1 = arith.constant 0 : i32
    return %c0_i32, %c0_i32_0 : i32, i32
  }
  func.func @transform_6(%arg0: i32) -> (i32, i32) {
    %c0_i32 = arith.constant 0 : i32
    %c0_i32_0 = arith.constant 0 : i32
    %c0_i32_1 = arith.constant 0 : i32
    return %c0_i32, %c0_i32_0 : i32, i32
  }
  func.func @transform_7(%arg0: i32) -> (i32, i32) {
    %c0_i32 = arith.constant 0 : i32
    %c0_i32_0 = arith.constant 0 : i32
    %c0_i32_1 = arith.constant 0 : i32
    return %c0_i32, %c0_i32_0 : i32, i32
  }
  func.func @transform_8(%arg0: i32) -> (i32, i32) {
    %c0_i32 = arith.constant 0 : i32
    %c0_i32_0 = arith.constant 0 : i32
    %c0_i32_1 = arith.constant 0 : i32
    return %c0_i32, %c0_i32_0 : i32, i32
  }
  func.func @transform_9(%arg0: i32) -> (i32, i32) {
    %c0_i32 = arith.constant 0 : i32
    %c0_i32_0 = arith.constant 0 : i32
    %c0_i32_1 = arith.constant 0 : i32
    return %c0_i32, %c0_i32_0 : i32, i32
  }
  func.func @transform_10(%arg0: i32) -> (i32, i32) {
    %c0_i32 = arith.constant 0 : i32
    %c0_i32_0 = arith.constant 0 : i32
    %c0_i32_1 = arith.constant 0 : i32
    return %c0_i32, %c0_i32_0 : i32, i32
  }
  func.func @transform_11(%arg0: i32) -> (i32, i32, i32) {
    %c0_i32 = arith.constant 0 : i32
    %c0_i32_0 = arith.constant 0 : i32
    %c0_i32_1 = arith.constant 0 : i32
    return %arg0, %c0_i32, %c0_i32_0 : i32, i32, i32
  }
}

</mosaic_0001>

<llo_original>
// kernel: inception_forward.1
$region0: #{inception_forward.1}
  #allocation0 [shape = 'u32[]', space=smem, size = 0x4, offset = 0x4, fixed_abs, tag = 'smem constant byte address 0x4 - core index']
  #allocation1 [shape = 'u32[72,128]{1,0:T(1,128)}', space=vmem, size = 0x9000, scoped, tag = 'internal scratch']
  #allocation2 [shape = 'f32[4,512]{1,0:T(4,128)}', space=vmem, size = 0x2000, scoped, tag = 'scratch operand']
  #allocation3 [shape = 'f32[16,512]{1,0:T(8,128)}', space=vmem, size = 0x8000, scoped, tag = 'scratch operand']
  #allocation4 [shape = 'f32[24,512]{1,0:T(8,128)}', space=vmem, size = 0xc000, scoped, tag = 'scratch operand']
  #allocation5 [shape = 'f32[400,256]{1,0:T(8,128)}', space=vmem, size = 0x64000, scoped, tag = 'scratch operand']
  %s0 = inlined_call_operand.vmem [shape: f32[2,4,256], index: 0, kind: input, shape index: {}]
  %s1 = inlined_call_operand.vmem [shape: f32[24,4], index: 1, kind: input, shape index: {}]
  %s2 = inlined_call_operand.vmem [shape: f32[16,4], index: 2, kind: input, shape index: {}]
  %s3 = inlined_call_operand.vmem [shape: f32[24,400], index: 3, kind: input, shape index: {}]
  %s4 = inlined_call_operand.vmem [shape: f32[24,144], index: 4, kind: input, shape index: {}]
  %s5 = inlined_call_operand.vmem [shape: f32[24,216], index: 5, kind: input, shape index: {}]
  %s6 = inlined_call_operand.vmem [shape: f32[24,1], index: 6, kind: input, shape index: {}]
  %s7 = inlined_call_operand.vmem [shape: f32[16,1], index: 7, kind: input, shape index: {}]
  %s8 = inlined_call_operand.vmem [shape: f32[24,1], index: 8, kind: input, shape index: {}]
  %s9 = inlined_call_operand.vmem [shape: f32[24,1], index: 9, kind: input, shape index: {}]
  %s10 = inlined_call_operand.vmem [shape: f32[24,1], index: 10, kind: input, shape index: {}]
  %s11 = inlined_call_operand.vmem [shape: f32[2,88,256], index: 11, kind: output, shape index: {}]
  %s12 = sld [smem:[#allocation0]]
  $region77: #{inception_forward.1} parent=0
    _
  %s14 = ssub.s32 1, %s12
  %s15 = scalar_select 0, %s14, %s12
  loop: start=0, step=1, limit=4
  $region2: #{inception_forward.1} parent=0 // loop_pre_header
    _
  $region3: #{inception_forward.1} parent=0 // loop_header
    %s17 = sphi 0, %s21
    %p18 = scmp.ge.s32.totalorder %s17, 4
    %s27 = sphi 0, %s29
    %s30 = sphi 0, %s27
    %s31 = sphi 0, %s30
    %s47 = sphi 0, %s31
    %s51 = sphi 0, %s51
    %s53 = sphi 0, %s51
    %s54 = sphi 0, %s53
    %s68 = sphi 0, %s54
    %s72 = sphi 0, %s72
    %s74 = sphi 0, %s72
    %s75 = sphi 0, %s74
    %s89 = sphi 0, %s75
    %s93 = sphi 0, %s93
    %s95 = sphi 0, %s93
    %s96 = sphi 0, %s95
    %s110 = sphi 0, %s96
    %s114 = sphi 0, %s114
    %s116 = sphi 0, %s114
    %s117 = sphi 0, %s116
    %s131 = sphi 0, %s117
    %s135 = sphi 0, %s135
    %s137 = sphi 0, %s135
    %s138 = sphi 0, %s137
    %s152 = sphi 0, %s138
    %s156 = sphi 0, %s156
    %s158 = sphi 0, %s156
    %s159 = sphi 0, %s158
    %s173 = sphi 0, %s159
    %s177 = sphi 0, %s177
    %s179 = sphi 0, %s177
    %s180 = sphi 0, %s179
    %s194 = sphi 0, %s180
    %s198 = sphi 0, %s198
    %s200 = sphi 0, %s198
    %s201 = sphi 0, %s200
    %s215 = sphi 0, %s201
    %s219 = sphi 0, %s219
    %s221 = sphi 0, %s219
    %s222 = sphi 0, %s221
    %s236 = sphi 0, %s222
    %s240 = sphi 0, %s240
    %s242 = sphi 0, %s240
    %s243 = sphi 0, %s242
    %s257 = sphi 0, %s243
    %s263 = sphi 0, %s265
    %s266 = sphi 0, %s263
    %s267 = sphi 0, %s266
    %s283 = sphi 0, %s267
  $region4: #{inception_forward.1} parent=0 // loop_header_branch
    %20 = sbr.rel (%p18) target = $region8
  $region5: #{inception_forward.1} parent=0 // loop_body
    %s22 = ssub.s32 %s17, 1
    %s23 = ssub.s32 %s17, 2
    %s24 = sadd.s32 %s17, 1
    %s25 = ssub.s32 %s17, %s24
    %p26 = scmp.eq.s32.totalorder %s25, 0
    %s28 = sadd.s32 %s27, 1
    %s29 = scalar_select %p26, %s27, %s28
    %p32 = pneg %p26
    %p33 = scmp.eq.s32.totalorder %s17, 1
    %p34 = por %p32, %p33
    %p35 = scmp.ne.s32.totalorder %s27, %s30
    %p36 = scmp.eq.s32.totalorder %s17, 0
    %p37 = por %p35, %p36
    %p38 = scmp.ne.s32.totalorder %s27, %s30
    %p39 = scmp.eq.s32.totalorder %s22, 1
    %p40 = por %p38, %p39
    %p41 = scmp.ne.s32.totalorder %s30, %s31
    %p42 = scmp.eq.s32.totalorder %s22, 0
    %p43 = por %p41, %p42
    %p44 = scmp.ne.s32.totalorder %s30, %s31
    %p45 = scmp.eq.s32.totalorder %s23, 1
    %p46 = por %p44, %p45
    %p48 = scmp.ne.s32.totalorder %s31, %s47
    %p49 = scmp.eq.s32.totalorder %s23, 0
    %p50 = por %p48, %p49
    %s52 = sadd.s32 %s51, 1
    %p55 = scmp.eq.s32.totalorder %s17, 1
    %p56 = scmp.ne.s32.totalorder %s51, %s53
    %p57 = scmp.eq.s32.totalorder %s17, 0
    %p58 = por %p56, %p57
    %p59 = scmp.ne.s32.totalorder %s51, %s53
    %p60 = scmp.eq.s32.totalorder %s22, 1
    %p61 = por %p59, %p60
    %p62 = scmp.ne.s32.totalorder %s53, %s54
    %p63 = scmp.eq.s32.totalorder %s22, 0
    %p64 = por %p62, %p63
    %p65 = scmp.ne.s32.totalorder %s53, %s54
    %p66 = scmp.eq.s32.totalorder %s23, 1
    %p67 = por %p65, %p66
    %p69 = scmp.ne.s32.totalorder %s54, %s68
    %p70 = scmp.eq.s32.totalorder %s23, 0
    %p71 = por %p69, %p70
    %s73 = sadd.s32 %s72, 1
    %p76 = scmp.eq.s32.totalorder %s17, 1
    %p77 = scmp.ne.s32.totalorder %s72, %s74
    %p78 = scmp.eq.s32.totalorder %s17, 0
    %p79 = por %p77, %p78
    %p80 = scmp.ne.s32.totalorder %s72, %s74
    %p81 = scmp.eq.s32.totalorder %s22, 1
    %p82 = por %p80, %p81
    %p83 = scmp.ne.s32.totalorder %s74, %s75
    %p84 = scmp.eq.s32.totalorder %s22, 0
    %p85 = por %p83, %p84
    %p86 = scmp.ne.s32.totalorder %s74, %s75
    %p87 = scmp.eq.s32.totalorder %s23, 1
    %p88 = por %p86, %p87
    %p90 = scmp.ne.s32.totalorder %s75, %s89
    %p91 = scmp.eq.s32.totalorder %s23, 0
    %p92 = por %p90, %p91
    %s94 = sadd.s32 %s93, 1
    %p97 = scmp.eq.s32.totalorder %s17, 1
    %p98 = scmp.ne.s32.totalorder %s93, %s95
    %p99 = scmp.eq.s32.totalorder %s17, 0
    %p100 = por %p98, %p99
    %p101 = scmp.ne.s32.totalorder %s93, %s95
    %p102 = scmp.eq.s32.totalorder %s22, 1
    %p103 = por %p101, %p102
    %p104 = scmp.ne.s32.totalorder %s95, %s96
    %p105 = scmp.eq.s32.totalorder %s22, 0
    %p106 = por %p104, %p105
    %p107 = scmp.ne.s32.totalorder %s95, %s96
    %p108 = scmp.eq.s32.totalorder %s23, 1
    %p109 = por %p107, %p108
    %p111 = scmp.ne.s32.totalorder %s96, %s110
    %p112 = scmp.eq.s32.totalorder %s23, 0
    %p113 = por %p111, %p112
    %s115 = sadd.s32 %s114, 1
    %p118 = scmp.eq.s32.totalorder %s17, 1
    %p119 = scmp.ne.s32.totalorder %s114, %s116
    %p120 = scmp.eq.s32.totalorder %s17, 0
    %p121 = por %p119, %p120
    %p122 = scmp.ne.s32.totalorder %s114, %s116
    %p123 = scmp.eq.s32.totalorder %s22, 1
    %p124 = por %p122, %p123
    %p125 = scmp.ne.s32.totalorder %s116, %s117
    %p126 = scmp.eq.s32.totalorder %s22, 0
    %p127 = por %p125, %p126
    %p128 = scmp.ne.s32.totalorder %s116, %s117
    %p129 = scmp.eq.s32.totalorder %s23, 1
    %p130 = por %p128, %p129
    %p132 = scmp.ne.s32.totalorder %s117, %s131
    %p133 = scmp.eq.s32.totalorder %s23, 0
    %p134 = por %p132, %p133
    %s136 = sadd.s32 %s135, 1
    %p139 = scmp.eq.s32.totalorder %s17, 1
    %p140 = scmp.ne.s32.totalorder %s135, %s137
    %p141 = scmp.eq.s32.totalorder %s17, 0
    %p142 = por %p140, %p141
    %p143 = scmp.ne.s32.totalorder %s135, %s137
    %p144 = scmp.eq.s32.totalorder %s22, 1
    %p145 = por %p143, %p144
    %p146 = scmp.ne.s32.totalorder %s137, %s138
    %p147 = scmp.eq.s32.totalorder %s22, 0
    %p148 = por %p146, %p147
    %p149 = scmp.ne.s32.totalorder %s137, %s138
    %p150 = scmp.eq.s32.totalorder %s23, 1
    %p151 = por %p149, %p150
    %p153 = scmp.ne.s32.totalorder %s138, %s152
    %p154 = scmp.eq.s32.totalorder %s23, 0
    %p155 = por %p153, %p154
    %s157 = sadd.s32 %s156, 1
    %p160 = scmp.eq.s32.totalorder %s17, 1
    %p161 = scmp.ne.s32.totalorder %s156, %s158
    %p162 = scmp.eq.s32.totalorder %s17, 0
    %p163 = por %p161, %p162
    %p164 = scmp.ne.s32.totalorder %s156, %s158
    %p165 = scmp.eq.s32.totalorder %s22, 1
    %p166 = por %p164, %p165
    %p167 = scmp.ne.s32.totalorder %s158, %s159
    %p168 = scmp.eq.s32.totalorder %s22, 0
    %p169 = por %p167, %p168
    %p170 = scmp.ne.s32.totalorder %s158, %s159
    %p171 = scmp.eq.s32.totalorder %s23, 1
    %p172 = por %p170, %p171
    %p174 = scmp.ne.s32.totalorder %s159, %s173
    %p175 = scmp.eq.s32.totalorder %s23, 0
    %p176 = por %p174, %p175
    %s178 = sadd.s32 %s177, 1
    %p181 = scmp.eq.s32.totalorder %s17, 1
    %p182 = scmp.ne.s32.totalorder %s177, %s179
    %p183 = scmp.eq.s32.totalorder %s17, 0
    %p184 = por %p182, %p183
    %p185 = scmp.ne.s32.totalorder %s177, %s179
    %p186 = scmp.eq.s32.totalorder %s22, 1
    %p187 = por %p185, %p186
    %p188 = scmp.ne.s32.totalorder %s179, %s180
    %p189 = scmp.eq.s32.totalorder %s22, 0
    %p190 = por %p188, %p189
    %p191 = scmp.ne.s32.totalorder %s179, %s180
    %p192 = scmp.eq.s32.totalorder %s23, 1
    %p193 = por %p191, %p192
    %p195 = scmp.ne.s32.totalorder %s180, %s194
    %p196 = scmp.eq.s32.totalorder %s23, 0
    %p197 = por %p195, %p196
    %s199 = sadd.s32 %s198, 1
    %p202 = scmp.eq.s32.totalorder %s17, 1
    %p203 = scmp.ne.s32.totalorder %s198, %s200
    %p204 = scmp.eq.s32.totalorder %s17, 0
    %p205 = por %p203, %p204
    %p206 = scmp.ne.s32.totalorder %s198, %s200
    %p207 = scmp.eq.s32.totalorder %s22, 1
    %p208 = por %p206, %p207
    %p209 = scmp.ne.s32.totalorder %s200, %s201
    %p210 = scmp.eq.s32.totalorder %s22, 0
    %p211 = por %p209, %p210
    %p212 = scmp.ne.s32.totalorder %s200, %s201
    %p213 = scmp.eq.s32.totalorder %s23, 1
    %p214 = por %p212, %p213
    %p216 = scmp.ne.s32.totalorder %s201, %s215
    %p217 = scmp.eq.s32.totalorder %s23, 0
    %p218 = por %p216, %p217
    %s220 = sadd.s32 %s219, 1
    %p223 = scmp.eq.s32.totalorder %s17, 1
    %p224 = scmp.ne.s32.totalorder %s219, %s221
    %p225 = scmp.eq.s32.totalorder %s17, 0
    %p226 = por %p224, %p225
    %p227 = scmp.ne.s32.totalorder %s219, %s221
    %p228 = scmp.eq.s32.totalorder %s22, 1
    %p229 = por %p227, %p228
    %p230 = scmp.ne.s32.totalorder %s221, %s222
    %p231 = scmp.eq.s32.totalorder %s22, 0
    %p232 = por %p230, %p231
    %p233 = scmp.ne.s32.totalorder %s221, %s222
    %p234 = scmp.eq.s32.totalorder %s23, 1
    %p235 = por %p233, %p234
    %p237 = scmp.ne.s32.totalorder %s222, %s236
    %p238 = scmp.eq.s32.totalorder %s23, 0
    %p239 = por %p237, %p238
    %s241 = sadd.s32 %s240, 1
    %p244 = scmp.eq.s32.totalorder %s17, 1
    %p245 = scmp.ne.s32.totalorder %s240, %s242
    %p246 = scmp.eq.s32.totalorder %s17, 0
    %p247 = por %p245, %p246
    %p248 = scmp.ne.s32.totalorder %s240, %s242
    %p249 = scmp.eq.s32.totalorder %s22, 1
    %p250 = por %p248, %p249
    %p251 = scmp.ne.s32.totalorder %s242, %s243
    %p252 = scmp.eq.s32.totalorder %s22, 0
    %p253 = por %p251, %p252
    %p254 = scmp.ne.s32.totalorder %s242, %s243
    %p255 = scmp.eq.s32.totalorder %s23, 1
    %p256 = por %p254, %p255
    %p258 = scmp.ne.s32.totalorder %s243, %s257
    %p259 = scmp.eq.s32.totalorder %s23, 0
    %p260 = por %p258, %p259
    %s261 = ssub.s32 %s17, %s24
    %p262 = scmp.eq.s32.totalorder %s261, 0
    %s264 = sadd.s32 %s263, 1
    %s265 = scalar_select %p262, %s263, %s264
    %p268 = pneg %p262
    %p269 = scmp.eq.s32.totalorder %s17, 1
    %p270 = por %p268, %p269
    %p271 = scmp.ne.s32.totalorder %s263, %s266
    %p272 = scmp.eq.s32.totalorder %s17, 0
    %p273 = por %p271, %p272
    %p274 = scmp.ne.s32.totalorder %s263, %s266
    %p275 = scmp.eq.s32.totalorder %s22, 1
    %p276 = por %p274, %p275
    %p277 = scmp.ne.s32.totalorder %s266, %s267
    %p278 = scmp.eq.s32.totalorder %s22, 0
    %p279 = por %p277, %p278
    %p280 = scmp.ne.s32.totalorder %s266, %s267
    %p281 = scmp.eq.s32.totalorder %s23, 1
    %p282 = por %p280, %p281
    %p284 = scmp.ne.s32.totalorder %s267, %s283
    %p285 = scmp.eq.s32.totalorder %s23, 0
    %p286 = por %p284, %p285
    %p287 = scmp.le.s32.totalorder 1, %s17
    %p288 = scmp.lt.s32.totalorder %s17, 3
    %p289 = pnand %p287, %p288
    %p290 = pneg %p289
    // Predicated region
    $region9: #{inception_forward.1} parent=5 // pred_check
      _
    $region10: #{inception_forward.1} parent=5 // pred_check_branch
      %292 = sbr.rel (%p289) target = $region12
    $region11: #{inception_forward.1} parent=5 // pred_region
      %s293 = ssub.s32 %s17, 1
      // Predicated region
      $region13: #{inception_forward.1} parent=11 // pred_check
        %p294 = pneg %p64
      $region14: #{inception_forward.1} parent=11 // pred_check_branch
        %296 = sbr.rel (%p294) target = $region16
      $region15: #{inception_forward.1} parent=11 // pred_region
        _
      $region16: #{inception_forward.1} parent=11 // pred_fallthru
        _
      // Predicated region
      $region17: #{inception_forward.1} parent=11 // pred_check
        %p297 = pneg %p85
      $region18: #{inception_forward.1} parent=11 // pred_check_branch
        %299 = sbr.rel (%p297) target = $region20
      $region19: #{inception_forward.1} parent=11 // pred_region
        _
      $region20: #{inception_forward.1} parent=11 // pred_fallthru
        _
      // Predicated region
      $region21: #{inception_forward.1} parent=11 // pred_check
        %p300 = pneg %p106
      $region22: #{inception_forward.1} parent=11 // pred_check_branch
        %302 = sbr.rel (%p300) target = $region24
      $region23: #{inception_forward.1} parent=11 // pred_region
        _
      $region24: #{inception_forward.1} parent=11 // pred_fallthru
        _
      // Predicated region
      $region25: #{inception_forward.1} parent=11 // pred_check
        %p303 = pneg %p127
      $region26: #{inception_forward.1} parent=11 // pred_check_branch
        %305 = sbr.rel (%p303) target = $region28
      $region27: #{inception_forward.1} parent=11 // pred_region
        _
      $region28: #{inception_forward.1} parent=11 // pred_fallthru
        _
      // Predicated region
      $region29: #{inception_forward.1} parent=11 // pred_check
        %p306 = pneg %p148
      $region30: #{inception_forward.1} parent=11 // pred_check_branch
        %308 = sbr.rel (%p306) target = $region32
      $region31: #{inception_forward.1} parent=11 // pred_region
        _
      $region32: #{inception_forward.1} parent=11 // pred_fallthru
        _
      // Predicated region
      $region33: #{inception_forward.1} parent=11 // pred_check
        %p309 = pneg %p169
      $region34: #{inception_forward.1} parent=11 // pred_check_branch
        %311 = sbr.rel (%p309) target = $region36
      $region35: #{inception_forward.1} parent=11 // pred_region
        _
      $region36: #{inception_forward.1} parent=11 // pred_fallthru
        _
      // Predicated region
      $region37: #{inception_forward.1} parent=11 // pred_check
        %p312 = pneg %p190
      $region38: #{inception_forward.1} parent=11 // pred_check_branch
        %314 = sbr.rel (%p312) target = $region40
      $region39: #{inception_forward.1} parent=11 // pred_region
        _
      $region40: #{inception_forward.1} parent=11 // pred_fallthru
        _
      // Predicated region
      $region41: #{inception_forward.1} parent=11 // pred_check
        %p315 = pneg %p211
      $region42: #{inception_forward.1} parent=11 // pred_check_branch
        %317 = sbr.rel (%p315) target = $region44
      $region43: #{inception_forward.1} parent=11 // pred_region
        _
      $region44: #{inception_forward.1} parent=11 // pred_fallthru
        _
      // Predicated region
      $region45: #{inception_forward.1} parent=11 // pred_check
        %p318 = pneg %p232
      $region46: #{inception_forward.1} parent=11 // pred_check_branch
        %320 = sbr.rel (%p318) target = $region48
      $region47: #{inception_forward.1} parent=11 // pred_region
        _
      $region48: #{inception_forward.1} parent=11 // pred_fallthru
        _
      // Predicated region
      $region49: #{inception_forward.1} parent=11 // pred_check
        %p321 = pneg %p253
      $region50: #{inception_forward.1} parent=11 // pred_check_branch
        %323 = sbr.rel (%p321) target = $region52
      $region51: #{inception_forward.1} parent=11 // pred_region
        _
      $region52: #{inception_forward.1} parent=11 // pred_fallthru
        _
    $region12: #{inception_forward.1} parent=5 // pred_fallthru
      _
    %p324 = scmp.lt.s32.totalorder %s17, 2
    // Predicated region
    $region53: #{inception_forward.1} parent=5 // pred_check
      %p325 = pneg %p324
    $region54: #{inception_forward.1} parent=5 // pred_check_branch
      %327 = sbr.rel (%p325) target = $region56
    $region55: #{inception_forward.1} parent=5 // pred_region
      // Predicated region
      $region57: #{inception_forward.1} parent=55 // pred_check
        %p328 = pneg %p37
      $region58: #{inception_forward.1} parent=55 // pred_check_branch
        %330 = sbr.rel (%p328) target = $region60
      $region59: #{inception_forward.1} parent=55 // pred_region
        %p331 = scmp.lt.s32.totalorder %s17, 1
        %s332 = scalar_select %p331, %s17, 1
        %s333 = smul.addr %s332, 2
        %s334 = smul.addr %s333, 4
        %s335 = scalar_lea.vmem %s0, %s334
      $region60: #{inception_forward.1} parent=55 // pred_fallthru
        _
    $region56: #{inception_forward.1} parent=5 // pred_fallthru
      _
    %p336 = scmp.le.s32.totalorder 1, %s17
    %p337 = scmp.lt.s32.totalorder %s17, 3
    %p338 = pnand %p336, %p337
    %p339 = pneg %p338
    // Predicated region
    $region61: #{inception_forward.1} parent=5 // pred_check
      _
    $region62: #{inception_forward.1} parent=5 // pred_check_branch
      %341 = sbr.rel (%p338) target = $region64
    $region63: #{inception_forward.1} parent=5 // pred_region
      %s342 = ssub.s32 %s17, 1
      %p343 = scmp.lt.s32.totalorder %s22, 1
      %s344 = scalar_select %p343, %s22, 1
      %s345 = smul.addr %s344, 2
      %s346 = smul.addr %s345, 4
      %s347 = scalar_lea.vmem %s0, %s346
      %p348 = pneg %p43
      %p349 = pneg %p40
      %p350 = pneg %p64
      %p351 = pneg %p61
      %p352 = pneg %p85
      %p353 = pneg %p82
      %p354 = pneg %p106
      %p355 = pneg %p103
      %p356 = pneg %p127
      %p357 = pneg %p124
      %p358 = pneg %p148
      %p359 = pneg %p145
      %p360 = pneg %p169
      %p361 = pneg %p166
      %p362 = pneg %p190
      %p363 = pneg %p187
      %p364 = pneg %p211
      %p365 = pneg %p208
      %p366 = pneg %p232
      %p367 = pneg %p229
      %p368 = pneg %p253
      %p369 = pneg %p250
      %p370 = pneg %p279
      %p371 = pneg %p276
      %p372 = scmp.lt.s32.totalorder %s22, 1
      %s373 = scalar_select %p372, %s22, 1
      %s374 = smul.addr %s373, 22
      %s375 = smul.addr %s374, 8
      %s376 = scalar_lea.vmem %s11, %s375
      %p377 = scmp.lt.s32.totalorder %s22, 1
      %s378 = scalar_select %p377, %s22, 1
      %s379 = smul.addr %s378, 2
      %s380 = smul.addr %s379, 4
      %s381 = scalar_lea.vmem %s0, %s380
      %p382 = scmp.lt.s32.totalorder %s22, 1
      %s383 = scalar_select %p382, %s22, 1
      %s384 = smul.addr %s383, 22
      %s385 = smul.addr %s384, 8
      %s386 = scalar_lea.vmem %s11, %s385
      %v387 = vlaneseq
      %v388 = vand.u32 %v387, 127
      %v389 = vadd.s32 %v388, 128
      %v390 = vand.u32 %v388, 15
      %v391 = vand.u32 %v389, 15
      %v392 = vadd.s32 %v390, 4294967294
      %v393 = vadd.s32 %v391, 4294967294
      %vm394 = vcmp.ge.s32.totalorder %v392, 0
      %vm395 = vcmp.ge.s32.totalorder %v393, 0
      %vm396 = vcmp.le.s32.totalorder %v392, 15
      %vm397 = vcmp.le.s32.totalorder %v393, 15
      %vm398 = vmand %vm394, %vm396
      %vm399 = vmand %vm395, %vm397
      %v400 = vsel %vm398, 1, 0
      %v401 = vsel %vm399, 1, 0
      %v402 = vcvt.s32.f32 %v400
      %v403 = vcvt.s32.f32 %v401
      %v404 = vadd.s32 %v390, 4294967295
      %v405 = vadd.s32 %v391, 4294967295
      %vm406 = vcmp.ge.s32.totalorder %v404, 0
      %vm407 = vcmp.ge.s32.totalorder %v405, 0
      %vm408 = vcmp.le.s32.totalorder %v404, 15
      %vm409 = vcmp.le.s32.totalorder %v405, 15
      %vm410 = vmand %vm406, %vm408
      %vm411 = vmand %vm407, %vm409
      %v412 = vsel %vm410, 1, 0
      %v413 = vsel %vm411, 1, 0
      %v414 = vcvt.s32.f32 %v412
      %v415 = vcvt.s32.f32 %v413
      %v416 = vadd.s32 %v390, 1
      %v417 = vadd.s32 %v391, 1
      %vm418 = vcmp.ge.s32.totalorder %v416, 0
      %vm419 = vcmp.ge.s32.totalorder %v417, 0
      %vm420 = vcmp.le.s32.totalorder %v416, 15
      %vm421 = vcmp.le.s32.totalorder %v417, 15
      %vm422 = vmand %vm418, %vm420
      %vm423 = vmand %vm419, %vm421
      %v424 = vsel %vm422, 1, 0
      %v425 = vsel %vm423, 1, 0
      %v426 = vcvt.s32.f32 %v424
      %v427 = vcvt.s32.f32 %v425
      %v428 = vadd.s32 %v390, 2
      %v429 = vadd.s32 %v391, 2
      %vm430 = vcmp.ge.s32.totalorder %v428, 0
      %vm431 = vcmp.ge.s32.totalorder %v429, 0
      %vm432 = vcmp.le.s32.totalorder %v428, 15
      %vm433 = vcmp.le.s32.totalorder %v429, 15
      %vm434 = vmand %vm430, %vm432
      %vm435 = vmand %vm431, %vm433
      %v436 = vsel %vm434, 1, 0
      %v437 = vsel %vm435, 1, 0
      %v438 = vcvt.s32.f32 %v436
      %v439 = vcvt.s32.f32 %v437
      %v440 = vld [vmem:[%s381] sm:$0xff]
      %v441 = vld [vmem:[%s2] sm:$0xff]
      %v442 = vld [vmem:[%s2 + $0x8] sm:$0xff]
      %v443 = vld [vmem:[%s7] sm:$0xff]
      %v444 = vld [vmem:[%s7 + $0x8] sm:$0xff]
      %446 = vset.pattern.permute.xlu0 0
      %447 = vperm.xlu0 %446, %v443
      %v448 = vpop.permute.xlu0 %447
      %451 = vset.pattern.permute.xlu0 0
      %452 = vperm.xlu0 %451, %v444
      %v453 = vpop.permute.xlu0 %452
      %456 = vst [vmem:[#allocation1] ss:$2 sm:$0xff] %v440
      %v457 = vld.sshfl [vmem:[#allocation1] sm:$0xff pattern:$0x75316420]
      %v458 = vld.sshfl [vmem:[#allocation1 + $0x8] sm:$0xff pattern:$0x75316420]
      %vm459 = vcmask 31744
      %v461 = vsel %vm459, %v441, 0
      %v464 = vsel %vm459, %v442, 0
      %vm466 = vcmask 1043456
      %v467 = vsel %vm466, %v457, 0
      %v469 = vsel %vm466, %v458, 0
      %471 = vmatpush.msra.mxu0 0.0
      %472 = vmatpush.msra.mxu0 0.0
      %473 = vmatpush.msra.mxu0 0.0
      %474 = vmatpush.msra.mxu0 0.0
      %475 = vmatpush.msra.mxu0 0.0
      %476 = vmatpush.msra.mxu0 0.0
      %477 = vmatpush.msra.mxu0 0.0
      %478 = vmatpush.msra.mxu0 0.0
      %479 = vmatpush.msra.mxu0 0.0
      %480 = vmatpush.msra.mxu0 0.0
      %481 = vmatpush.msra.mxu0 0.0
      %482 = vmatpush.msra.mxu0 0.0
      %483 = vmatpush.msra.mxu0 0.0
      %484 = vmatpush.msra.mxu0 0.0
      %485 = vmatpush.msra.mxu0 0.0
      %486 = vmatpush.msra.mxu0 %v467
      %487 = vmatmul.f32.gmra.mxu0 %v461
      %v488 = vpop.f32.mrf.mxu0
      %v489 = vadd.f32 %v448, %v488
      %490 = vmatmul.f32.gmra.mxu0 %v464
      %v491 = vpop.f32.mrf.mxu0
      %v492 = vadd.f32 %v453, %v491
      %493 = vdwg.mxu0
      %494 = vmatpush.msra.mxu0 0.0
      %495 = vmatpush.msra.mxu0 0.0
      %496 = vmatpush.msra.mxu0 0.0
      %497 = vmatpush.msra.mxu0 0.0
      %498 = vmatpush.msra.mxu0 0.0
      %499 = vmatpush.msra.mxu0 0.0
      %500 = vmatpush.msra.mxu0 0.0
      %501 = vmatpush.msra.mxu0 0.0
      %502 = vmatpush.msra.mxu0 0.0
      %503 = vmatpush.msra.mxu0 0.0
      %504 = vmatpush.msra.mxu0 0.0
      %505 = vmatpush.msra.mxu0 0.0
      %506 = vmatpush.msra.mxu0 0.0
      %507 = vmatpush.msra.mxu0 0.0
      %508 = vmatpush.msra.mxu0 0.0
      %509 = vmatpush.msra.mxu0 %v469
      %510 = vmatmul.f32.gmra.mxu0 %v461
      %v511 = vpop.f32.mrf.mxu0
      %v512 = vadd.f32 %v448, %v511
      %513 = vmatmul.f32.gmra.mxu0 %v464
      %v514 = vpop.f32.mrf.mxu0
      %v515 = vadd.f32 %v453, %v514
      %516 = vdwg.mxu0
      %517 = vst [vmem:[%s386 + $0x30] sm:$0xff] %v489
      %518 = vst [vmem:[%s386 + $0x38] sm:$0xff] %v512
      %519 = vst [vmem:[%s386 + $0x40] sm:$0xff] %v492
      %520 = vst [vmem:[%s386 + $0x48] sm:$0xff] %v515
      %521 = vst [vmem:[#allocation2] sm:$0xff] 0.0
      %522 = vst [vmem:[#allocation2 + $0x8] sm:$0xff] 0.0
      %523 = vst [vmem:[#allocation2 + $0x4] sm:$0xff] %v440
      %v524 = vld [vmem:[#allocation2] sm:$0xff]
      %v525 = vld [vmem:[#allocation2 + $0x8] sm:$0xf]
      %v528 = vrot.slane %v415, 4
      %v529 = vsel %vm466, %v414, %v528
      %530 = vrot.lane.b32.xlu0 %v529, 111
      %v531 = vpop.permute.xlu0 %530
      %v532 = vrot.slane %v531, 4
      %vm533 = vcmask 908288
      %v534 = vsel %vm533, %v532, %v531
      %v537 = vmul.f32 %v524, %v534
      %v538 = vmul.f32 %v525, %v532
      %541 = vrot.lane.b32.xlu0 %v524, 127
      %v542 = vpop.permute.xlu0 %541
      %543 = vrot.lane.b32.xlu0 %v525, 127
      %v544 = vpop.permute.xlu0 %543
      %v545 = vrot.slane %v542, 4
      %v546 = vrot.slane %v544, 4
      %v547 = vsel %vm466, %v545, %v546
      %vm548 = vcmask 1039360
      %v549 = vsel %vm548, %v542, %v547
      %v552 = vadd.f32 %v537, %v549
      %v553 = vadd.f32 %v538, %v544
      %v556 = vrot.slane %v427, 4
      %v557 = vsel %vm466, %v426, %v556
      %558 = vrot.lane.b32.xlu0 %v557, 113
      %v559 = vpop.permute.xlu0 %558
      %v560 = vrot.slane %v559, 4
      %vm561 = vcmask 924672
      %v562 = vsel %vm561, %v560, %v559
      %v565 = vmul.f32 %v524, %v562
      %v566 = vmul.f32 %v525, %v560
      %569 = vrot.lane.b32.xlu0 %v565, 126
      %v570 = vpop.permute.xlu0 %569
      %571 = vrot.lane.b32.xlu0 %v566, 126
      %v572 = vpop.permute.xlu0 %571
      %v573 = vrot.slane %v570, 4
      %v574 = vrot.slane %v572, 4
      %v575 = vsel %vm466, %v573, %v574
      %vm576 = vcmask 1031168
      %v577 = vsel %vm576, %v570, %v575
      %v580 = vadd.f32 %v552, %v577
      %v581 = vadd.f32 %v553, %v572
      %582 = vrot.lane.b32.xlu0 %v529, 127
      %v583 = vpop.permute.xlu0 %582
      %v584 = vrot.slane %v583, 4
      %v585 = vsel %vm548, %v584, %v583
      %v588 = vmul.f32 %v524, %v585
      %v589 = vmul.f32 %v525, %v584
      %592 = vrot.lane.b32.xlu0 %v588, 112
      %v593 = vpop.permute.xlu0 %592
      %594 = vrot.lane.b32.xlu0 %v589, 112
      %v595 = vpop.permute.xlu0 %594
      %v596 = vrot.slane %v593, 4
      %v597 = vrot.slane %v595, 4
      %v598 = vsel %vm466, %v596, %v597
      %vm599 = vcmask 916480
      %v600 = vsel %vm599, %v593, %v598
      %v603 = vadd.f32 %v580, %v600
      %v604 = vadd.f32 %v581, %v595
      %v605 = vld [vmem:[#allocation2 + $0x4] sm:$0xff]
      %607 = vrot.lane.b32.xlu0 %v605, 111
      %v608 = vpop.permute.xlu0 %607
      %v609 = vrot.slane %v608, 4
      %v610 = vsel %vm533, %v609, %v608
      %v613 = vadd.f32 %v603, %v610
      %v614 = vadd.f32 %v604, %v609
      %v615 = vld [vmem:[#allocation2 + $0x4] sm:$0xff]
      %v616 = vld [vmem:[#allocation2 + $0xc] sm:$0xf]
      %617 = vrot.lane.b32.xlu0 %v557, 1
      %v618 = vpop.permute.xlu0 %617
      %v619 = vrot.slane %v618, 4
      %vm620 = vcmask 7168
      %v621 = vsel %vm620, %v619, %v618
      %v624 = vmul.f32 %v615, %v621
      %v625 = vmul.f32 %v616, %v619
      %628 = vrot.lane.b32.xlu0 %v624, 110
      %v629 = vpop.permute.xlu0 %628
      %630 = vrot.lane.b32.xlu0 %v625, 110
      %v631 = vpop.permute.xlu0 %630
      %v632 = vrot.slane %v629, 4
      %vm633 = vcmask 900096
      %v634 = vsel %vm633, %v632, %v629
      %v635 = vsel %vm633, %v632, %v631
      %v638 = vadd.f32 %v613, %v634
      %v639 = vadd.f32 %v614, %v635
      %640 = vrot.lane.b32.xlu0 %v529, 15
      %v641 = vpop.permute.xlu0 %640
      %v642 = vrot.slane %v641, 4
      %vm643 = vcmask 121856
      %v644 = vsel %vm643, %v642, %v641
      %v647 = vmul.f32 %v615, %v644
      %v648 = vmul.f32 %v616, %v642
      %651 = vrot.lane.b32.xlu0 %v647, 96
      %v652 = vpop.permute.xlu0 %651
      %653 = vrot.lane.b32.xlu0 %v648, 96
      %v654 = vpop.permute.xlu0 %653
      %v655 = vrot.slane %v652, 4
      %vm656 = vcmask 785408
      %v657 = vsel %vm656, %v655, %v652
      %v658 = vsel %vm656, %v655, %v654
      %v661 = vadd.f32 %v638, %v657
      %v662 = vadd.f32 %v639, %v658
      %665 = vrot.lane.b32.xlu0 %v615, 95
      %v666 = vpop.permute.xlu0 %665
      %667 = vrot.lane.b32.xlu0 %v616, 95
      %v668 = vpop.permute.xlu0 %667
      %v669 = vrot.slane %v666, 4
      %vm670 = vcmask 777216
      %v671 = vsel %vm670, %v669, %v666
      %v672 = vsel %vm670, %v669, %v668
      %v675 = vadd.f32 %v661, %v671
      %v676 = vadd.f32 %v662, %v672
      %677 = vrot.lane.b32.xlu0 %v557, 17
      %v678 = vpop.permute.xlu0 %677
      %v679 = vrot.slane %v678, 4
      %vm680 = vcmask 138240
      %v681 = vsel %vm680, %v679, %v678
      %v684 = vmul.f32 %v615, %v681
      %v685 = vmul.f32 %v616, %v679
      %688 = vrot.lane.b32.xlu0 %v684, 94
      %v689 = vpop.permute.xlu0 %688
      %690 = vrot.lane.b32.xlu0 %v685, 94
      %v691 = vpop.permute.xlu0 %690
      %v692 = vrot.slane %v689, 4
      %vm693 = vcmask 769024
      %v694 = vsel %vm693, %v692, %v689
      %v695 = vsel %vm693, %v692, %v691
      %v698 = vadd.f32 %v675, %v694
      %v699 = vadd.f32 %v676, %v695
      %v700 = vmul.f32 %v698, 0.11111111
      %v701 = vmul.f32 %v699, 0.11111111
      %v702 = vld [vmem:[%s1] sm:$0xff]
      %v703 = vld [vmem:[%s1 + $0x8] sm:$0xff]
      %v704 = vld [vmem:[%s1 + $0x10] sm:$0xff]
      %v705 = vld [vmem:[%s6] sm:$0xff]
      %v706 = vld [vmem:[%s6 + $0x8] sm:$0xff]
      %v707 = vld [vmem:[%s6 + $0x10] sm:$0xff]
      %709 = vset.pattern.permute.xlu0 0
      %710 = vperm.xlu0 %709, %v705
      %v711 = vpop.permute.xlu0 %710
      %714 = vset.pattern.permute.xlu0 0
      %715 = vperm.xlu0 %714, %v706
      %v716 = vpop.permute.xlu0 %715
      %719 = vset.pattern.permute.xlu0 0
      %720 = vperm.xlu0 %719, %v707
      %v721 = vpop.permute.xlu0 %720
      %725 = vst [vmem:[#allocation1] ss:$2 sm:$0xff] %v700
      %s726 = scalar_lea.vmem [#allocation1], 16
      %727 = vst [vmem:[%s726] ss:$2 sm:$0xff] %v701
      %v728 = vld.sshfl [vmem:[#allocation1] sm:$0xff pattern:$0x75316420]
      %v729 = vld.sshfl [vmem:[#allocation1 + $0x8] sm:$0xff pattern:$0x75316420]
      %v730 = vld.sshfl [vmem:[#allocation1 + $0x10] sm:$0xff pattern:$0x75316420]
      %731 = vrot.lane.b32.xlu0 %v728, 17
      %v732 = vpop.permute.xlu0 %731
      %733 = vrot.lane.b32.xlu0 %v729, 17
      %v734 = vpop.permute.xlu0 %733
      %735 = vrot.lane.b32.xlu0 %v730, 17
      %v736 = vpop.permute.xlu0 %735
      %v737 = vsel %vm680, %v732, %v734
      %v738 = vsel %vm680, %v734, %v736
      %v740 = vsel %vm459, %v702, 0
      %v743 = vsel %vm459, %v703, 0
      %v746 = vsel %vm459, %v704, 0
      %v748 = vsel %vm466, %v737, 0
      %v750 = vsel %vm466, %v738, 0
      %752 = vmatpush.msra.mxu0 0.0
      %753 = vmatpush.msra.mxu0 0.0
      %754 = vmatpush.msra.mxu0 0.0
      %755 = vmatpush.msra.mxu0 0.0
      %756 = vmatpush.msra.mxu0 0.0
      %757 = vmatpush.msra.mxu0 0.0
      %758 = vmatpush.msra.mxu0 0.0
      %759 = vmatpush.msra.mxu0 0.0
      %760 = vmatpush.msra.mxu0 0.0
      %761 = vmatpush.msra.mxu0 0.0
      %762 = vmatpush.msra.mxu0 0.0
      %763 = vmatpush.msra.mxu0 0.0
      %764 = vmatpush.msra.mxu0 0.0
      %765 = vmatpush.msra.mxu0 0.0
      %766 = vmatpush.msra.mxu0 0.0
      %767 = vmatpush.msra.mxu0 %v748
      %768 = vmatmul.f32.gmra.mxu0 %v740
      %v769 = vpop.f32.mrf.mxu0
      %v770 = vadd.f32 %v711, %v769
      %771 = vmatmul.f32.gmra.mxu0 %v743
      %v772 = vpop.f32.mrf.mxu0
      %v773 = vadd.f32 %v716, %v772
      %774 = vmatmul.f32.gmra.mxu0 %v746
      %v775 = vpop.f32.mrf.mxu0
      %v776 = vadd.f32 %v721, %v775
      %777 = vdwg.mxu0
      %778 = vmatpush.msra.mxu0 0.0
      %779 = vmatpush.msra.mxu0 0.0
      %780 = vmatpush.msra.mxu0 0.0
      %781 = vmatpush.msra.mxu0 0.0
      %782 = vmatpush.msra.mxu0 0.0
      %783 = vmatpush.msra.mxu0 0.0
      %784 = vmatpush.msra.mxu0 0.0
      %785 = vmatpush.msra.mxu0 0.0
      %786 = vmatpush.msra.mxu0 0.0
      %787 = vmatpush.msra.mxu0 0.0
      %788 = vmatpush.msra.mxu0 0.0
      %789 = vmatpush.msra.mxu0 0.0
      %790 = vmatpush.msra.mxu0 0.0
      %791 = vmatpush.msra.mxu0 0.0
      %792 = vmatpush.msra.mxu0 0.0
      %793 = vmatpush.msra.mxu0 %v750
      %794 = vmatmul.f32.gmra.mxu0 %v740
      %v795 = vpop.f32.mrf.mxu0
      %v796 = vadd.f32 %v711, %v795
      %797 = vmatmul.f32.gmra.mxu0 %v743
      %v798 = vpop.f32.mrf.mxu0
      %v799 = vadd.f32 %v716, %v798
      %800 = vmatmul.f32.gmra.mxu0 %v746
      %v801 = vpop.f32.mrf.mxu0
      %v802 = vadd.f32 %v721, %v801
      %803 = vdwg.mxu0
      %804 = vst [vmem:[%s386] sm:$0xff] %v770
      %805 = vst [vmem:[%s386 + $0x8] sm:$0xff] %v796
      %806 = vst [vmem:[%s386 + $0x10] sm:$0xff] %v773
      %807 = vst [vmem:[%s386 + $0x18] sm:$0xff] %v799
      %808 = vst [vmem:[%s386 + $0x20] sm:$0xff] %v776
      %809 = vst [vmem:[%s386 + $0x28] sm:$0xff] %v802
      %810 = vst [vmem:[#allocation3] sm:$0xff] 0.0
      %811 = vst [vmem:[#allocation3 + $0x8] sm:$0xff] 0.0
      %812 = vst [vmem:[#allocation3 + $0x10] sm:$0xff] 0.0
      %813 = vst [vmem:[#allocation3 + $0x18] sm:$0xff] 0.0
      %814 = vst [vmem:[#allocation3 + $0x20] sm:$0xff] 0.0
      %815 = vst [vmem:[#allocation3 + $0x28] sm:$0xff] 0.0
      %816 = vst [vmem:[#allocation3 + $0x30] sm:$0xff] 0.0
      %817 = vst [vmem:[#allocation3 + $0x38] sm:$0xff] 0.0
      %818 = vst [vmem:[#allocation3 + $0x8] sm:$0xff] %v489
      %819 = vst [vmem:[#allocation3 + $0x10] sm:$0xff] %v512
      %820 = vst [vmem:[#allocation3 + $0x28] sm:$0xff] %v492
      %821 = vst [vmem:[#allocation3 + $0x30] sm:$0xff] %v515
      %v822 = vld [vmem:[#allocation3] sm:$0xff]
      %v823 = vld [vmem:[#allocation3 + $0x8] sm:$0xff]
      %v824 = vld [vmem:[#allocation3 + $0x10] sm:$0xff]
      %v825 = vld [vmem:[#allocation3 + $0x20] sm:$0xff]
      %v826 = vld [vmem:[#allocation3 + $0x28] sm:$0xff]
      %v827 = vld [vmem:[#allocation3 + $0x30] sm:$0xff]
      %830 = vrot.lane.b32.xlu0 %v402, 94
      %v831 = vpop.permute.xlu0 %830
      %832 = vrot.lane.b32.xlu0 %v403, 94
      %v833 = vpop.permute.xlu0 %832
      %v834 = vsel %vm693, %v831, %v833
      %v838 = vmul.f32 %v822, %v831
      %v839 = vmul.f32 %v823, %v834
      %v840 = vmul.f32 %v824, %v833
      %v841 = vmul.f32 %v825, %v831
      %v842 = vmul.f32 %v826, %v834
      %v843 = vmul.f32 %v827, %v833
      %850 = vrot.lane.b32.xlu0 %v838, 34
      %v851 = vpop.permute.xlu0 %850
      %852 = vrot.lane.b32.xlu0 %v839, 34
      %v853 = vpop.permute.xlu0 %852
      %854 = vrot.lane.b32.xlu0 %v840, 34
      %v855 = vpop.permute.xlu0 %854
      %856 = vrot.lane.b32.xlu0 %v841, 34
      %v857 = vpop.permute.xlu0 %856
      %858 = vrot.lane.b32.xlu0 %v842, 34
      %v859 = vpop.permute.xlu0 %858
      %860 = vrot.lane.b32.xlu0 %v843, 34
      %v861 = vpop.permute.xlu0 %860
      %vm862 = vcmask 277504
      %v863 = vsel %vm862, %v851, %v853
      %v864 = vsel %vm862, %v853, %v855
      %v865 = vsel %vm862, %v857, %v859
      %v866 = vsel %vm862, %v859, %v861
      %871 = vst [vmem:[#allocation5] sm:$0xff] %v863
      %872 = vst [vmem:[#allocation5 + $0x8] sm:$0xff] %v864
      %873 = vst [vmem:[#allocation5 + $0x10] sm:$0xff] %v865
      %874 = vst [vmem:[#allocation5 + $0x18] sm:$0xff] %v866
      %v875 = vld [vmem:[#allocation3] sm:$0xff]
      %v876 = vld [vmem:[#allocation3 + $0x8] sm:$0xff]
      %v877 = vld [vmem:[#allocation3 + $0x10] sm:$0xff]
      %v878 = vld [vmem:[#allocation3 + $0x20] sm:$0xff]
      %v879 = vld [vmem:[#allocation3 + $0x28] sm:$0xff]
      %v880 = vld [vmem:[#allocation3 + $0x30] sm:$0xff]
      %881 = vrot.lane.b32.xlu0 %v414, 95
      %v882 = vpop.permute.xlu0 %881
      %883 = vrot.lane.b32.xlu0 %v415, 95
      %v884 = vpop.permute.xlu0 %883
      %v885 = vsel %vm670, %v882, %v884
      %v889 = vmul.f32 %v875, %v882
      %v890 = vmul.f32 %v876, %v885
      %v891 = vmul.f32 %v877, %v884
      %v892 = vmul.f32 %v878, %v882
      %v893 = vmul.f32 %v879, %v885
      %v894 = vmul.f32 %v880, %v884
      %901 = vrot.lane.b32.xlu0 %v889, 33
      %v902 = vpop.permute.xlu0 %901
      %903 = vrot.lane.b32.xlu0 %v890, 33
      %v904 = vpop.permute.xlu0 %903
      %905 = vrot.lane.b32.xlu0 %v891, 33
      %v906 = vpop.permute.xlu0 %905
      %907 = vrot.lane.b32.xlu0 %v892, 33
      %v908 = vpop.permute.xlu0 %907
      %909 = vrot.lane.b32.xlu0 %v893, 33
      %v910 = vpop.permute.xlu0 %909
      %911 = vrot.lane.b32.xlu0 %v894, 33
      %v912 = vpop.permute.xlu0 %911
      %vm913 = vcmask 269312
      %v914 = vsel %vm913, %v902, %v904
      %v915 = vsel %vm913, %v904, %v906
      %v916 = vsel %vm913, %v908, %v910
      %v917 = vsel %vm913, %v910, %v912
      %922 = vst [vmem:[#allocation5 + $0x20] sm:$0xff] %v914
      %923 = vst [vmem:[#allocation5 + $0x28] sm:$0xff] %v915
      %924 = vst [vmem:[#allocation5 + $0x30] sm:$0xff] %v916
      %925 = vst [vmem:[#allocation5 + $0x38] sm:$0xff] %v917
      %v926 = vld [vmem:[#allocation3] sm:$0xff]
      %v927 = vld [vmem:[#allocation3 + $0x8] sm:$0xff]
      %v928 = vld [vmem:[#allocation3 + $0x10] sm:$0xff]
      %v929 = vld [vmem:[#allocation3 + $0x20] sm:$0xff]
      %v930 = vld [vmem:[#allocation3 + $0x28] sm:$0xff]
      %v931 = vld [vmem:[#allocation3 + $0x30] sm:$0xff]
      %938 = vrot.lane.b32.xlu0 %v926, 32
      %v939 = vpop.permute.xlu0 %938
      %940 = vrot.lane.b32.xlu0 %v927, 32
      %v941 = vpop.permute.xlu0 %940
      %942 = vrot.lane.b32.xlu0 %v928, 32
      %v943 = vpop.permute.xlu0 %942
      %944 = vrot.lane.b32.xlu0 %v929, 32
      %v945 = vpop.permute.xlu0 %944
      %946 = vrot.lane.b32.xlu0 %v930, 32
      %v947 = vpop.permute.xlu0 %946
      %948 = vrot.lane.b32.xlu0 %v931, 32
      %v949 = vpop.permute.xlu0 %948
      %vm950 = vcmask 261120
      %v951 = vsel %vm950, %v939, %v941
      %v952 = vsel %vm950, %v941, %v943
      %v953 = vsel %vm950, %v945, %v947
      %v954 = vsel %vm950, %v947, %v949
      %959 = vst [vmem:[#allocation5 + $0x40] sm:$0xff] %v951
      %960 = vst [vmem:[#allocation5 + $0x48] sm:$0xff] %v952
      %961 = vst [vmem:[#allocation5 + $0x50] sm:$0xff] %v953
      %962 = vst [vmem:[#allocation5 + $0x58] sm:$0xff] %v954
      %v963 = vld [vmem:[#allocation3] sm:$0xff]
      %v964 = vld [vmem:[#allocation3 + $0x8] sm:$0xff]
      %v965 = vld [vmem:[#allocation3 + $0x10] sm:$0xff]
      %v966 = vld [vmem:[#allocation3 + $0x20] sm:$0xff]
      %v967 = vld [vmem:[#allocation3 + $0x28] sm:$0xff]
      %v968 = vld [vmem:[#allocation3 + $0x30] sm:$0xff]
      %969 = vrot.lane.b32.xlu0 %v426, 97
      %v970 = vpop.permute.xlu0 %969
      %971 = vrot.lane.b32.xlu0 %v427, 97
      %v972 = vpop.permute.xlu0 %971
      %vm973 = vcmask 793600
      %v974 = vsel %vm973, %v970, %v972
      %v978 = vmul.f32 %v963, %v970
      %v979 = vmul.f32 %v964, %v974
      %v980 = vmul.f32 %v965, %v972
      %v981 = vmul.f32 %v966, %v970
      %v982 = vmul.f32 %v967, %v974
      %v983 = vmul.f32 %v968, %v972
      %990 = vrot.lane.b32.xlu0 %v978, 31
      %v991 = vpop.permute.xlu0 %990
      %992 = vrot.lane.b32.xlu0 %v979, 31
      %v993 = vpop.permute.xlu0 %992
      %994 = vrot.lane.b32.xlu0 %v980, 31
      %v995 = vpop.permute.xlu0 %994
      %996 = vrot.lane.b32.xlu0 %v981, 31
      %v997 = vpop.permute.xlu0 %996
      %998 = vrot.lane.b32.xlu0 %v982, 31
      %v999 = vpop.permute.xlu0 %998
      %1000 = vrot.lane.b32.xlu0 %v983, 31
      %v1001 = vpop.permute.xlu0 %1000
      %vm1002 = vcmask 252928
      %v1003 = vsel %vm1002, %v991, %v993
      %v1004 = vsel %vm1002, %v993, %v995
      %v1005 = vsel %vm1002, %v997, %v999
      %v1006 = vsel %vm1002, %v999, %v1001
      %1011 = vst [vmem:[#allocation5 + $0x60] sm:$0xff] %v1003
      %1012 = vst [vmem:[#allocation5 + $0x68] sm:$0xff] %v1004
      %1013 = vst [vmem:[#allocation5 + $0x70] sm:$0xff] %v1005
      %1014 = vst [vmem:[#allocation5 + $0x78] sm:$0xff] %v1006
      %v1015 = vld [vmem:[#allocation3] sm:$0xff]
      %v1016 = vld [vmem:[#allocation3 + $0x8] sm:$0xff]
      %v1017 = vld [vmem:[#allocation3 + $0x10] sm:$0xff]
      %v1018 = vld [vmem:[#allocation3 + $0x20] sm:$0xff]
      %v1019 = vld [vmem:[#allocation3 + $0x28] sm:$0xff]
      %v1020 = vld [vmem:[#allocation3 + $0x30] sm:$0xff]
      %1023 = vrot.lane.b32.xlu0 %v438, 98
      %v1024 = vpop.permute.xlu0 %1023
      %1025 = vrot.lane.b32.xlu0 %v439, 98
      %v1026 = vpop.permute.xlu0 %1025
      %vm1027 = vcmask 801792
      %v1028 = vsel %vm1027, %v1024, %v1026
      %v1032 = vmul.f32 %v1015, %v1024
      %v1033 = vmul.f32 %v1016, %v1028
      %v1034 = vmul.f32 %v1017, %v1026
      %v1035 = vmul.f32 %v1018, %v1024
      %v1036 = vmul.f32 %v1019, %v1028
      %v1037 = vmul.f32 %v1020, %v1026
      %1044 = vrot.lane.b32.xlu0 %v1032, 30
      %v1045 = vpop.permute.xlu0 %1044
      %1046 = vrot.lane.b32.xlu0 %v1033, 30
      %v1047 = vpop.permute.xlu0 %1046
      %1048 = vrot.lane.b32.xlu0 %v1034, 30
      %v1049 = vpop.permute.xlu0 %1048
      %1050 = vrot.lane.b32.xlu0 %v1035, 30
      %v1051 = vpop.permute.xlu0 %1050
      %1052 = vrot.lane.b32.xlu0 %v1036, 30
      %v1053 = vpop.permute.xlu0 %1052
      %1054 = vrot.lane.b32.xlu0 %v1037, 30
      %v1055 = vpop.permute.xlu0 %1054
      %vm1056 = vcmask 244736
      %v1057 = vsel %vm1056, %v1045, %v1047
      %v1058 = vsel %vm1056, %v1047, %v1049
      %v1059 = vsel %vm1056, %v1051, %v1053
      %v1060 = vsel %vm1056, %v1053, %v1055
      %1065 = vst [vmem:[#allocation5 + $0x80] sm:$0xff] %v1057
      %1066 = vst [vmem:[#allocation5 + $0x88] sm:$0xff] %v1058
      %1067 = vst [vmem:[#allocation5 + $0x90] sm:$0xff] %v1059
      %1068 = vst [vmem:[#allocation5 + $0x98] sm:$0xff] %v1060
      %v1069 = vld [vmem:[#allocation3] sm:$0xff]
      %v1070 = vld [vmem:[#allocation3 + $0x8] sm:$0xff]
      %v1071 = vld [vmem:[#allocation3 + $0x10] sm:$0xff]
      %v1072 = vld [vmem:[#allocation3 + $0x20] sm:$0xff]
      %v1073 = vld [vmem:[#allocation3 + $0x28] sm:$0xff]
      %v1074 = vld [vmem:[#allocation3 + $0x30] sm:$0xff]
      %1075 = vrot.lane.b32.xlu0 %v402, 110
      %v1076 = vpop.permute.xlu0 %1075
      %1077 = vrot.lane.b32.xlu0 %v403, 110
      %v1078 = vpop.permute.xlu0 %1077
      %v1079 = vsel %vm633, %v1076, %v1078
      %v1083 = vmul.f32 %v1069, %v1076
      %v1084 = vmul.f32 %v1070, %v1079
      %v1085 = vmul.f32 %v1071, %v1078
      %v1086 = vmul.f32 %v1072, %v1076
      %v1087 = vmul.f32 %v1073, %v1079
      %v1088 = vmul.f32 %v1074, %v1078
      %1095 = vrot.lane.b32.xlu0 %v1083, 18
      %v1096 = vpop.permute.xlu0 %1095
      %1097 = vrot.lane.b32.xlu0 %v1084, 18
      %v1098 = vpop.permute.xlu0 %1097
      %1099 = vrot.lane.b32.xlu0 %v1085, 18
      %v1100 = vpop.permute.xlu0 %1099
      %1101 = vrot.lane.b32.xlu0 %v1086, 18
      %v1102 = vpop.permute.xlu0 %1101
      %1103 = vrot.lane.b32.xlu0 %v1087, 18
      %v1104 = vpop.permute.xlu0 %1103
      %1105 = vrot.lane.b32.xlu0 %v1088, 18
      %v1106 = vpop.permute.xlu0 %1105
      %vm1107 = vcmask 146432
      %v1108 = vsel %vm1107, %v1096, %v1098
      %v1109 = vsel %vm1107, %v1098, %v1100
      %v1110 = vsel %vm1107, %v1102, %v1104
      %v1111 = vsel %vm1107, %v1104, %v1106
      %1116 = vst [vmem:[#allocation5 + $0xa0] sm:$0xff] %v1108
      %1117 = vst [vmem:[#allocation5 + $0xa8] sm:$0xff] %v1109
      %1118 = vst [vmem:[#allocation5 + $0xb0] sm:$0xff] %v1110
      %1119 = vst [vmem:[#allocation5 + $0xb8] sm:$0xff] %v1111
      %v1120 = vld [vmem:[#allocation3] sm:$0xff]
      %v1121 = vld [vmem:[#allocation3 + $0x8] sm:$0xff]
      %v1122 = vld [vmem:[#allocation3 + $0x10] sm:$0xff]
      %v1123 = vld [vmem:[#allocation3 + $0x20] sm:$0xff]
      %v1124 = vld [vmem:[#allocation3 + $0x28] sm:$0xff]
      %v1125 = vld [vmem:[#allocation3 + $0x30] sm:$0xff]
      %1126 = vrot.lane.b32.xlu0 %v414, 111
      %v1127 = vpop.permute.xlu0 %1126
      %1128 = vrot.lane.b32.xlu0 %v415, 111
      %v1129 = vpop.permute.xlu0 %1128
      %v1130 = vsel %vm533, %v1127, %v1129
      %v1134 = vmul.f32 %v1120, %v1127
      %v1135 = vmul.f32 %v1121, %v1130
      %v1136 = vmul.f32 %v1122, %v1129
      %v1137 = vmul.f32 %v1123, %v1127
      %v1138 = vmul.f32 %v1124, %v1130
      %v1139 = vmul.f32 %v1125, %v1129
      %1146 = vrot.lane.b32.xlu0 %v1134, 17
      %v1147 = vpop.permute.xlu0 %1146
      %1148 = vrot.lane.b32.xlu0 %v1135, 17
      %v1149 = vpop.permute.xlu0 %1148
      %1150 = vrot.lane.b32.xlu0 %v1136, 17
      %v1151 = vpop.permute.xlu0 %1150
      %1152 = vrot.lane.b32.xlu0 %v1137, 17
      %v1153 = vpop.permute.xlu0 %1152
      %1154 = vrot.lane.b32.xlu0 %v1138, 17
      %v1155 = vpop.permute.xlu0 %1154
      %1156 = vrot.lane.b32.xlu0 %v1139, 17
      %v1157 = vpop.permute.xlu0 %1156
      %v1158 = vsel %vm680, %v1147, %v1149
      %v1159 = vsel %vm680, %v1149, %v1151
      %v1160 = vsel %vm680, %v1153, %v1155
      %v1161 = vsel %vm680, %v1155, %v1157
      %1166 = vst [vmem:[#allocation5 + $0xc0] sm:$0xff] %v1158
      %1167 = vst [vmem:[#allocation5 + $0xc8] sm:$0xff] %v1159
      %1168 = vst [vmem:[#allocation5 + $0xd0] sm:$0xff] %v1160
      %1169 = vst [vmem:[#allocation5 + $0xd8] sm:$0xff] %v1161
      %v1170 = vld [vmem:[#allocation3] sm:$0xff]
      %v1171 = vld [vmem:[#allocation3 + $0x8] sm:$0xff]
      %v1172 = vld [vmem:[#allocation3 + $0x10] sm:$0xff]
      %v1173 = vld [vmem:[#allocation3 + $0x20] sm:$0xff]
      %v1174 = vld [vmem:[#allocation3 + $0x28] sm:$0xff]
      %v1175 = vld [vmem:[#allocation3 + $0x30] sm:$0xff]
      %1182 = vrot.lane.b32.xlu0 %v1170, 16
      %v1183 = vpop.permute.xlu0 %1182
      %1184 = vrot.lane.b32.xlu0 %v1171, 16
      %v1185 = vpop.permute.xlu0 %1184
      %1186 = vrot.lane.b32.xlu0 %v1172, 16
      %v1187 = vpop.permute.xlu0 %1186
      %1188 = vrot.lane.b32.xlu0 %v1173, 16
      %v1189 = vpop.permute.xlu0 %1188
      %1190 = vrot.lane.b32.xlu0 %v1174, 16
      %v1191 = vpop.permute.xlu0 %1190
      %1192 = vrot.lane.b32.xlu0 %v1175, 16
      %v1193 = vpop.permute.xlu0 %1192
      %vm1194 = vcmask 130048
      %v1195 = vsel %vm1194, %v1183, %v1185
      %v1196 = vsel %vm1194, %v1185, %v1187
      %v1197 = vsel %vm1194, %v1189, %v1191
      %v1198 = vsel %vm1194, %v1191, %v1193
      %1203 = vst [vmem:[#allocation5 + $0xe0] sm:$0xff] %v1195
      %1204 = vst [vmem:[#allocation5 + $0xe8] sm:$0xff] %v1196
      %1205 = vst [vmem:[#allocation5 + $0xf0] sm:$0xff] %v1197
      %1206 = vst [vmem:[#allocation5 + $0xf8] sm:$0xff] %v1198
      %v1207 = vld [vmem:[#allocation3] sm:$0xff]
      %v1208 = vld [vmem:[#allocation3 + $0x8] sm:$0xff]
      %v1209 = vld [vmem:[#allocation3 + $0x10] sm:$0xff]
      %v1210 = vld [vmem:[#allocation3 + $0x20] sm:$0xff]
      %v1211 = vld [vmem:[#allocation3 + $0x28] sm:$0xff]
      %v1212 = vld [vmem:[#allocation3 + $0x30] sm:$0xff]
      %1213 = vrot.lane.b32.xlu0 %v426, 113
      %v1214 = vpop.permute.xlu0 %1213
      %1215 = vrot.lane.b32.xlu0 %v427, 113
      %v1216 = vpop.permute.xlu0 %1215
      %v1217 = vsel %vm561, %v1214, %v1216
      %v1221 = vmul.f32 %v1207, %v1214
      %v1222 = vmul.f32 %v1208, %v1217
      %v1223 = vmul.f32 %v1209, %v1216
      %v1224 = vmul.f32 %v1210, %v1214
      %v1225 = vmul.f32 %v1211, %v1217
      %v1226 = vmul.f32 %v1212, %v1216
      %1233 = vrot.lane.b32.xlu0 %v1221, 15
      %v1234 = vpop.permute.xlu0 %1233
      %1235 = vrot.lane.b32.xlu0 %v1222, 15
      %v1236 = vpop.permute.xlu0 %1235
      %1237 = vrot.lane.b32.xlu0 %v1223, 15
      %v1238 = vpop.permute.xlu0 %1237
      %1239 = vrot.lane.b32.xlu0 %v1224, 15
      %v1240 = vpop.permute.xlu0 %1239
      %1241 = vrot.lane.b32.xlu0 %v1225, 15
      %v1242 = vpop.permute.xlu0 %1241
      %1243 = vrot.lane.b32.xlu0 %v1226, 15
      %v1244 = vpop.permute.xlu0 %1243
      %v1245 = vsel %vm643, %v1234, %v1236
      %v1246 = vsel %vm643, %v1236, %v1238
      %v1247 = vsel %vm643, %v1240, %v1242
      %v1248 = vsel %vm643, %v1242, %v1244
      %1253 = vst [vmem:[#allocation5 + $0x100] sm:$0xff] %v1245
      %1254 = vst [vmem:[#allocation5 + $0x108] sm:$0xff] %v1246
      %1255 = vst [vmem:[#allocation5 + $0x110] sm:$0xff] %v1247
      %1256 = vst [vmem:[#allocation5 + $0x118] sm:$0xff] %v1248
      %v1257 = vld [vmem:[#allocation3] sm:$0xff]
      %v1258 = vld [vmem:[#allocation3 + $0x8] sm:$0xff]
      %v1259 = vld [vmem:[#allocation3 + $0x10] sm:$0xff]
      %v1260 = vld [vmem:[#allocation3 + $0x20] sm:$0xff]
      %v1261 = vld [vmem:[#allocation3 + $0x28] sm:$0xff]
      %v1262 = vld [vmem:[#allocation3 + $0x30] sm:$0xff]
      %1263 = vrot.lane.b32.xlu0 %v438, 114
      %v1264 = vpop.permute.xlu0 %1263
      %1265 = vrot.lane.b32.xlu0 %v439, 114
      %v1266 = vpop.permute.xlu0 %1265
      %vm1267 = vcmask 932864
      %v1268 = vsel %vm1267, %v1264, %v1266
      %v1272 = vmul.f32 %v1257, %v1264
      %v1273 = vmul.f32 %v1258, %v1268
      %v1274 = vmul.f32 %v1259, %v1266
      %v1275 = vmul.f32 %v1260, %v1264
      %v1276 = vmul.f32 %v1261, %v1268
      %v1277 = vmul.f32 %v1262, %v1266
      %1284 = vrot.lane.b32.xlu0 %v1272, 14
      %v1285 = vpop.permute.xlu0 %1284
      %1286 = vrot.lane.b32.xlu0 %v1273, 14
      %v1287 = vpop.permute.xlu0 %1286
      %1288 = vrot.lane.b32.xlu0 %v1274, 14
      %v1289 = vpop.permute.xlu0 %1288
      %1290 = vrot.lane.b32.xlu0 %v1275, 14
      %v1291 = vpop.permute.xlu0 %1290
      %1292 = vrot.lane.b32.xlu0 %v1276, 14
      %v1293 = vpop.permute.xlu0 %1292
      %1294 = vrot.lane.b32.xlu0 %v1277, 14
      %v1295 = vpop.permute.xlu0 %1294
      %vm1296 = vcmask 113664
      %v1297 = vsel %vm1296, %v1285, %v1287
      %v1298 = vsel %vm1296, %v1287, %v1289
      %v1299 = vsel %vm1296, %v1291, %v1293
      %v1300 = vsel %vm1296, %v1293, %v1295
      %1305 = vst [vmem:[#allocation5 + $0x120] sm:$0xff] %v1297
      %1306 = vst [vmem:[#allocation5 + $0x128] sm:$0xff] %v1298
      %1307 = vst [vmem:[#allocation5 + $0x130] sm:$0xff] %v1299
      %1308 = vst [vmem:[#allocation5 + $0x138] sm:$0xff] %v1300
      %v1309 = vld [vmem:[#allocation3] sm:$0xff]
      %v1310 = vld [vmem:[#allocation3 + $0x8] sm:$0xff]
      %v1311 = vld [vmem:[#allocation3 + $0x10] sm:$0xff]
      %v1312 = vld [vmem:[#allocation3 + $0x20] sm:$0xff]
      %v1313 = vld [vmem:[#allocation3 + $0x28] sm:$0xff]
      %v1314 = vld [vmem:[#allocation3 + $0x30] sm:$0xff]
      %1315 = vrot.lane.b32.xlu0 %v402, 126
      %v1316 = vpop.permute.xlu0 %1315
      %1317 = vrot.lane.b32.xlu0 %v403, 126
      %v1318 = vpop.permute.xlu0 %1317
      %v1319 = vsel %vm576, %v1316, %v1318
      %v1323 = vmul.f32 %v1309, %v1316
      %v1324 = vmul.f32 %v1310, %v1319
      %v1325 = vmul.f32 %v1311, %v1318
      %v1326 = vmul.f32 %v1312, %v1316
      %v1327 = vmul.f32 %v1313, %v1319
      %v1328 = vmul.f32 %v1314, %v1318
      %1335 = vrot.lane.b32.xlu0 %v1323, 2
      %v1336 = vpop.permute.xlu0 %1335
      %1337 = vrot.lane.b32.xlu0 %v1324, 2
      %v1338 = vpop.permute.xlu0 %1337
      %1339 = vrot.lane.b32.xlu0 %v1325, 2
      %v1340 = vpop.permute.xlu0 %1339
      %1341 = vrot.lane.b32.xlu0 %v1326, 2
      %v1342 = vpop.permute.xlu0 %1341
      %1343 = vrot.lane.b32.xlu0 %v1327, 2
      %v1344 = vpop.permute.xlu0 %1343
      %1345 = vrot.lane.b32.xlu0 %v1328, 2
      %v1346 = vpop.permute.xlu0 %1345
      %vm1347 = vcmask 15360
      %v1348 = vsel %vm1347, %v1336, %v1338
      %v1349 = vsel %vm1347, %v1338, %v1340
      %v1350 = vsel %vm1347, %v1342, %v1344
      %v1351 = vsel %vm1347, %v1344, %v1346
      %1356 = vst [vmem:[#allocation5 + $0x140] sm:$0xff] %v1348
      %1357 = vst [vmem:[#allocation5 + $0x148] sm:$0xff] %v1349
      %1358 = vst [vmem:[#allocation5 + $0x150] sm:$0xff] %v1350
      %1359 = vst [vmem:[#allocation5 + $0x158] sm:$0xff] %v1351
      %v1360 = vld [vmem:[#allocation3] sm:$0xff]
      %v1361 = vld [vmem:[#allocation3 + $0x8] sm:$0xff]
      %v1362 = vld [vmem:[#allocation3 + $0x10] sm:$0xff]
      %v1363 = vld [vmem:[#allocation3 + $0x20] sm:$0xff]
      %v1364 = vld [vmem:[#allocation3 + $0x28] sm:$0xff]
      %v1365 = vld [vmem:[#allocation3 + $0x30] sm:$0xff]
      %1366 = vrot.lane.b32.xlu0 %v414, 127
      %v1367 = vpop.permute.xlu0 %1366
      %1368 = vrot.lane.b32.xlu0 %v415, 127
      %v1369 = vpop.permute.xlu0 %1368
      %v1370 = vsel %vm548, %v1367, %v1369
      %v1374 = vmul.f32 %v1360, %v1367
      %v1375 = vmul.f32 %v1361, %v1370
      %v1376 = vmul.f32 %v1362, %v1369
      %v1377 = vmul.f32 %v1363, %v1367
      %v1378 = vmul.f32 %v1364, %v1370
      %v1379 = vmul.f32 %v1365, %v1369
      %1386 = vrot.lane.b32.xlu0 %v1374, 1
      %v1387 = vpop.permute.xlu0 %1386
      %1388 = vrot.lane.b32.xlu0 %v1375, 1
      %v1389 = vpop.permute.xlu0 %1388
      %1390 = vrot.lane.b32.xlu0 %v1376, 1
      %v1391 = vpop.permute.xlu0 %1390
      %1392 = vrot.lane.b32.xlu0 %v1377, 1
      %v1393 = vpop.permute.xlu0 %1392
      %1394 = vrot.lane.b32.xlu0 %v1378, 1
      %v1395 = vpop.permute.xlu0 %1394
      %1396 = vrot.lane.b32.xlu0 %v1379, 1
      %v1397 = vpop.permute.xlu0 %1396
      %v1398 = vsel %vm620, %v1387, %v1389
      %v1399 = vsel %vm620, %v1389, %v1391
      %v1400 = vsel %vm620, %v1393, %v1395
      %v1401 = vsel %vm620, %v1395, %v1397
      %1406 = vst [vmem:[#allocation5 + $0x160] sm:$0xff] %v1398
      %1407 = vst [vmem:[#allocation5 + $0x168] sm:$0xff] %v1399
      %1408 = vst [vmem:[#allocation5 + $0x170] sm:$0xff] %v1400
      %1409 = vst [vmem:[#allocation5 + $0x178] sm:$0xff] %v1401
      %v1410 = vld [vmem:[#allocation3 + $0x8] sm:$0xff]
      %v1411 = vld [vmem:[#allocation3 + $0x10] sm:$0xff]
      %v1412 = vld [vmem:[#allocation3 + $0x28] sm:$0xff]
      %v1413 = vld [vmem:[#allocation3 + $0x30] sm:$0xff]
      %1414 = vst [vmem:[#allocation5 + $0x180] sm:$0xff] %v1410
      %1415 = vst [vmem:[#allocation5 + $0x188] sm:$0xff] %v1411
      %1416 = vst [vmem:[#allocation5 + $0x190] sm:$0xff] %v1412
      %1417 = vst [vmem:[#allocation5 + $0x198] sm:$0xff] %v1413
      %v1418 = vld [vmem:[#allocation3 + $0x8] sm:$0xff]
      %v1419 = vld [vmem:[#allocation3 + $0x10] sm:$0xff]
      %v1420 = vld [vmem:[#allocation3 + $0x18] sm:$0xff]
      %v1421 = vld [vmem:[#allocation3 + $0x28] sm:$0xff]
      %v1422 = vld [vmem:[#allocation3 + $0x30] sm:$0xff]
      %v1423 = vld [vmem:[#allocation3 + $0x38] sm:$0xff]
      %1424 = vrot.lane.b32.xlu0 %v426, 1
      %v1425 = vpop.permute.xlu0 %1424
      %1426 = vrot.lane.b32.xlu0 %v427, 1
      %v1427 = vpop.permute.xlu0 %1426
      %v1428 = vsel %vm620, %v1425, %v1427
      %v1432 = vmul.f32 %v1418, %v1425
      %v1433 = vmul.f32 %v1419, %v1428
      %v1434 = vmul.f32 %v1420, %v1427
      %v1435 = vmul.f32 %v1421, %v1425
      %v1436 = vmul.f32 %v1422, %v1428
      %v1437 = vmul.f32 %v1423, %v1427
      %1444 = vrot.lane.b32.xlu0 %v1432, 127
      %v1445 = vpop.permute.xlu0 %1444
      %1446 = vrot.lane.b32.xlu0 %v1433, 127
      %v1447 = vpop.permute.xlu0 %1446
      %1448 = vrot.lane.b32.xlu0 %v1434, 127
      %v1449 = vpop.permute.xlu0 %1448
      %1450 = vrot.lane.b32.xlu0 %v1435, 127
      %v1451 = vpop.permute.xlu0 %1450
      %1452 = vrot.lane.b32.xlu0 %v1436, 127
      %v1453 = vpop.permute.xlu0 %1452
      %1454 = vrot.lane.b32.xlu0 %v1437, 127
      %v1455 = vpop.permute.xlu0 %1454
      %v1456 = vsel %vm548, %v1445, %v1447
      %v1457 = vsel %vm548, %v1447, %v1449
      %v1458 = vsel %vm548, %v1451, %v1453
      %v1459 = vsel %vm548, %v1453, %v1455
      %1464 = vst [vmem:[#allocation5 + $0x1a0] sm:$0xff] %v1456
      %1465 = vst [vmem:[#allocation5 + $0x1a8] sm:$0xff] %v1457
      %1466 = vst [vmem:[#allocation5 + $0x1b0] sm:$0xff] %v1458
      %1467 = vst [vmem:[#allocation5 + $0x1b8] sm:$0xff] %v1459
      %v1468 = vld [vmem:[#allocation3 + $0x8] sm:$0xff]
      %v1469 = vld [vmem:[#allocation3 + $0x10] sm:$0xff]
      %v1470 = vld [vmem:[#allocation3 + $0x18] sm:$0xff]
      %v1471 = vld [vmem:[#allocation3 + $0x28] sm:$0xff]
      %v1472 = vld [vmem:[#allocation3 + $0x30] sm:$0xff]
      %v1473 = vld [vmem:[#allocation3 + $0x38] sm:$0xff]
      %1474 = vrot.lane.b32.xlu0 %v438, 2
      %v1475 = vpop.permute.xlu0 %1474
      %1476 = vrot.lane.b32.xlu0 %v439, 2
      %v1477 = vpop.permute.xlu0 %1476
      %v1478 = vsel %vm1347, %v1475, %v1477
      %v1482 = vmul.f32 %v1468, %v1475
      %v1483 = vmul.f32 %v1469, %v1478
      %v1484 = vmul.f32 %v1470, %v1477
      %v1485 = vmul.f32 %v1471, %v1475
      %v1486 = vmul.f32 %v1472, %v1478
      %v1487 = vmul.f32 %v1473, %v1477
      %1494 = vrot.lane.b32.xlu0 %v1482, 126
      %v1495 = vpop.permute.xlu0 %1494
      %1496 = vrot.lane.b32.xlu0 %v1483, 126
      %v1497 = vpop.permute.xlu0 %1496
      %1498 = vrot.lane.b32.xlu0 %v1484, 126
      %v1499 = vpop.permute.xlu0 %1498
      %1500 = vrot.lane.b32.xlu0 %v1485, 126
      %v1501 = vpop.permute.xlu0 %1500
      %1502 = vrot.lane.b32.xlu0 %v1486, 126
      %v1503 = vpop.permute.xlu0 %1502
      %1504 = vrot.lane.b32.xlu0 %v1487, 126
      %v1505 = vpop.permute.xlu0 %1504
      %v1506 = vsel %vm576, %v1495, %v1497
      %v1507 = vsel %vm576, %v1497, %v1499
      %v1508 = vsel %vm576, %v1501, %v1503
      %v1509 = vsel %vm576, %v1503, %v1505
      %1514 = vst [vmem:[#allocation5 + $0x1c0] sm:$0xff] %v1506
      %1515 = vst [vmem:[#allocation5 + $0x1c8] sm:$0xff] %v1507
      %1516 = vst [vmem:[#allocation5 + $0x1d0] sm:$0xff] %v1508
      %1517 = vst [vmem:[#allocation5 + $0x1d8] sm:$0xff] %v1509
      %v1518 = vld [vmem:[#allocation3 + $0x8] sm:$0xff]
      %v1519 = vld [vmem:[#allocation3 + $0x10] sm:$0xff]
      %v1520 = vld [vmem:[#allocation3 + $0x18] sm:$0xff]
      %v1521 = vld [vmem:[#allocation3 + $0x28] sm:$0xff]
      %v1522 = vld [vmem:[#allocation3 + $0x30] sm:$0xff]
      %v1523 = vld [vmem:[#allocation3 + $0x38] sm:$0xff]
      %1524 = vrot.lane.b32.xlu0 %v402, 14
      %v1525 = vpop.permute.xlu0 %1524
      %1526 = vrot.lane.b32.xlu0 %v403, 14
      %v1527 = vpop.permute.xlu0 %1526
      %v1528 = vsel %vm1296, %v1525, %v1527
      %v1532 = vmul.f32 %v1518, %v1525
      %v1533 = vmul.f32 %v1519, %v1528
      %v1534 = vmul.f32 %v1520, %v1527
      %v1535 = vmul.f32 %v1521, %v1525
      %v1536 = vmul.f32 %v1522, %v1528
      %v1537 = vmul.f32 %v1523, %v1527
      %1544 = vrot.lane.b32.xlu0 %v1532, 114
      %v1545 = vpop.permute.xlu0 %1544
      %1546 = vrot.lane.b32.xlu0 %v1533, 114
      %v1547 = vpop.permute.xlu0 %1546
      %1548 = vrot.lane.b32.xlu0 %v1534, 114
      %v1549 = vpop.permute.xlu0 %1548
      %1550 = vrot.lane.b32.xlu0 %v1535, 114
      %v1551 = vpop.permute.xlu0 %1550
      %1552 = vrot.lane.b32.xlu0 %v1536, 114
      %v1553 = vpop.permute.xlu0 %1552
      %1554 = vrot.lane.b32.xlu0 %v1537, 114
      %v1555 = vpop.permute.xlu0 %1554
      %v1556 = vsel %vm1267, %v1545, %v1547
      %v1557 = vsel %vm1267, %v1547, %v1549
      %v1558 = vsel %vm1267, %v1551, %v1553
      %v1559 = vsel %vm1267, %v1553, %v1555
      %1564 = vst [vmem:[#allocation5 + $0x1e0] sm:$0xff] %v1556
      %1565 = vst [vmem:[#allocation5 + $0x1e8] sm:$0xff] %v1557
      %1566 = vst [vmem:[#allocation5 + $0x1f0] sm:$0xff] %v1558
      %1567 = vst [vmem:[#allocation5 + $0x1f8] sm:$0xff] %v1559
      %v1568 = vld [vmem:[#allocation3 + $0x8] sm:$0xff]
      %v1569 = vld [vmem:[#allocation3 + $0x10] sm:$0xff]
      %v1570 = vld [vmem:[#allocation3 + $0x18] sm:$0xff]
      %v1571 = vld [vmem:[#allocation3 + $0x28] sm:$0xff]
      %v1572 = vld [vmem:[#allocation3 + $0x30] sm:$0xff]
      %v1573 = vld [vmem:[#allocation3 + $0x38] sm:$0xff]
      %1574 = vrot.lane.b32.xlu0 %v414, 15
      %v1575 = vpop.permute.xlu0 %1574
      %1576 = vrot.lane.b32.xlu0 %v415, 15
      %v1577 = vpop.permute.xlu0 %1576
      %v1578 = vsel %vm643, %v1575, %v1577
      %v1582 = vmul.f32 %v1568, %v1575
      %v1583 = vmul.f32 %v1569, %v1578
      %v1584 = vmul.f32 %v1570, %v1577
      %v1585 = vmul.f32 %v1571, %v1575
      %v1586 = vmul.f32 %v1572, %v1578
      %v1587 = vmul.f32 %v1573, %v1577
      %1594 = vrot.lane.b32.xlu0 %v1582, 113
      %v1595 = vpop.permute.xlu0 %1594
      %1596 = vrot.lane.b32.xlu0 %v1583, 113
      %v1597 = vpop.permute.xlu0 %1596
      %1598 = vrot.lane.b32.xlu0 %v1584, 113
      %v1599 = vpop.permute.xlu0 %1598
      %1600 = vrot.lane.b32.xlu0 %v1585, 113
      %v1601 = vpop.permute.xlu0 %1600
      %1602 = vrot.lane.b32.xlu0 %v1586, 113
      %v1603 = vpop.permute.xlu0 %1602
      %1604 = vrot.lane.b32.xlu0 %v1587, 113
      %v1605 = vpop.permute.xlu0 %1604
      %v1606 = vsel %vm561, %v1595, %v1597
      %v1607 = vsel %vm561, %v1597, %v1599
      %v1608 = vsel %vm561, %v1601, %v1603
      %v1609 = vsel %vm561, %v1603, %v1605
      %1614 = vst [vmem:[#allocation5 + $0x200] sm:$0xff] %v1606
      %1615 = vst [vmem:[#allocation5 + $0x208] sm:$0xff] %v1607
      %1616 = vst [vmem:[#allocation5 + $0x210] sm:$0xff] %v1608
      %1617 = vst [vmem:[#allocation5 + $0x218] sm:$0xff] %v1609
      %v1618 = vld [vmem:[#allocation3 + $0x8] sm:$0xff]
      %v1619 = vld [vmem:[#allocation3 + $0x10] sm:$0xff]
      %v1620 = vld [vmem:[#allocation3 + $0x18] sm:$0xff]
      %v1621 = vld [vmem:[#allocation3 + $0x28] sm:$0xff]
      %v1622 = vld [vmem:[#allocation3 + $0x30] sm:$0xff]
      %v1623 = vld [vmem:[#allocation3 + $0x38] sm:$0xff]
      %1630 = vrot.lane.b32.xlu0 %v1618, 112
      %v1631 = vpop.permute.xlu0 %1630
      %1632 = vrot.lane.b32.xlu0 %v1619, 112
      %v1633 = vpop.permute.xlu0 %1632
      %1634 = vrot.lane.b32.xlu0 %v1620, 112
      %v1635 = vpop.permute.xlu0 %1634
      %1636 = vrot.lane.b32.xlu0 %v1621, 112
      %v1637 = vpop.permute.xlu0 %1636
      %1638 = vrot.lane.b32.xlu0 %v1622, 112
      %v1639 = vpop.permute.xlu0 %1638
      %1640 = vrot.lane.b32.xlu0 %v1623, 112
      %v1641 = vpop.permute.xlu0 %1640
      %v1642 = vsel %vm599, %v1631, %v1633
      %v1643 = vsel %vm599, %v1633, %v1635
      %v1644 = vsel %vm599, %v1637, %v1639
      %v1645 = vsel %vm599, %v1639, %v1641
      %1650 = vst [vmem:[#allocation5 + $0x220] sm:$0xff] %v1642
      %1651 = vst [vmem:[#allocation5 + $0x228] sm:$0xff] %v1643
      %1652 = vst [vmem:[#allocation5 + $0x230] sm:$0xff] %v1644
      %1653 = vst [vmem:[#allocation5 + $0x238] sm:$0xff] %v1645
      %v1654 = vld [vmem:[#allocation3 + $0x8] sm:$0xff]
      %v1655 = vld [vmem:[#allocation3 + $0x10] sm:$0xff]
      %v1656 = vld [vmem:[#allocation3 + $0x18] sm:$0xff]
      %v1657 = vld [vmem:[#allocation3 + $0x28] sm:$0xff]
      %v1658 = vld [vmem:[#allocation3 + $0x30] sm:$0xff]
      %v1659 = vld [vmem:[#allocation3 + $0x38] sm:$0xff]
      %1660 = vrot.lane.b32.xlu0 %v426, 17
      %v1661 = vpop.permute.xlu0 %1660
      %1662 = vrot.lane.b32.xlu0 %v427, 17
      %v1663 = vpop.permute.xlu0 %1662
      %v1664 = vsel %vm680, %v1661, %v1663
      %v1668 = vmul.f32 %v1654, %v1661
      %v1669 = vmul.f32 %v1655, %v1664
      %v1670 = vmul.f32 %v1656, %v1663
      %v1671 = vmul.f32 %v1657, %v1661
      %v1672 = vmul.f32 %v1658, %v1664
      %v1673 = vmul.f32 %v1659, %v1663
      %1680 = vrot.lane.b32.xlu0 %v1668, 111
      %v1681 = vpop.permute.xlu0 %1680
      %1682 = vrot.lane.b32.xlu0 %v1669, 111
      %v1683 = vpop.permute.xlu0 %1682
      %1684 = vrot.lane.b32.xlu0 %v1670, 111
      %v1685 = vpop.permute.xlu0 %1684
      %1686 = vrot.lane.b32.xlu0 %v1671, 111
      %v1687 = vpop.permute.xlu0 %1686
      %1688 = vrot.lane.b32.xlu0 %v1672, 111
      %v1689 = vpop.permute.xlu0 %1688
      %1690 = vrot.lane.b32.xlu0 %v1673, 111
      %v1691 = vpop.permute.xlu0 %1690
      %v1692 = vsel %vm533, %v1681, %v1683
      %v1693 = vsel %vm533, %v1683, %v1685
      %v1694 = vsel %vm533, %v1687, %v1689
      %v1695 = vsel %vm533, %v1689, %v1691
      %1700 = vst [vmem:[#allocation5 + $0x240] sm:$0xff] %v1692
      %1701 = vst [vmem:[#allocation5 + $0x248] sm:$0xff] %v1693
      %1702 = vst [vmem:[#allocation5 + $0x250] sm:$0xff] %v1694
      %1703 = vst [vmem:[#allocation5 + $0x258] sm:$0xff] %v1695
      %v1704 = vld [vmem:[#allocation3 + $0x8] sm:$0xff]
      %v1705 = vld [vmem:[#allocation3 + $0x10] sm:$0xff]
      %v1706 = vld [vmem:[#allocation3 + $0x18] sm:$0xff]
      %v1707 = vld [vmem:[#allocation3 + $0x28] sm:$0xff]
      %v1708 = vld [vmem:[#allocation3 + $0x30] sm:$0xff]
      %v1709 = vld [vmem:[#allocation3 + $0x38] sm:$0xff]
      %1710 = vrot.lane.b32.xlu0 %v438, 18
      %v1711 = vpop.permute.xlu0 %1710
      %1712 = vrot.lane.b32.xlu0 %v439, 18
      %v1713 = vpop.permute.xlu0 %1712
      %v1714 = vsel %vm1107, %v1711, %v1713
      %v1718 = vmul.f32 %v1704, %v1711
      %v1719 = vmul.f32 %v1705, %v1714
      %v1720 = vmul.f32 %v1706, %v1713
      %v1721 = vmul.f32 %v1707, %v1711
      %v1722 = vmul.f32 %v1708, %v1714
      %v1723 = vmul.f32 %v1709, %v1713
      %1730 = vrot.lane.b32.xlu0 %v1718, 110
      %v1731 = vpop.permute.xlu0 %1730
      %1732 = vrot.lane.b32.xlu0 %v1719, 110
      %v1733 = vpop.permute.xlu0 %1732
      %1734 = vrot.lane.b32.xlu0 %v1720, 110
      %v1735 = vpop.permute.xlu0 %1734
      %1736 = vrot.lane.b32.xlu0 %v1721, 110
      %v1737 = vpop.permute.xlu0 %1736
      %1738 = vrot.lane.b32.xlu0 %v1722, 110
      %v1739 = vpop.permute.xlu0 %1738
      %1740 = vrot.lane.b32.xlu0 %v1723, 110
      %v1741 = vpop.permute.xlu0 %1740
      %v1742 = vsel %vm633, %v1731, %v1733
      %v1743 = vsel %vm633, %v1733, %v1735
      %v1744 = vsel %vm633, %v1737, %v1739
      %v1745 = vsel %vm633, %v1739, %v1741
      %1750 = vst [vmem:[#allocation5 + $0x260] sm:$0xff] %v1742
      %1751 = vst [vmem:[#allocation5 + $0x268] sm:$0xff] %v1743
      %1752 = vst [vmem:[#allocation5 + $0x270] sm:$0xff] %v1744
      %1753 = vst [vmem:[#allocation5 + $0x278] sm:$0xff] %v1745
      %v1754 = vld [vmem:[#allocation3 + $0x8] sm:$0xff]
      %v1755 = vld [vmem:[#allocation3 + $0x10] sm:$0xff]
      %v1756 = vld [vmem:[#allocation3 + $0x18] sm:$0xff]
      %v1757 = vld [vmem:[#allocation3 + $0x28] sm:$0xff]
      %v1758 = vld [vmem:[#allocation3 + $0x30] sm:$0xff]
      %v1759 = vld [vmem:[#allocation3 + $0x38] sm:$0xff]
      %1760 = vrot.lane.b32.xlu0 %v402, 30
      %v1761 = vpop.permute.xlu0 %1760
      %1762 = vrot.lane.b32.xlu0 %v403, 30
      %v1763 = vpop.permute.xlu0 %1762
      %v1764 = vsel %vm1056, %v1761, %v1763
      %v1768 = vmul.f32 %v1754, %v1761
      %v1769 = vmul.f32 %v1755, %v1764
      %v1770 = vmul.f32 %v1756, %v1763
      %v1771 = vmul.f32 %v1757, %v1761
      %v1772 = vmul.f32 %v1758, %v1764
      %v1773 = vmul.f32 %v1759, %v1763
      %1780 = vrot.lane.b32.xlu0 %v1768, 98
      %v1781 = vpop.permute.xlu0 %1780
      %1782 = vrot.lane.b32.xlu0 %v1769, 98
      %v1783 = vpop.permute.xlu0 %1782
      %1784 = vrot.lane.b32.xlu0 %v1770, 98
      %v1785 = vpop.permute.xlu0 %1784
      %1786 = vrot.lane.b32.xlu0 %v1771, 98
      %v1787 = vpop.permute.xlu0 %1786
      %1788 = vrot.lane.b32.xlu0 %v1772, 98
      %v1789 = vpop.permute.xlu0 %1788
      %1790 = vrot.lane.b32.xlu0 %v1773, 98
      %v1791 = vpop.permute.xlu0 %1790
      %v1792 = vsel %vm1027, %v1781, %v1783
      %v1793 = vsel %vm1027, %v1783, %v1785
      %v1794 = vsel %vm1027, %v1787, %v1789
      %v1795 = vsel %vm1027, %v1789, %v1791
      %1800 = vst [vmem:[#allocation5 + $0x280] sm:$0xff] %v1792
      %1801 = vst [vmem:[#allocation5 + $0x288] sm:$0xff] %v1793
      %1802 = vst [vmem:[#allocation5 + $0x290] sm:$0xff] %v1794
      %1803 = vst [vmem:[#allocation5 + $0x298] sm:$0xff] %v1795
      %v1804 = vld [vmem:[#allocation3 + $0x8] sm:$0xff]
      %v1805 = vld [vmem:[#allocation3 + $0x10] sm:$0xff]
      %v1806 = vld [vmem:[#allocation3 + $0x18] sm:$0xff]
      %v1807 = vld [vmem:[#allocation3 + $0x28] sm:$0xff]
      %v1808 = vld [vmem:[#allocation3 + $0x30] sm:$0xff]
      %v1809 = vld [vmem:[#allocation3 + $0x38] sm:$0xff]
      %1810 = vrot.lane.b32.xlu0 %v414, 31
      %v1811 = vpop.permute.xlu0 %1810
      %1812 = vrot.lane.b32.xlu0 %v415, 31
      %v1813 = vpop.permute.xlu0 %1812
      %v1814 = vsel %vm1002, %v1811, %v1813
      %v1818 = vmul.f32 %v1804, %v1811
      %v1819 = vmul.f32 %v1805, %v1814
      %v1820 = vmul.f32 %v1806, %v1813
      %v1821 = vmul.f32 %v1807, %v1811
      %v1822 = vmul.f32 %v1808, %v1814
      %v1823 = vmul.f32 %v1809, %v1813
      %1830 = vrot.lane.b32.xlu0 %v1818, 97
      %v1831 = vpop.permute.xlu0 %1830
      %1832 = vrot.lane.b32.xlu0 %v1819, 97
      %v1833 = vpop.permute.xlu0 %1832
      %1834 = vrot.lane.b32.xlu0 %v1820, 97
      %v1835 = vpop.permute.xlu0 %1834
      %1836 = vrot.lane.b32.xlu0 %v1821, 97
      %v1837 = vpop.permute.xlu0 %1836
      %1838 = vrot.lane.b32.xlu0 %v1822, 97
      %v1839 = vpop.permute.xlu0 %1838
      %1840 = vrot.lane.b32.xlu0 %v1823, 97
      %v1841 = vpop.permute.xlu0 %1840
      %v1842 = vsel %vm973, %v1831, %v1833
      %v1843 = vsel %vm973, %v1833, %v1835
      %v1844 = vsel %vm973, %v1837, %v1839
      %v1845 = vsel %vm973, %v1839, %v1841
      %1850 = vst [vmem:[#allocation5 + $0x2a0] sm:$0xff] %v1842
      %1851 = vst [vmem:[#allocation5 + $0x2a8] sm:$0xff] %v1843
      %1852 = vst [vmem:[#allocation5 + $0x2b0] sm:$0xff] %v1844
      %1853 = vst [vmem:[#allocation5 + $0x2b8] sm:$0xff] %v1845
      %v1854 = vld [vmem:[#allocation3 + $0x8] sm:$0xff]
      %v1855 = vld [vmem:[#allocation3 + $0x10] sm:$0xff]
      %v1856 = vld [vmem:[#allocation3 + $0x18] sm:$0xff]
      %v1857 = vld [vmem:[#allocation3 + $0x28] sm:$0xff]
      %v1858 = vld [vmem:[#allocation3 + $0x30] sm:$0xff]
      %v1859 = vld [vmem:[#allocation3 + $0x38] sm:$0xff]
      %1866 = vrot.lane.b32.xlu0 %v1854, 96
      %v1867 = vpop.permute.xlu0 %1866
      %1868 = vrot.lane.b32.xlu0 %v1855, 96
      %v1869 = vpop.permute.xlu0 %1868
      %1870 = vrot.lane.b32.xlu0 %v1856, 96
      %v1871 = vpop.permute.xlu0 %1870
      %1872 = vrot.lane.b32.xlu0 %v1857, 96
      %v1873 = vpop.permute.xlu0 %1872
      %1874 = vrot.lane.b32.xlu0 %v1858, 96
      %v1875 = vpop.permute.xlu0 %1874
      %1876 = vrot.lane.b32.xlu0 %v1859, 96
      %v1877 = vpop.permute.xlu0 %1876
      %v1878 = vsel %vm656, %v1867, %v1869
      %v1879 = vsel %vm656, %v1869, %v1871
      %v1880 = vsel %vm656, %v1873, %v1875
      %v1881 = vsel %vm656, %v1875, %v1877
      %1886 = vst [vmem:[#allocation5 + $0x2c0] sm:$0xff] %v1878
      %1887 = vst [vmem:[#allocation5 + $0x2c8] sm:$0xff] %v1879
      %1888 = vst [vmem:[#allocation5 + $0x2d0] sm:$0xff] %v1880
      %1889 = vst [vmem:[#allocation5 + $0x2d8] sm:$0xff] %v1881
      %v1890 = vld [vmem:[#allocation3 + $0x8] sm:$0xff]
      %v1891 = vld [vmem:[#allocation3 + $0x10] sm:$0xff]
      %v1892 = vld [vmem:[#allocation3 + $0x18] sm:$0xff]
      %v1893 = vld [vmem:[#allocation3 + $0x28] sm:$0xff]
      %v1894 = vld [vmem:[#allocation3 + $0x30] sm:$0xff]
      %v1895 = vld [vmem:[#allocation3 + $0x38] sm:$0xff]
      %1896 = vrot.lane.b32.xlu0 %v426, 33
      %v1897 = vpop.permute.xlu0 %1896
      %1898 = vrot.lane.b32.xlu0 %v427, 33
      %v1899 = vpop.permute.xlu0 %1898
      %v1900 = vsel %vm913, %v1897, %v1899
      %v1904 = vmul.f32 %v1890, %v1897
      %v1905 = vmul.f32 %v1891, %v1900
      %v1906 = vmul.f32 %v1892, %v1899
      %v1907 = vmul.f32 %v1893, %v1897
      %v1908 = vmul.f32 %v1894, %v1900
      %v1909 = vmul.f32 %v1895, %v1899
      %1916 = vrot.lane.b32.xlu0 %v1904, 95
      %v1917 = vpop.permute.xlu0 %1916
      %1918 = vrot.lane.b32.xlu0 %v1905, 95
      %v1919 = vpop.permute.xlu0 %1918
      %1920 = vrot.lane.b32.xlu0 %v1906, 95
      %v1921 = vpop.permute.xlu0 %1920
      %1922 = vrot.lane.b32.xlu0 %v1907, 95
      %v1923 = vpop.permute.xlu0 %1922
      %1924 = vrot.lane.b32.xlu0 %v1908, 95
      %v1925 = vpop.permute.xlu0 %1924
      %1926 = vrot.lane.b32.xlu0 %v1909, 95
      %v1927 = vpop.permute.xlu0 %1926
      %v1928 = vsel %vm670, %v1917, %v1919
      %v1929 = vsel %vm670, %v1919, %v1921
      %v1930 = vsel %vm670, %v1923, %v1925
      %v1931 = vsel %vm670, %v1925, %v1927
      %1936 = vst [vmem:[#allocation5 + $0x2e0] sm:$0xff] %v1928
      %1937 = vst [vmem:[#allocation5 + $0x2e8] sm:$0xff] %v1929
      %1938 = vst [vmem:[#allocation5 + $0x2f0] sm:$0xff] %v1930
      %1939 = vst [vmem:[#allocation5 + $0x2f8] sm:$0xff] %v1931
      %v1940 = vld [vmem:[#allocation3 + $0x8] sm:$0xff]
      %v1941 = vld [vmem:[#allocation3 + $0x10] sm:$0xff]
      %v1942 = vld [vmem:[#allocation3 + $0x18] sm:$0xff]
      %v1943 = vld [vmem:[#allocation3 + $0x28] sm:$0xff]
      %v1944 = vld [vmem:[#allocation3 + $0x30] sm:$0xff]
      %v1945 = vld [vmem:[#allocation3 + $0x38] sm:$0xff]
      %1946 = vrot.lane.b32.xlu0 %v438, 34
      %v1947 = vpop.permute.xlu0 %1946
      %1948 = vrot.lane.b32.xlu0 %v439, 34
      %v1949 = vpop.permute.xlu0 %1948
      %v1950 = vsel %vm862, %v1947, %v1949
      %v1954 = vmul.f32 %v1940, %v1947
      %v1955 = vmul.f32 %v1941, %v1950
      %v1956 = vmul.f32 %v1942, %v1949
      %v1957 = vmul.f32 %v1943, %v1947
      %v1958 = vmul.f32 %v1944, %v1950
      %v1959 = vmul.f32 %v1945, %v1949
      %1966 = vrot.lane.b32.xlu0 %v1954, 94
      %v1967 = vpop.permute.xlu0 %1966
      %1968 = vrot.lane.b32.xlu0 %v1955, 94
      %v1969 = vpop.permute.xlu0 %1968
      %1970 = vrot.lane.b32.xlu0 %v1956, 94
      %v1971 = vpop.permute.xlu0 %1970
      %1972 = vrot.lane.b32.xlu0 %v1957, 94
      %v1973 = vpop.permute.xlu0 %1972
      %1974 = vrot.lane.b32.xlu0 %v1958, 94
      %v1975 = vpop.permute.xlu0 %1974
      %1976 = vrot.lane.b32.xlu0 %v1959, 94
      %v1977 = vpop.permute.xlu0 %1976
      %v1978 = vsel %vm693, %v1967, %v1969
      %v1979 = vsel %vm693, %v1969, %v1971
      %v1980 = vsel %vm693, %v1973, %v1975
      %v1981 = vsel %vm693, %v1975, %v1977
      %1986 = vst [vmem:[#allocation5 + $0x300] sm:$0xff] %v1978
      %1987 = vst [vmem:[#allocation5 + $0x308] sm:$0xff] %v1979
      %1988 = vst [vmem:[#allocation5 + $0x310] sm:$0xff] %v1980
      %1989 = vst [vmem:[#allocation5 + $0x318] sm:$0xff] %v1981
      %v1990 = vld [vmem:[%s3] sm:$0xff]
      %v1991 = vld [vmem:[%s3 + $0x8] sm:$0xff]
      %v1992 = vld [vmem:[%s3 + $0x10] sm:$0xff]
      %v1993 = vld [vmem:[%s3 + $0x18] sm:$0xff]
      %v1994 = vld [vmem:[%s3 + $0x20] sm:$0xff]
      %v1995 = vld [vmem:[%s3 + $0x28] sm:$0xff]
      %v1996 = vld [vmem:[%s3 + $0x30] sm:$0xff]
      %v1997 = vld [vmem:[%s3 + $0x38] sm:$0xff]
      %v1998 = vld [vmem:[%s3 + $0x40] sm:$0xff]
      %v1999 = vld [vmem:[%s3 + $0x48] sm:$0xff]
      %v2000 = vld [vmem:[%s3 + $0x50] sm:$0xff]
      %v2001 = vld [vmem:[%s3 + $0x58] sm:$0xff]
      %v2002 = vld [vmem:[#allocation5] sm:$0xff]
      %v2003 = vld [vmem:[#allocation5 + $0x8] sm:$0xff]
      %v2004 = vld [vmem:[#allocation5 + $0x10] sm:$0xff]
      %v2005 = vld [vmem:[#allocation5 + $0x18] sm:$0xff]
      %v2006 = vld [vmem:[#allocation5 + $0x20] sm:$0xff]
      %v2007 = vld [vmem:[#allocation5 + $0x28] sm:$0xff]
      %v2008 = vld [vmem:[#allocation5 + $0x30] sm:$0xff]
      %v2009 = vld [vmem:[#allocation5 + $0x38] sm:$0xff]
      %v2010 = vld [vmem:[#allocation5 + $0x40] sm:$0xff]
      %v2011 = vld [vmem:[#allocation5 + $0x48] sm:$0xff]
      %v2012 = vld [vmem:[#allocation5 + $0x50] sm:$0xff]
      %v2013 = vld [vmem:[#allocation5 + $0x58] sm:$0xff]
      %v2014 = vld [vmem:[#allocation5 + $0x60] sm:$0xff]
      %v2015 = vld [vmem:[#allocation5 + $0x68] sm:$0xff]
      %v2016 = vld [vmem:[#allocation5 + $0x70] sm:$0xff]
      %v2017 = vld [vmem:[#allocation5 + $0x78] sm:$0xff]
      %v2018 = vld [vmem:[#allocation5 + $0x80] sm:$0xff]
      %v2019 = vld [vmem:[#allocation5 + $0x88] sm:$0xff]
      %v2020 = vld [vmem:[#allocation5 + $0x90] sm:$0xff]
      %v2021 = vld [vmem:[#allocation5 + $0x98] sm:$0xff]
      %v2022 = vld [vmem:[#allocation5 + $0xa0] sm:$0xff]
      %v2023 = vld [vmem:[#allocation5 + $0xa8] sm:$0xff]
      %v2024 = vld [vmem:[#allocation5 + $0xb0] sm:$0xff]
      %v2025 = vld [vmem:[#allocation5 + $0xb8] sm:$0xff]
      %v2026 = vld [vmem:[#allocation5 + $0xc0] sm:$0xff]
      %v2027 = vld [vmem:[#allocation5 + $0xc8] sm:$0xff]
      %v2028 = vld [vmem:[#allocation5 + $0xd0] sm:$0xff]
      %v2029 = vld [vmem:[#allocation5 + $0xd8] sm:$0xff]
      %v2030 = vld [vmem:[#allocation5 + $0xe0] sm:$0xff]
      %v2031 = vld [vmem:[#allocation5 + $0xe8] sm:$0xff]
      %v2032 = vld [vmem:[#allocation5 + $0xf0] sm:$0xff]
      %v2033 = vld [vmem:[#allocation5 + $0xf8] sm:$0xff]
      %v2034 = vld [vmem:[#allocation5 + $0x100] sm:$0xff]
      %v2035 = vld [vmem:[#allocation5 + $0x108] sm:$0xff]
      %v2036 = vld [vmem:[#allocation5 + $0x110] sm:$0xff]
      %v2037 = vld [vmem:[#allocation5 + $0x118] sm:$0xff]
      %v2038 = vld [vmem:[#allocation5 + $0x120] sm:$0xff]
      %v2039 = vld [vmem:[#allocation5 + $0x128] sm:$0xff]
      %v2040 = vld [vmem:[#allocation5 + $0x130] sm:$0xff]
      %v2041 = vld [vmem:[#allocation5 + $0x138] sm:$0xff]
      %v2042 = vld [vmem:[#allocation5 + $0x140] sm:$0xff]
      %v2043 = vld [vmem:[#allocation5 + $0x148] sm:$0xff]
      %v2044 = vld [vmem:[#allocation5 + $0x150] sm:$0xff]
      %v2045 = vld [vmem:[#allocation5 + $0x158] sm:$0xff]
      %v2046 = vld [vmem:[#allocation5 + $0x160] sm:$0xff]
      %v2047 = vld [vmem:[#allocation5 + $0x168] sm:$0xff]
      %v2048 = vld [vmem:[#allocation5 + $0x170] sm:$0xff]
      %v2049 = vld [vmem:[#allocation5 + $0x178] sm:$0xff]
      %v2050 = vld [vmem:[#allocation5 + $0x180] sm:$0xff]
      %v2051 = vld [vmem:[#allocation5 + $0x188] sm:$0xff]
      %v2052 = vld [vmem:[#allocation5 + $0x190] sm:$0xff]
      %v2053 = vld [vmem:[#allocation5 + $0x198] sm:$0xff]
      %v2054 = vld [vmem:[#allocation5 + $0x1a0] sm:$0xff]
      %v2055 = vld [vmem:[#allocation5 + $0x1a8] sm:$0xff]
      %v2056 = vld [vmem:[#allocation5 + $0x1b0] sm:$0xff]
      %v2057 = vld [vmem:[#allocation5 + $0x1b8] sm:$0xff]
      %v2058 = vld [vmem:[#allocation5 + $0x1c0] sm:$0xff]
      %v2059 = vld [vmem:[#allocation5 + $0x1c8] sm:$0xff]
      %v2060 = vld [vmem:[#allocation5 + $0x1d0] sm:$0xff]
      %v2061 = vld [vmem:[#allocation5 + $0x1d8] sm:$0xff]
      %v2062 = vld [vmem:[#allocation5 + $0x1e0] sm:$0xff]
      %v2063 = vld [vmem:[#allocation5 + $0x1e8] sm:$0xff]
      %v2064 = vld [vmem:[#allocation5 + $0x1f0] sm:$0xff]
      %v2065 = vld [vmem:[#allocation5 + $0x1f8] sm:$0xff]
      %v2066 = vld [vmem:[#allocation5 + $0x200] sm:$0xff]
      %v2067 = vld [vmem:[#allocation5 + $0x208] sm:$0xff]
      %v2068 = vld [vmem:[#allocation5 + $0x210] sm:$0xff]
      %v2069 = vld [vmem:[#allocation5 + $0x218] sm:$0xff]
      %v2070 = vld [vmem:[#allocation5 + $0x220] sm:$0xff]
      %v2071 = vld [vmem:[#allocation5 + $0x228] sm:$0xff]
      %v2072 = vld [vmem:[#allocation5 + $0x230] sm:$0xff]
      %v2073 = vld [vmem:[#allocation5 + $0x238] sm:$0xff]
      %v2074 = vld [vmem:[#allocation5 + $0x240] sm:$0xff]
      %v2075 = vld [vmem:[#allocation5 + $0x248] sm:$0xff]
      %v2076 = vld [vmem:[#allocation5 + $0x250] sm:$0xff]
      %v2077 = vld [vmem:[#allocation5 + $0x258] sm:$0xff]
      %v2078 = vld [vmem:[#allocation5 + $0x260] sm:$0xff]
      %v2079 = vld [vmem:[#allocation5 + $0x268] sm:$0xff]
      %v2080 = vld [vmem:[#allocation5 + $0x270] sm:$0xff]
      %v2081 = vld [vmem:[#allocation5 + $0x278] sm:$0xff]
      %v2082 = vld [vmem:[#allocation5 + $0x280] sm:$0xff]
      %v2083 = vld [vmem:[#allocation5 + $0x288] sm:$0xff]
      %v2084 = vld [vmem:[#allocation5 + $0x290] sm:$0xff]
      %v2085 = vld [vmem:[#allocation5 + $0x298] sm:$0xff]
      %v2086 = vld [vmem:[#allocation5 + $0x2a0] sm:$0xff]
      %v2087 = vld [vmem:[#allocation5 + $0x2a8] sm:$0xff]
      %v2088 = vld [vmem:[#allocation5 + $0x2b0] sm:$0xff]
      %v2089 = vld [vmem:[#allocation5 + $0x2b8] sm:$0xff]
      %v2090 = vld [vmem:[#allocation5 + $0x2c0] sm:$0xff]
      %v2091 = vld [vmem:[#allocation5 + $0x2c8] sm:$0xff]
      %v2092 = vld [vmem:[#allocation5 + $0x2d0] sm:$0xff]
      %v2093 = vld [vmem:[#allocation5 + $0x2d8] sm:$0xff]
      %v2094 = vld [vmem:[#allocation5 + $0x2e0] sm:$0xff]
      %v2095 = vld [vmem:[#allocation5 + $0x2e8] sm:$0xff]
      %v2096 = vld [vmem:[#allocation5 + $0x2f0] sm:$0xff]
      %v2097 = vld [vmem:[#allocation5 + $0x2f8] sm:$0xff]
      %v2098 = vld [vmem:[#allocation5 + $0x300] sm:$0xff]
      %v2099 = vld [vmem:[#allocation5 + $0x308] sm:$0xff]
      %v2100 = vld [vmem:[#allocation5 + $0x310] sm:$0xff]
      %v2101 = vld [vmem:[#allocation5 + $0x318] sm:$0xff]
      %v2102 = vld [vmem:[%s8] sm:$0xff]
      %v2103 = vld [vmem:[%s8 + $0x8] sm:$0xff]
      %v2104 = vld [vmem:[%s8 + $0x10] sm:$0xff]
      %2106 = vset.pattern.permute.xlu0 0
      %2107 = vperm.xlu0 %2106, %v2102
      %v2108 = vpop.permute.xlu0 %2107
      %2111 = vset.pattern.permute.xlu0 0
      %2112 = vperm.xlu0 %2111, %v2103
      %v2113 = vpop.permute.xlu0 %2112
      %2116 = vset.pattern.permute.xlu0 0
      %2117 = vperm.xlu0 %2116, %v2104
      %v2118 = vpop.permute.xlu0 %2117
      %v2121 = vsel %vm1194, %v1993, 0
      %v2124 = vsel %vm1194, %v1997, 0
      %v2127 = vsel %vm1194, %v2001, 0
      %2129 = vmatpush.msra.mxu0 %v2032
      %2130 = vmatpush.msra.mxu0 %v2030
      %2131 = vmatpush.msra.mxu0 %v2028
      %2132 = vmatpush.msra.mxu0 %v2026
      %2133 = vmatpush.msra.mxu0 %v2024
      %2134 = vmatpush.msra.mxu0 %v2022
      %2135 = vmatpush.msra.mxu0 %v2020
      %2136 = vmatpush.msra.mxu0 %v2018
      %2137 = vmatpush.msra.mxu0 %v2016
      %2138 = vmatpush.msra.mxu0 %v2014
      %2139 = vmatpush.msra.mxu0 %v2012
      %2140 = vmatpush.msra.mxu0 %v2010
      %2141 = vmatpush.msra.mxu0 %v2008
      %2142 = vmatpush.msra.mxu0 %v2006
      %2143 = vmatpush.msra.mxu0 %v2004
      %2144 = vmatpush.msra.mxu0 %v2002
      %2145 = vmatmul.f32.gmra.mxu0 %v1990
      %v2146 = vpop.f32.mrf.mxu0
      %v2147 = vadd.f32 %v2108, %v2146
      %2148 = vmatmul.f32.gmra.mxu0 %v1994
      %v2149 = vpop.f32.mrf.mxu0
      %v2150 = vadd.f32 %v2113, %v2149
      %2151 = vmatmul.f32.gmra.mxu0 %v1998
      %v2152 = vpop.f32.mrf.mxu0
      %v2153 = vadd.f32 %v2118, %v2152
      %2154 = vdwg.mxu0
      %2155 = vmatpush.msra.mxu0 %v2064
      %2156 = vmatpush.msra.mxu0 %v2062
      %2157 = vmatpush.msra.mxu0 %v2060
      %2158 = vmatpush.msra.mxu0 %v2058
      %2159 = vmatpush.msra.mxu0 %v2056
      %2160 = vmatpush.msra.mxu0 %v2054
      %2161 = vmatpush.msra.mxu0 %v2052
      %2162 = vmatpush.msra.mxu0 %v2050
      %2163 = vmatpush.msra.mxu0 %v2048
      %2164 = vmatpush.msra.mxu0 %v2046
      %2165 = vmatpush.msra.mxu0 %v2044
      %2166 = vmatpush.msra.mxu0 %v2042
      %2167 = vmatpush.msra.mxu0 %v2040
      %2168 = vmatpush.msra.mxu0 %v2038
      %2169 = vmatpush.msra.mxu0 %v2036
      %2170 = vmatpush.msra.mxu0 %v2034
      %2171 = vmatmul.f32.gmra.mxu0 %v1991
      %v2172 = vpop.f32.mrf.mxu0
      %v2173 = vadd.f32 %v2147, %v2172
      %2174 = vmatmul.f32.gmra.mxu0 %v1995
      %v2175 = vpop.f32.mrf.mxu0
      %v2176 = vadd.f32 %v2150, %v2175
      %2177 = vmatmul.f32.gmra.mxu0 %v1999
      %v2178 = vpop.f32.mrf.mxu0
      %v2179 = vadd.f32 %v2153, %v2178
      %2180 = vdwg.mxu0
      %2181 = vmatpush.msra.mxu0 %v2096
      %2182 = vmatpush.msra.mxu0 %v2094
      %2183 = vmatpush.msra.mxu0 %v2092
      %2184 = vmatpush.msra.mxu0 %v2090
      %2185 = vmatpush.msra.mxu0 %v2088
      %2186 = vmatpush.msra.mxu0 %v2086
      %2187 = vmatpush.msra.mxu0 %v2084
      %2188 = vmatpush.msra.mxu0 %v2082
      %2189 = vmatpush.msra.mxu0 %v2080
      %2190 = vmatpush.msra.mxu0 %v2078
      %2191 = vmatpush.msra.mxu0 %v2076
      %2192 = vmatpush.msra.mxu0 %v2074
      %2193 = vmatpush.msra.mxu0 %v2072
      %2194 = vmatpush.msra.mxu0 %v2070
      %2195 = vmatpush.msra.mxu0 %v2068
      %2196 = vmatpush.msra.mxu0 %v2066
      %2197 = vmatmul.f32.gmra.mxu0 %v1992
      %v2198 = vpop.f32.mrf.mxu0
      %v2199 = vadd.f32 %v2173, %v2198
      %2200 = vmatmul.f32.gmra.mxu0 %v1996
      %v2201 = vpop.f32.mrf.mxu0
      %v2202 = vadd.f32 %v2176, %v2201
      %2203 = vmatmul.f32.gmra.mxu0 %v2000
      %v2204 = vpop.f32.mrf.mxu0
      %v2205 = vadd.f32 %v2179, %v2204
      %2206 = vdwg.mxu0
      %2207 = vmatpush.msra.mxu0 0.0
      %2208 = vmatpush.msra.mxu0 0.0
      %2209 = vmatpush.msra.mxu0 0.0
      %2210 = vmatpush.msra.mxu0 0.0
      %2211 = vmatpush.msra.mxu0 0.0
      %2212 = vmatpush.msra.mxu0 0.0
      %2213 = vmatpush.msra.mxu0 0.0
      %2214 = vmatpush.msra.mxu0 0.0
      %2215 = vmatpush.msra.mxu0 0.0
      %2216 = vmatpush.msra.mxu0 0.0
      %2217 = vmatpush.msra.mxu0 0.0
      %2218 = vmatpush.msra.mxu0 0.0
      %2219 = vmatpush.msra.mxu0 0.0
      %2220 = vmatpush.msra.mxu0 0.0
      %2221 = vmatpush.msra.mxu0 %v2100
      %2222 = vmatpush.msra.mxu0 %v2098
      %2223 = vmatmul.f32.gmra.mxu0 %v2121
      %v2224 = vpop.f32.mrf.mxu0
      %v2225 = vadd.f32 %v2199, %v2224
      %2226 = vmatmul.f32.gmra.mxu0 %v2124
      %v2227 = vpop.f32.mrf.mxu0
      %v2228 = vadd.f32 %v2202, %v2227
      %2229 = vmatmul.f32.gmra.mxu0 %v2127
      %v2230 = vpop.f32.mrf.mxu0
      %v2231 = vadd.f32 %v2205, %v2230
      %2232 = vdwg.mxu0
      %2233 = vmatpush.msra.mxu0 %v2033
      %2234 = vmatpush.msra.mxu0 %v2031
      %2235 = vmatpush.msra.mxu0 %v2029
      %2236 = vmatpush.msra.mxu0 %v2027
      %2237 = vmatpush.msra.mxu0 %v2025
      %2238 = vmatpush.msra.mxu0 %v2023
      %2239 = vmatpush.msra.mxu0 %v2021
      %2240 = vmatpush.msra.mxu0 %v2019
      %2241 = vmatpush.msra.mxu0 %v2017
      %2242 = vmatpush.msra.mxu0 %v2015
      %2243 = vmatpush.msra.mxu0 %v2013
      %2244 = vmatpush.msra.mxu0 %v2011
      %2245 = vmatpush.msra.mxu0 %v2009
      %2246 = vmatpush.msra.mxu0 %v2007
      %2247 = vmatpush.msra.mxu0 %v2005
      %2248 = vmatpush.msra.mxu0 %v2003
      %2249 = vmatmul.f32.gmra.mxu0 %v1990
      %v2250 = vpop.f32.mrf.mxu0
      %v2251 = vadd.f32 %v2108, %v2250
      %2252 = vmatmul.f32.gmra.mxu0 %v1994
      %v2253 = vpop.f32.mrf.mxu0
      %v2254 = vadd.f32 %v2113, %v2253
      %2255 = vmatmul.f32.gmra.mxu0 %v1998
      %v2256 = vpop.f32.mrf.mxu0
      %v2257 = vadd.f32 %v2118, %v2256
      %2258 = vdwg.mxu0
      %2259 = vmatpush.msra.mxu0 %v2065
      %2260 = vmatpush.msra.mxu0 %v2063
      %2261 = vmatpush.msra.mxu0 %v2061
      %2262 = vmatpush.msra.mxu0 %v2059
      %2263 = vmatpush.msra.mxu0 %v2057
      %2264 = vmatpush.msra.mxu0 %v2055
      %2265 = vmatpush.msra.mxu0 %v2053
      %2266 = vmatpush.msra.mxu0 %v2051
      %2267 = vmatpush.msra.mxu0 %v2049
      %2268 = vmatpush.msra.mxu0 %v2047
      %2269 = vmatpush.msra.mxu0 %v2045
      %2270 = vmatpush.msra.mxu0 %v2043
      %2271 = vmatpush.msra.mxu0 %v2041
      %2272 = vmatpush.msra.mxu0 %v2039
      %2273 = vmatpush.msra.mxu0 %v2037
      %2274 = vmatpush.msra.mxu0 %v2035
      %2275 = vmatmul.f32.gmra.mxu0 %v1991
      %v2276 = vpop.f32.mrf.mxu0
      %v2277 = vadd.f32 %v2251, %v2276
      %2278 = vmatmul.f32.gmra.mxu0 %v1995
      %v2279 = vpop.f32.mrf.mxu0
      %v2280 = vadd.f32 %v2254, %v2279
      %2281 = vmatmul.f32.gmra.mxu0 %v1999
      %v2282 = vpop.f32.mrf.mxu0
      %v2283 = vadd.f32 %v2257, %v2282
      %2284 = vdwg.mxu0
      %2285 = vmatpush.msra.mxu0 %v2097
      %2286 = vmatpush.msra.mxu0 %v2095
      %2287 = vmatpush.msra.mxu0 %v2093
      %2288 = vmatpush.msra.mxu0 %v2091
      %2289 = vmatpush.msra.mxu0 %v2089
      %2290 = vmatpush.msra.mxu0 %v2087
      %2291 = vmatpush.msra.mxu0 %v2085
      %2292 = vmatpush.msra.mxu0 %v2083
      %2293 = vmatpush.msra.mxu0 %v2081
      %2294 = vmatpush.msra.mxu0 %v2079
      %2295 = vmatpush.msra.mxu0 %v2077
      %2296 = vmatpush.msra.mxu0 %v2075
      %2297 = vmatpush.msra.mxu0 %v2073
      %2298 = vmatpush.msra.mxu0 %v2071
      %2299 = vmatpush.msra.mxu0 %v2069
      %2300 = vmatpush.msra.mxu0 %v2067
      %2301 = vmatmul.f32.gmra.mxu0 %v1992
      %v2302 = vpop.f32.mrf.mxu0
      %v2303 = vadd.f32 %v2277, %v2302
      %2304 = vmatmul.f32.gmra.mxu0 %v1996
      %v2305 = vpop.f32.mrf.mxu0
      %v2306 = vadd.f32 %v2280, %v2305
      %2307 = vmatmul.f32.gmra.mxu0 %v2000
      %v2308 = vpop.f32.mrf.mxu0
      %v2309 = vadd.f32 %v2283, %v2308
      %2310 = vdwg.mxu0
      %2311 = vmatpush.msra.mxu0 0.0
      %2312 = vmatpush.msra.mxu0 0.0
      %2313 = vmatpush.msra.mxu0 0.0
      %2314 = vmatpush.msra.mxu0 0.0
      %2315 = vmatpush.msra.mxu0 0.0
      %2316 = vmatpush.msra.mxu0 0.0
      %2317 = vmatpush.msra.mxu0 0.0
      %2318 = vmatpush.msra.mxu0 0.0
      %2319 = vmatpush.msra.mxu0 0.0
      %2320 = vmatpush.msra.mxu0 0.0
      %2321 = vmatpush.msra.mxu0 0.0
      %2322 = vmatpush.msra.mxu0 0.0
      %2323 = vmatpush.msra.mxu0 0.0
      %2324 = vmatpush.msra.mxu0 0.0
      %2325 = vmatpush.msra.mxu0 %v2101
      %2326 = vmatpush.msra.mxu0 %v2099
      %2327 = vmatmul.f32.gmra.mxu0 %v2121
      %v2328 = vpop.f32.mrf.mxu0
      %v2329 = vadd.f32 %v2303, %v2328
      %2330 = vmatmul.f32.gmra.mxu0 %v2124
      %v2331 = vpop.f32.mrf.mxu0
      %v2332 = vadd.f32 %v2306, %v2331
      %2333 = vmatmul.f32.gmra.mxu0 %v2127
      %v2334 = vpop.f32.mrf.mxu0
      %v2335 = vadd.f32 %v2309, %v2334
      %2336 = vdwg.mxu0
      %2337 = vst [vmem:[%s386 + $0x50] sm:$0xff] %v2225
      %2338 = vst [vmem:[%s386 + $0x58] sm:$0xff] %v2329
      %2339 = vst [vmem:[%s386 + $0x60] sm:$0xff] %v2228
      %2340 = vst [vmem:[%s386 + $0x68] sm:$0xff] %v2332
      %2341 = vst [vmem:[%s386 + $0x70] sm:$0xff] %v2231
      %2342 = vst [vmem:[%s386 + $0x78] sm:$0xff] %v2335
      %v2343 = vld [vmem:[#allocation3] sm:$0xff]
      %v2344 = vld [vmem:[#allocation3 + $0x8] sm:$0xff]
      %v2345 = vld [vmem:[#allocation3 + $0x10] sm:$0xff]
      %v2346 = vld [vmem:[#allocation3 + $0x20] sm:$0xff]
      %v2347 = vld [vmem:[#allocation3 + $0x28] sm:$0xff]
      %v2348 = vld [vmem:[#allocation3 + $0x30] sm:$0xff]
      %v2349 = vmul.f32 %v2343, %v1127
      %v2350 = vmul.f32 %v2344, %v1130
      %v2351 = vmul.f32 %v2345, %v1129
      %v2352 = vmul.f32 %v2346, %v1127
      %v2353 = vmul.f32 %v2347, %v1130
      %v2354 = vmul.f32 %v2348, %v1129
      %2361 = vrot.lane.b32.xlu0 %v2349, 17
      %v2362 = vpop.permute.xlu0 %2361
      %2363 = vrot.lane.b32.xlu0 %v2350, 17
      %v2364 = vpop.permute.xlu0 %2363
      %2365 = vrot.lane.b32.xlu0 %v2351, 17
      %v2366 = vpop.permute.xlu0 %2365
      %2367 = vrot.lane.b32.xlu0 %v2352, 17
      %v2368 = vpop.permute.xlu0 %2367
      %2369 = vrot.lane.b32.xlu0 %v2353, 17
      %v2370 = vpop.permute.xlu0 %2369
      %2371 = vrot.lane.b32.xlu0 %v2354, 17
      %v2372 = vpop.permute.xlu0 %2371
      %v2373 = vsel %vm680, %v2362, %v2364
      %v2374 = vsel %vm680, %v2364, %v2366
      %v2375 = vsel %vm680, %v2368, %v2370
      %v2376 = vsel %vm680, %v2370, %v2372
      %2381 = vst [vmem:[#allocation5] sm:$0xff] %v2373
      %2382 = vst [vmem:[#allocation5 + $0x8] sm:$0xff] %v2374
      %2383 = vst [vmem:[#allocation5 + $0x10] sm:$0xff] %v2375
      %2384 = vst [vmem:[#allocation5 + $0x18] sm:$0xff] %v2376
      %v2385 = vld [vmem:[#allocation3] sm:$0xff]
      %v2386 = vld [vmem:[#allocation3 + $0x8] sm:$0xff]
      %v2387 = vld [vmem:[#allocation3 + $0x10] sm:$0xff]
      %v2388 = vld [vmem:[#allocation3 + $0x20] sm:$0xff]
      %v2389 = vld [vmem:[#allocation3 + $0x28] sm:$0xff]
      %v2390 = vld [vmem:[#allocation3 + $0x30] sm:$0xff]
      %2397 = vrot.lane.b32.xlu0 %v2385, 16
      %v2398 = vpop.permute.xlu0 %2397
      %2399 = vrot.lane.b32.xlu0 %v2386, 16
      %v2400 = vpop.permute.xlu0 %2399
      %2401 = vrot.lane.b32.xlu0 %v2387, 16
      %v2402 = vpop.permute.xlu0 %2401
      %2403 = vrot.lane.b32.xlu0 %v2388, 16
      %v2404 = vpop.permute.xlu0 %2403
      %2405 = vrot.lane.b32.xlu0 %v2389, 16
      %v2406 = vpop.permute.xlu0 %2405
      %2407 = vrot.lane.b32.xlu0 %v2390, 16
      %v2408 = vpop.permute.xlu0 %2407
      %v2409 = vsel %vm1194, %v2398, %v2400
      %v2410 = vsel %vm1194, %v2400, %v2402
      %v2411 = vsel %vm1194, %v2404, %v2406
      %v2412 = vsel %vm1194, %v2406, %v2408
      %2417 = vst [vmem:[#allocation5 + $0x20] sm:$0xff] %v2409
      %2418 = vst [vmem:[#allocation5 + $0x28] sm:$0xff] %v2410
      %2419 = vst [vmem:[#allocation5 + $0x30] sm:$0xff] %v2411
      %2420 = vst [vmem:[#allocation5 + $0x38] sm:$0xff] %v2412
      %v2421 = vld [vmem:[#allocation3] sm:$0xff]
      %v2422 = vld [vmem:[#allocation3 + $0x8] sm:$0xff]
      %v2423 = vld [vmem:[#allocation3 + $0x10] sm:$0xff]
      %v2424 = vld [vmem:[#allocation3 + $0x20] sm:$0xff]
      %v2425 = vld [vmem:[#allocation3 + $0x28] sm:$0xff]
      %v2426 = vld [vmem:[#allocation3 + $0x30] sm:$0xff]
      %v2427 = vmul.f32 %v2421, %v1214
      %v2428 = vmul.f32 %v2422, %v1217
      %v2429 = vmul.f32 %v2423, %v1216
      %v2430 = vmul.f32 %v2424, %v1214
      %v2431 = vmul.f32 %v2425, %v1217
      %v2432 = vmul.f32 %v2426, %v1216
      %2439 = vrot.lane.b32.xlu0 %v2427, 15
      %v2440 = vpop.permute.xlu0 %2439
      %2441 = vrot.lane.b32.xlu0 %v2428, 15
      %v2442 = vpop.permute.xlu0 %2441
      %2443 = vrot.lane.b32.xlu0 %v2429, 15
      %v2444 = vpop.permute.xlu0 %2443
      %2445 = vrot.lane.b32.xlu0 %v2430, 15
      %v2446 = vpop.permute.xlu0 %2445
      %2447 = vrot.lane.b32.xlu0 %v2431, 15
      %v2448 = vpop.permute.xlu0 %2447
      %2449 = vrot.lane.b32.xlu0 %v2432, 15
      %v2450 = vpop.permute.xlu0 %2449
      %v2451 = vsel %vm643, %v2440, %v2442
      %v2452 = vsel %vm643, %v2442, %v2444
      %v2453 = vsel %vm643, %v2446, %v2448
      %v2454 = vsel %vm643, %v2448, %v2450
      %2459 = vst [vmem:[#allocation5 + $0x40] sm:$0xff] %v2451
      %2460 = vst [vmem:[#allocation5 + $0x48] sm:$0xff] %v2452
      %2461 = vst [vmem:[#allocation5 + $0x50] sm:$0xff] %v2453
      %2462 = vst [vmem:[#allocation5 + $0x58] sm:$0xff] %v2454
      %v2463 = vld [vmem:[#allocation3] sm:$0xff]
      %v2464 = vld [vmem:[#allocation3 + $0x8] sm:$0xff]
      %v2465 = vld [vmem:[#allocation3 + $0x10] sm:$0xff]
      %v2466 = vld [vmem:[#allocation3 + $0x20] sm:$0xff]
      %v2467 = vld [vmem:[#allocation3 + $0x28] sm:$0xff]
      %v2468 = vld [vmem:[#allocation3 + $0x30] sm:$0xff]
      %v2469 = vmul.f32 %v2463, %v1367
      %v2470 = vmul.f32 %v2464, %v1370
      %v2471 = vmul.f32 %v2465, %v1369
      %v2472 = vmul.f32 %v2466, %v1367
      %v2473 = vmul.f32 %v2467, %v1370
      %v2474 = vmul.f32 %v2468, %v1369
      %2481 = vrot.lane.b32.xlu0 %v2469, 1
      %v2482 = vpop.permute.xlu0 %2481
      %2483 = vrot.lane.b32.xlu0 %v2470, 1
      %v2484 = vpop.permute.xlu0 %2483
      %2485 = vrot.lane.b32.xlu0 %v2471, 1
      %v2486 = vpop.permute.xlu0 %2485
      %2487 = vrot.lane.b32.xlu0 %v2472, 1
      %v2488 = vpop.permute.xlu0 %2487
      %2489 = vrot.lane.b32.xlu0 %v2473, 1
      %v2490 = vpop.permute.xlu0 %2489
      %2491 = vrot.lane.b32.xlu0 %v2474, 1
      %v2492 = vpop.permute.xlu0 %2491
      %v2493 = vsel %vm620, %v2482, %v2484
      %v2494 = vsel %vm620, %v2484, %v2486
      %v2495 = vsel %vm620, %v2488, %v2490
      %v2496 = vsel %vm620, %v2490, %v2492
      %2501 = vst [vmem:[#allocation5 + $0x60] sm:$0xff] %v2493
      %2502 = vst [vmem:[#allocation5 + $0x68] sm:$0xff] %v2494
      %2503 = vst [vmem:[#allocation5 + $0x70] sm:$0xff] %v2495
      %2504 = vst [vmem:[#allocation5 + $0x78] sm:$0xff] %v2496
      %v2505 = vld [vmem:[#allocation3 + $0x8] sm:$0xff]
      %v2506 = vld [vmem:[#allocation3 + $0x10] sm:$0xff]
      %v2507 = vld [vmem:[#allocation3 + $0x28] sm:$0xff]
      %v2508 = vld [vmem:[#allocation3 + $0x30] sm:$0xff]
      %2509 = vst [vmem:[#allocation5 + $0x80] sm:$0xff] %v2505
      %2510 = vst [vmem:[#allocation5 + $0x88] sm:$0xff] %v2506
      %2511 = vst [vmem:[#allocation5 + $0x90] sm:$0xff] %v2507
      %2512 = vst [vmem:[#allocation5 + $0x98] sm:$0xff] %v2508
      %v2513 = vld [vmem:[#allocation3 + $0x8] sm:$0xff]
      %v2514 = vld [vmem:[#allocation3 + $0x10] sm:$0xff]
      %v2515 = vld [vmem:[#allocation3 + $0x18] sm:$0xff]
      %v2516 = vld [vmem:[#allocation3 + $0x28] sm:$0xff]
      %v2517 = vld [vmem:[#allocation3 + $0x30] sm:$0xff]
      %v2518 = vld [vmem:[#allocation3 + $0x38] sm:$0xff]
      %v2519 = vmul.f32 %v2513, %v1425
      %v2520 = vmul.f32 %v2514, %v1428
      %v2521 = vmul.f32 %v2515, %v1427
      %v2522 = vmul.f32 %v2516, %v1425
      %v2523 = vmul.f32 %v2517, %v1428
      %v2524 = vmul.f32 %v2518, %v1427
      %2531 = vrot.lane.b32.xlu0 %v2519, 127
      %v2532 = vpop.permute.xlu0 %2531
      %2533 = vrot.lane.b32.xlu0 %v2520, 127
      %v2534 = vpop.permute.xlu0 %2533
      %2535 = vrot.lane.b32.xlu0 %v2521, 127
      %v2536 = vpop.permute.xlu0 %2535
      %2537 = vrot.lane.b32.xlu0 %v2522, 127
      %v2538 = vpop.permute.xlu0 %2537
      %2539 = vrot.lane.b32.xlu0 %v2523, 127
      %v2540 = vpop.permute.xlu0 %2539
      %2541 = vrot.lane.b32.xlu0 %v2524, 127
      %v2542 = vpop.permute.xlu0 %2541
      %v2543 = vsel %vm548, %v2532, %v2534
      %v2544 = vsel %vm548, %v2534, %v2536
      %v2545 = vsel %vm548, %v2538, %v2540
      %v2546 = vsel %vm548, %v2540, %v2542
      %2551 = vst [vmem:[#allocation5 + $0xa0] sm:$0xff] %v2543
      %2552 = vst [vmem:[#allocation5 + $0xa8] sm:$0xff] %v2544
      %2553 = vst [vmem:[#allocation5 + $0xb0] sm:$0xff] %v2545
      %2554 = vst [vmem:[#allocation5 + $0xb8] sm:$0xff] %v2546
      %v2555 = vld [vmem:[#allocation3 + $0x8] sm:$0xff]
      %v2556 = vld [vmem:[#allocation3 + $0x10] sm:$0xff]
      %v2557 = vld [vmem:[#allocation3 + $0x18] sm:$0xff]
      %v2558 = vld [vmem:[#allocation3 + $0x28] sm:$0xff]
      %v2559 = vld [vmem:[#allocation3 + $0x30] sm:$0xff]
      %v2560 = vld [vmem:[#allocation3 + $0x38] sm:$0xff]
      %v2561 = vmul.f32 %v2555, %v1575
      %v2562 = vmul.f32 %v2556, %v1578
      %v2563 = vmul.f32 %v2557, %v1577
      %v2564 = vmul.f32 %v2558, %v1575
      %v2565 = vmul.f32 %v2559, %v1578
      %v2566 = vmul.f32 %v2560, %v1577
      %2573 = vrot.lane.b32.xlu0 %v2561, 113
      %v2574 = vpop.permute.xlu0 %2573
      %2575 = vrot.lane.b32.xlu0 %v2562, 113
      %v2576 = vpop.permute.xlu0 %2575
      %2577 = vrot.lane.b32.xlu0 %v2563, 113
      %v2578 = vpop.permute.xlu0 %2577
      %2579 = vrot.lane.b32.xlu0 %v2564, 113
      %v2580 = vpop.permute.xlu0 %2579
      %2581 = vrot.lane.b32.xlu0 %v2565, 113
      %v2582 = vpop.permute.xlu0 %2581
      %2583 = vrot.lane.b32.xlu0 %v2566, 113
      %v2584 = vpop.permute.xlu0 %2583
      %v2585 = vsel %vm561, %v2574, %v2576
      %v2586 = vsel %vm561, %v2576, %v2578
      %v2587 = vsel %vm561, %v2580, %v2582
      %v2588 = vsel %vm561, %v2582, %v2584
      %2593 = vst [vmem:[#allocation5 + $0xc0] sm:$0xff] %v2585
      %2594 = vst [vmem:[#allocation5 + $0xc8] sm:$0xff] %v2586
      %2595 = vst [vmem:[#allocation5 + $0xd0] sm:$0xff] %v2587
      %2596 = vst [vmem:[#allocation5 + $0xd8] sm:$0xff] %v2588
      %v2597 = vld [vmem:[#allocation3 + $0x8] sm:$0xff]
      %v2598 = vld [vmem:[#allocation3 + $0x10] sm:$0xff]
      %v2599 = vld [vmem:[#allocation3 + $0x18] sm:$0xff]
      %v2600 = vld [vmem:[#allocation3 + $0x28] sm:$0xff]
      %v2601 = vld [vmem:[#allocation3 + $0x30] sm:$0xff]
      %v2602 = vld [vmem:[#allocation3 + $0x38] sm:$0xff]
      %2609 = vrot.lane.b32.xlu0 %v2597, 112
      %v2610 = vpop.permute.xlu0 %2609
      %2611 = vrot.lane.b32.xlu0 %v2598, 112
      %v2612 = vpop.permute.xlu0 %2611
      %2613 = vrot.lane.b32.xlu0 %v2599, 112
      %v2614 = vpop.permute.xlu0 %2613
      %2615 = vrot.lane.b32.xlu0 %v2600, 112
      %v2616 = vpop.permute.xlu0 %2615
      %2617 = vrot.lane.b32.xlu0 %v2601, 112
      %v2618 = vpop.permute.xlu0 %2617
      %2619 = vrot.lane.b32.xlu0 %v2602, 112
      %v2620 = vpop.permute.xlu0 %2619
      %v2621 = vsel %vm599, %v2610, %v2612
      %v2622 = vsel %vm599, %v2612, %v2614
      %v2623 = vsel %vm599, %v2616, %v2618
      %v2624 = vsel %vm599, %v2618, %v2620
      %2629 = vst [vmem:[#allocation5 + $0xe0] sm:$0xff] %v2621
      %2630 = vst [vmem:[#allocation5 + $0xe8] sm:$0xff] %v2622
      %2631 = vst [vmem:[#allocation5 + $0xf0] sm:$0xff] %v2623
      %2632 = vst [vmem:[#allocation5 + $0xf8] sm:$0xff] %v2624
      %v2633 = vld [vmem:[#allocation3 + $0x8] sm:$0xff]
      %v2634 = vld [vmem:[#allocation3 + $0x10] sm:$0xff]
      %v2635 = vld [vmem:[#allocation3 + $0x18] sm:$0xff]
      %v2636 = vld [vmem:[#allocation3 + $0x28] sm:$0xff]
      %v2637 = vld [vmem:[#allocation3 + $0x30] sm:$0xff]
      %v2638 = vld [vmem:[#allocation3 + $0x38] sm:$0xff]
      %v2639 = vmul.f32 %v2633, %v1661
      %v2640 = vmul.f32 %v2634, %v1664
      %v2641 = vmul.f32 %v2635, %v1663
      %v2642 = vmul.f32 %v2636, %v1661
      %v2643 = vmul.f32 %v2637, %v1664
      %v2644 = vmul.f32 %v2638, %v1663
      %2651 = vrot.lane.b32.xlu0 %v2639, 111
      %v2652 = vpop.permute.xlu0 %2651
      %2653 = vrot.lane.b32.xlu0 %v2640, 111
      %v2654 = vpop.permute.xlu0 %2653
      %2655 = vrot.lane.b32.xlu0 %v2641, 111
      %v2656 = vpop.permute.xlu0 %2655
      %2657 = vrot.lane.b32.xlu0 %v2642, 111
      %v2658 = vpop.permute.xlu0 %2657
      %2659 = vrot.lane.b32.xlu0 %v2643, 111
      %v2660 = vpop.permute.xlu0 %2659
      %2661 = vrot.lane.b32.xlu0 %v2644, 111
      %v2662 = vpop.permute.xlu0 %2661
      %v2663 = vsel %vm533, %v2652, %v2654
      %v2664 = vsel %vm533, %v2654, %v2656
      %v2665 = vsel %vm533, %v2658, %v2660
      %v2666 = vsel %vm533, %v2660, %v2662
      %2671 = vst [vmem:[#allocation5 + $0x100] sm:$0xff] %v2663
      %2672 = vst [vmem:[#allocation5 + $0x108] sm:$0xff] %v2664
      %2673 = vst [vmem:[#allocation5 + $0x110] sm:$0xff] %v2665
      %2674 = vst [vmem:[#allocation5 + $0x118] sm:$0xff] %v2666
      %v2675 = vld [vmem:[%s4] sm:$0xff]
      %v2676 = vld [vmem:[%s4 + $0x8] sm:$0xff]
      %v2677 = vld [vmem:[%s4 + $0x10] sm:$0xff]
      %v2678 = vld [vmem:[%s4 + $0x18] sm:$0xff]
      %v2679 = vld [vmem:[%s4 + $0x20] sm:$0xff]
      %v2680 = vld [vmem:[%s4 + $0x28] sm:$0xff]
      %v2681 = vld [vmem:[#allocation5] sm:$0xff]
      %v2682 = vld [vmem:[#allocation5 + $0x8] sm:$0xff]
      %v2683 = vld [vmem:[#allocation5 + $0x10] sm:$0xff]
      %v2684 = vld [vmem:[#allocation5 + $0x18] sm:$0xff]
      %v2685 = vld [vmem:[#allocation5 + $0x20] sm:$0xff]
      %v2686 = vld [vmem:[#allocation5 + $0x28] sm:$0xff]
      %v2687 = vld [vmem:[#allocation5 + $0x30] sm:$0xff]
      %v2688 = vld [vmem:[#allocation5 + $0x38] sm:$0xff]
      %v2689 = vld [vmem:[#allocation5 + $0x40] sm:$0xff]
      %v2690 = vld [vmem:[#allocation5 + $0x48] sm:$0xff]
      %v2691 = vld [vmem:[#allocation5 + $0x50] sm:$0xff]
      %v2692 = vld [vmem:[#allocation5 + $0x58] sm:$0xff]
      %v2693 = vld [vmem:[#allocation5 + $0x60] sm:$0xff]
      %v2694 = vld [vmem:[#allocation5 + $0x68] sm:$0xff]
      %v2695 = vld [vmem:[#allocation5 + $0x70] sm:$0xff]
      %v2696 = vld [vmem:[#allocation5 + $0x78] sm:$0xff]
      %v2697 = vld [vmem:[#allocation5 + $0x80] sm:$0xff]
      %v2698 = vld [vmem:[#allocation5 + $0x88] sm:$0xff]
      %v2699 = vld [vmem:[#allocation5 + $0x90] sm:$0xff]
      %v2700 = vld [vmem:[#allocation5 + $0x98] sm:$0xff]
      %v2701 = vld [vmem:[#allocation5 + $0xa0] sm:$0xff]
      %v2702 = vld [vmem:[#allocation5 + $0xa8] sm:$0xff]
      %v2703 = vld [vmem:[#allocation5 + $0xb0] sm:$0xff]
      %v2704 = vld [vmem:[#allocation5 + $0xb8] sm:$0xff]
      %v2705 = vld [vmem:[#allocation5 + $0xc0] sm:$0xff]
      %v2706 = vld [vmem:[#allocation5 + $0xc8] sm:$0xff]
      %v2707 = vld [vmem:[#allocation5 + $0xd0] sm:$0xff]
      %v2708 = vld [vmem:[#allocation5 + $0xd8] sm:$0xff]
      %v2709 = vld [vmem:[#allocation5 + $0xe0] sm:$0xff]
      %v2710 = vld [vmem:[#allocation5 + $0xe8] sm:$0xff]
      %v2711 = vld [vmem:[#allocation5 + $0xf0] sm:$0xff]
      %v2712 = vld [vmem:[#allocation5 + $0xf8] sm:$0xff]
      %v2713 = vld [vmem:[#allocation5 + $0x100] sm:$0xff]
      %v2714 = vld [vmem:[#allocation5 + $0x108] sm:$0xff]
      %v2715 = vld [vmem:[#allocation5 + $0x110] sm:$0xff]
      %v2716 = vld [vmem:[#allocation5 + $0x118] sm:$0xff]
      %v2717 = vld [vmem:[%s9] sm:$0xff]
      %v2718 = vld [vmem:[%s9 + $0x8] sm:$0xff]
      %v2719 = vld [vmem:[%s9 + $0x10] sm:$0xff]
      %2721 = vset.pattern.permute.xlu0 0
      %2722 = vperm.xlu0 %2721, %v2717
      %v2723 = vpop.permute.xlu0 %2722
      %2726 = vset.pattern.permute.xlu0 0
      %2727 = vperm.xlu0 %2726, %v2718
      %v2728 = vpop.permute.xlu0 %2727
      %2731 = vset.pattern.permute.xlu0 0
      %2732 = vperm.xlu0 %2731, %v2719
      %v2733 = vpop.permute.xlu0 %2732
      %v2736 = vsel %vm1194, %v2676, 0
      %v2739 = vsel %vm1194, %v2678, 0
      %v2742 = vsel %vm1194, %v2680, 0
      %2744 = vmatpush.msra.mxu0 %v2711
      %2745 = vmatpush.msra.mxu0 %v2709
      %2746 = vmatpush.msra.mxu0 %v2707
      %2747 = vmatpush.msra.mxu0 %v2705
      %2748 = vmatpush.msra.mxu0 %v2703
      %2749 = vmatpush.msra.mxu0 %v2701
      %2750 = vmatpush.msra.mxu0 %v2699
      %2751 = vmatpush.msra.mxu0 %v2697
      %2752 = vmatpush.msra.mxu0 %v2695
      %2753 = vmatpush.msra.mxu0 %v2693
      %2754 = vmatpush.msra.mxu0 %v2691
      %2755 = vmatpush.msra.mxu0 %v2689
      %2756 = vmatpush.msra.mxu0 %v2687
      %2757 = vmatpush.msra.mxu0 %v2685
      %2758 = vmatpush.msra.mxu0 %v2683
      %2759 = vmatpush.msra.mxu0 %v2681
      %2760 = vmatmul.f32.gmra.mxu0 %v2675
      %v2761 = vpop.f32.mrf.mxu0
      %v2762 = vadd.f32 %v2723, %v2761
      %2763 = vmatmul.f32.gmra.mxu0 %v2677
      %v2764 = vpop.f32.mrf.mxu0
      %v2765 = vadd.f32 %v2728, %v2764
      %2766 = vmatmul.f32.gmra.mxu0 %v2679
      %v2767 = vpop.f32.mrf.mxu0
      %v2768 = vadd.f32 %v2733, %v2767
      %2769 = vdwg.mxu0
      %2770 = vmatpush.msra.mxu0 0.0
      %2771 = vmatpush.msra.mxu0 0.0
      %2772 = vmatpush.msra.mxu0 0.0
      %2773 = vmatpush.msra.mxu0 0.0
      %2774 = vmatpush.msra.mxu0 0.0
      %2775 = vmatpush.msra.mxu0 0.0
      %2776 = vmatpush.msra.mxu0 0.0
      %2777 = vmatpush.msra.mxu0 0.0
      %2778 = vmatpush.msra.mxu0 0.0
      %2779 = vmatpush.msra.mxu0 0.0
      %2780 = vmatpush.msra.mxu0 0.0
      %2781 = vmatpush.msra.mxu0 0.0
      %2782 = vmatpush.msra.mxu0 0.0
      %2783 = vmatpush.msra.mxu0 0.0
      %2784 = vmatpush.msra.mxu0 %v2715
      %2785 = vmatpush.msra.mxu0 %v2713
      %2786 = vmatmul.f32.gmra.mxu0 %v2736
      %v2787 = vpop.f32.mrf.mxu0
      %v2788 = vadd.f32 %v2762, %v2787
      %2789 = vmatmul.f32.gmra.mxu0 %v2739
      %v2790 = vpop.f32.mrf.mxu0
      %v2791 = vadd.f32 %v2765, %v2790
      %2792 = vmatmul.f32.gmra.mxu0 %v2742
      %v2793 = vpop.f32.mrf.mxu0
      %v2794 = vadd.f32 %v2768, %v2793
      %2795 = vdwg.mxu0
      %2796 = vmatpush.msra.mxu0 %v2712
      %2797 = vmatpush.msra.mxu0 %v2710
      %2798 = vmatpush.msra.mxu0 %v2708
      %2799 = vmatpush.msra.mxu0 %v2706
      %2800 = vmatpush.msra.mxu0 %v2704
      %2801 = vmatpush.msra.mxu0 %v2702
      %2802 = vmatpush.msra.mxu0 %v2700
      %2803 = vmatpush.msra.mxu0 %v2698
      %2804 = vmatpush.msra.mxu0 %v2696
      %2805 = vmatpush.msra.mxu0 %v2694
      %2806 = vmatpush.msra.mxu0 %v2692
      %2807 = vmatpush.msra.mxu0 %v2690
      %2808 = vmatpush.msra.mxu0 %v2688
      %2809 = vmatpush.msra.mxu0 %v2686
      %2810 = vmatpush.msra.mxu0 %v2684
      %2811 = vmatpush.msra.mxu0 %v2682
      %2812 = vmatmul.f32.gmra.mxu0 %v2675
      %v2813 = vpop.f32.mrf.mxu0
      %v2814 = vadd.f32 %v2723, %v2813
      %2815 = vmatmul.f32.gmra.mxu0 %v2677
      %v2816 = vpop.f32.mrf.mxu0
      %v2817 = vadd.f32 %v2728, %v2816
      %2818 = vmatmul.f32.gmra.mxu0 %v2679
      %v2819 = vpop.f32.mrf.mxu0
      %v2820 = vadd.f32 %v2733, %v2819
      %2821 = vdwg.mxu0
      %2822 = vmatpush.msra.mxu0 0.0
      %2823 = vmatpush.msra.mxu0 0.0
      %2824 = vmatpush.msra.mxu0 0.0
      %2825 = vmatpush.msra.mxu0 0.0
      %2826 = vmatpush.msra.mxu0 0.0
      %2827 = vmatpush.msra.mxu0 0.0
      %2828 = vmatpush.msra.mxu0 0.0
      %2829 = vmatpush.msra.mxu0 0.0
      %2830 = vmatpush.msra.mxu0 0.0
      %2831 = vmatpush.msra.mxu0 0.0
      %2832 = vmatpush.msra.mxu0 0.0
      %2833 = vmatpush.msra.mxu0 0.0
      %2834 = vmatpush.msra.mxu0 0.0
      %2835 = vmatpush.msra.mxu0 0.0
      %2836 = vmatpush.msra.mxu0 %v2716
      %2837 = vmatpush.msra.mxu0 %v2714
      %2838 = vmatmul.f32.gmra.mxu0 %v2736
      %v2839 = vpop.f32.mrf.mxu0
      %v2840 = vadd.f32 %v2814, %v2839
      %2841 = vmatmul.f32.gmra.mxu0 %v2739
      %v2842 = vpop.f32.mrf.mxu0
      %v2843 = vadd.f32 %v2817, %v2842
      %2844 = vmatmul.f32.gmra.mxu0 %v2742
      %v2845 = vpop.f32.mrf.mxu0
      %v2846 = vadd.f32 %v2820, %v2845
      %2847 = vdwg.mxu0
      %2848 = vst [vmem:[#allocation4] sm:$0xff] 0.0
      %2849 = vst [vmem:[#allocation4 + $0x8] sm:$0xff] 0.0
      %2850 = vst [vmem:[#allocation4 + $0x10] sm:$0xff] 0.0
      %2851 = vst [vmem:[#allocation4 + $0x18] sm:$0xff] 0.0
      %2852 = vst [vmem:[#allocation4 + $0x20] sm:$0xff] 0.0
      %2853 = vst [vmem:[#allocation4 + $0x28] sm:$0xff] 0.0
      %2854 = vst [vmem:[#allocation4 + $0x30] sm:$0xff] 0.0
      %2855 = vst [vmem:[#allocation4 + $0x38] sm:$0xff] 0.0
      %2856 = vst [vmem:[#allocation4 + $0x40] sm:$0xff] 0.0
      %2857 = vst [vmem:[#allocation4 + $0x48] sm:$0xff] 0.0
      %2858 = vst [vmem:[#allocation4 + $0x50] sm:$0xff] 0.0
      %2859 = vst [vmem:[#allocation4 + $0x58] sm:$0xff] 0.0
      %2860 = vst [vmem:[#allocation4 + $0x8] sm:$0xff] %v2788
      %2861 = vst [vmem:[#allocation4 + $0x10] sm:$0xff] %v2840
      %2862 = vst [vmem:[#allocation4 + $0x28] sm:$0xff] %v2791
      %2863 = vst [vmem:[#allocation4 + $0x30] sm:$0xff] %v2843
      %2864 = vst [vmem:[#allocation4 + $0x48] sm:$0xff] %v2794
      %2865 = vst [vmem:[#allocation4 + $0x50] sm:$0xff] %v2846
      %v2866 = vld [vmem:[#allocation4] sm:$0xff]
      %v2867 = vld [vmem:[#allocation4 + $0x8] sm:$0xff]
      %v2868 = vld [vmem:[#allocation4 + $0x10] sm:$0xff]
      %v2869 = vld [vmem:[#allocation4 + $0x20] sm:$0xff]
      %v2870 = vld [vmem:[#allocation4 + $0x28] sm:$0xff]
      %v2871 = vld [vmem:[#allocation4 + $0x30] sm:$0xff]
      %v2872 = vld [vmem:[#allocation4 + $0x40] sm:$0xff]
      %v2873 = vld [vmem:[#allocation4 + $0x48] sm:$0xff]
      %v2874 = vld [vmem:[#allocation4 + $0x50] sm:$0xff]
      %v2875 = vmul.f32 %v2866, %v1127
      %v2876 = vmul.f32 %v2867, %v1130
      %v2877 = vmul.f32 %v2868, %v1129
      %v2878 = vmul.f32 %v2869, %v1127
      %v2879 = vmul.f32 %v2870, %v1130
      %v2880 = vmul.f32 %v2871, %v1129
      %v2881 = vmul.f32 %v2872, %v1127
      %v2882 = vmul.f32 %v2873, %v1130
      %v2883 = vmul.f32 %v2874, %v1129
      %2893 = vrot.lane.b32.xlu0 %v2875, 17
      %v2894 = vpop.permute.xlu0 %2893
      %2895 = vrot.lane.b32.xlu0 %v2876, 17
      %v2896 = vpop.permute.xlu0 %2895
      %2897 = vrot.lane.b32.xlu0 %v2877, 17
      %v2898 = vpop.permute.xlu0 %2897
      %2899 = vrot.lane.b32.xlu0 %v2878, 17
      %v2900 = vpop.permute.xlu0 %2899
      %2901 = vrot.lane.b32.xlu0 %v2879, 17
      %v2902 = vpop.permute.xlu0 %2901
      %2903 = vrot.lane.b32.xlu0 %v2880, 17
      %v2904 = vpop.permute.xlu0 %2903
      %2905 = vrot.lane.b32.xlu0 %v2881, 17
      %v2906 = vpop.permute.xlu0 %2905
      %2907 = vrot.lane.b32.xlu0 %v2882, 17
      %v2908 = vpop.permute.xlu0 %2907
      %2909 = vrot.lane.b32.xlu0 %v2883, 17
      %v2910 = vpop.permute.xlu0 %2909
      %v2911 = vsel %vm680, %v2894, %v2896
      %v2912 = vsel %vm680, %v2896, %v2898
      %v2913 = vsel %vm680, %v2900, %v2902
      %v2914 = vsel %vm680, %v2902, %v2904
      %v2915 = vsel %vm680, %v2906, %v2908
      %v2916 = vsel %vm680, %v2908, %v2910
      %2923 = vst [vmem:[#allocation5] sm:$0xff] %v2911
      %2924 = vst [vmem:[#allocation5 + $0x8] sm:$0xff] %v2912
      %2925 = vst [vmem:[#allocation5 + $0x10] sm:$0xff] %v2913
      %2926 = vst [vmem:[#allocation5 + $0x18] sm:$0xff] %v2914
      %2927 = vst [vmem:[#allocation5 + $0x20] sm:$0xff] %v2915
      %2928 = vst [vmem:[#allocation5 + $0x28] sm:$0xff] %v2916
      %v2929 = vld [vmem:[#allocation4] sm:$0xff]
      %v2930 = vld [vmem:[#allocation4 + $0x8] sm:$0xff]
      %v2931 = vld [vmem:[#allocation4 + $0x10] sm:$0xff]
      %v2932 = vld [vmem:[#allocation4 + $0x20] sm:$0xff]
      %v2933 = vld [vmem:[#allocation4 + $0x28] sm:$0xff]
      %v2934 = vld [vmem:[#allocation4 + $0x30] sm:$0xff]
      %v2935 = vld [vmem:[#allocation4 + $0x40] sm:$0xff]
      %v2936 = vld [vmem:[#allocation4 + $0x48] sm:$0xff]
      %v2937 = vld [vmem:[#allocation4 + $0x50] sm:$0xff]
      %2947 = vrot.lane.b32.xlu0 %v2929, 16
      %v2948 = vpop.permute.xlu0 %2947
      %2949 = vrot.lane.b32.xlu0 %v2930, 16
      %v2950 = vpop.permute.xlu0 %2949
      %2951 = vrot.lane.b32.xlu0 %v2931, 16
      %v2952 = vpop.permute.xlu0 %2951
      %2953 = vrot.lane.b32.xlu0 %v2932, 16
      %v2954 = vpop.permute.xlu0 %2953
      %2955 = vrot.lane.b32.xlu0 %v2933, 16
      %v2956 = vpop.permute.xlu0 %2955
      %2957 = vrot.lane.b32.xlu0 %v2934, 16
      %v2958 = vpop.permute.xlu0 %2957
      %2959 = vrot.lane.b32.xlu0 %v2935, 16
      %v2960 = vpop.permute.xlu0 %2959
      %2961 = vrot.lane.b32.xlu0 %v2936, 16
      %v2962 = vpop.permute.xlu0 %2961
      %2963 = vrot.lane.b32.xlu0 %v2937, 16
      %v2964 = vpop.permute.xlu0 %2963
      %v2965 = vsel %vm1194, %v2948, %v2950
      %v2966 = vsel %vm1194, %v2950, %v2952
      %v2967 = vsel %vm1194, %v2954, %v2956
      %v2968 = vsel %vm1194, %v2956, %v2958
      %v2969 = vsel %vm1194, %v2960, %v2962
      %v2970 = vsel %vm1194, %v2962, %v2964
      %2977 = vst [vmem:[#allocation5 + $0x30] sm:$0xff] %v2965
      %2978 = vst [vmem:[#allocation5 + $0x38] sm:$0xff] %v2966
      %2979 = vst [vmem:[#allocation5 + $0x40] sm:$0xff] %v2967
      %2980 = vst [vmem:[#allocation5 + $0x48] sm:$0xff] %v2968
      %2981 = vst [vmem:[#allocation5 + $0x50] sm:$0xff] %v2969
      %2982 = vst [vmem:[#allocation5 + $0x58] sm:$0xff] %v2970
      %v2983 = vld [vmem:[#allocation4] sm:$0xff]
      %v2984 = vld [vmem:[#allocation4 + $0x8] sm:$0xff]
      %v2985 = vld [vmem:[#allocation4 + $0x10] sm:$0xff]
      %v2986 = vld [vmem:[#allocation4 + $0x20] sm:$0xff]
      %v2987 = vld [vmem:[#allocation4 + $0x28] sm:$0xff]
      %v2988 = vld [vmem:[#allocation4 + $0x30] sm:$0xff]
      %v2989 = vld [vmem:[#allocation4 + $0x40] sm:$0xff]
      %v2990 = vld [vmem:[#allocation4 + $0x48] sm:$0xff]
      %v2991 = vld [vmem:[#allocation4 + $0x50] sm:$0xff]
      %v2992 = vmul.f32 %v2983, %v1214
      %v2993 = vmul.f32 %v2984, %v1217
      %v2994 = vmul.f32 %v2985, %v1216
      %v2995 = vmul.f32 %v2986, %v1214
      %v2996 = vmul.f32 %v2987, %v1217
      %v2997 = vmul.f32 %v2988, %v1216
      %v2998 = vmul.f32 %v2989, %v1214
      %v2999 = vmul.f32 %v2990, %v1217
      %v3000 = vmul.f32 %v2991, %v1216
      %3010 = vrot.lane.b32.xlu0 %v2992, 15
      %v3011 = vpop.permute.xlu0 %3010
      %3012 = vrot.lane.b32.xlu0 %v2993, 15
      %v3013 = vpop.permute.xlu0 %3012
      %3014 = vrot.lane.b32.xlu0 %v2994, 15
      %v3015 = vpop.permute.xlu0 %3014
      %3016 = vrot.lane.b32.xlu0 %v2995, 15
      %v3017 = vpop.permute.xlu0 %3016
      %3018 = vrot.lane.b32.xlu0 %v2996, 15
      %v3019 = vpop.permute.xlu0 %3018
      %3020 = vrot.lane.b32.xlu0 %v2997, 15
      %v3021 = vpop.permute.xlu0 %3020
      %3022 = vrot.lane.b32.xlu0 %v2998, 15
      %v3023 = vpop.permute.xlu0 %3022
      %3024 = vrot.lane.b32.xlu0 %v2999, 15
      %v3025 = vpop.permute.xlu0 %3024
      %3026 = vrot.lane.b32.xlu0 %v3000, 15
      %v3027 = vpop.permute.xlu0 %3026
      %v3028 = vsel %vm643, %v3011, %v3013
      %v3029 = vsel %vm643, %v3013, %v3015
      %v3030 = vsel %vm643, %v3017, %v3019
      %v3031 = vsel %vm643, %v3019, %v3021
      %v3032 = vsel %vm643, %v3023, %v3025
      %v3033 = vsel %vm643, %v3025, %v3027
      %3040 = vst [vmem:[#allocation5 + $0x60] sm:$0xff] %v3028
      %3041 = vst [vmem:[#allocation5 + $0x68] sm:$0xff] %v3029
      %3042 = vst [vmem:[#allocation5 + $0x70] sm:$0xff] %v3030
      %3043 = vst [vmem:[#allocation5 + $0x78] sm:$0xff] %v3031
      %3044 = vst [vmem:[#allocation5 + $0x80] sm:$0xff] %v3032
      %3045 = vst [vmem:[#allocation5 + $0x88] sm:$0xff] %v3033
      %v3046 = vld [vmem:[#allocation4] sm:$0xff]
      %v3047 = vld [vmem:[#allocation4 + $0x8] sm:$0xff]
      %v3048 = vld [vmem:[#allocation4 + $0x10] sm:$0xff]
      %v3049 = vld [vmem:[#allocation4 + $0x20] sm:$0xff]
      %v3050 = vld [vmem:[#allocation4 + $0x28] sm:$0xff]
      %v3051 = vld [vmem:[#allocation4 + $0x30] sm:$0xff]
      %v3052 = vld [vmem:[#allocation4 + $0x40] sm:$0xff]
      %v3053 = vld [vmem:[#allocation4 + $0x48] sm:$0xff]
      %v3054 = vld [vmem:[#allocation4 + $0x50] sm:$0xff]
      %v3055 = vmul.f32 %v3046, %v1367
      %v3056 = vmul.f32 %v3047, %v1370
      %v3057 = vmul.f32 %v3048, %v1369
      %v3058 = vmul.f32 %v3049, %v1367
      %v3059 = vmul.f32 %v3050, %v1370
      %v3060 = vmul.f32 %v3051, %v1369
      %v3061 = vmul.f32 %v3052, %v1367
      %v3062 = vmul.f32 %v3053, %v1370
      %v3063 = vmul.f32 %v3054, %v1369
      %3073 = vrot.lane.b32.xlu0 %v3055, 1
      %v3074 = vpop.permute.xlu0 %3073
      %3075 = vrot.lane.b32.xlu0 %v3056, 1
      %v3076 = vpop.permute.xlu0 %3075
      %3077 = vrot.lane.b32.xlu0 %v3057, 1
      %v3078 = vpop.permute.xlu0 %3077
      %3079 = vrot.lane.b32.xlu0 %v3058, 1
      %v3080 = vpop.permute.xlu0 %3079
      %3081 = vrot.lane.b32.xlu0 %v3059, 1
      %v3082 = vpop.permute.xlu0 %3081
      %3083 = vrot.lane.b32.xlu0 %v3060, 1
      %v3084 = vpop.permute.xlu0 %3083
      %3085 = vrot.lane.b32.xlu0 %v3061, 1
      %v3086 = vpop.permute.xlu0 %3085
      %3087 = vrot.lane.b32.xlu0 %v3062, 1
      %v3088 = vpop.permute.xlu0 %3087
      %3089 = vrot.lane.b32.xlu0 %v3063, 1
      %v3090 = vpop.permute.xlu0 %3089
      %v3091 = vsel %vm620, %v3074, %v3076
      %v3092 = vsel %vm620, %v3076, %v3078
      %v3093 = vsel %vm620, %v3080, %v3082
      %v3094 = vsel %vm620, %v3082, %v3084
      %v3095 = vsel %vm620, %v3086, %v3088
      %v3096 = vsel %vm620, %v3088, %v3090
      %3103 = vst [vmem:[#allocation5 + $0x90] sm:$0xff] %v3091
      %3104 = vst [vmem:[#allocation5 + $0x98] sm:$0xff] %v3092
      %3105 = vst [vmem:[#allocation5 + $0xa0] sm:$0xff] %v3093
      %3106 = vst [vmem:[#allocation5 + $0xa8] sm:$0xff] %v3094
      %3107 = vst [vmem:[#allocation5 + $0xb0] sm:$0xff] %v3095
      %3108 = vst [vmem:[#allocation5 + $0xb8] sm:$0xff] %v3096
      %v3109 = vld [vmem:[#allocation4 + $0x8] sm:$0xff]
      %v3110 = vld [vmem:[#allocation4 + $0x10] sm:$0xff]
      %v3111 = vld [vmem:[#allocation4 + $0x28] sm:$0xff]
      %v3112 = vld [vmem:[#allocation4 + $0x30] sm:$0xff]
      %v3113 = vld [vmem:[#allocation4 + $0x48] sm:$0xff]
      %v3114 = vld [vmem:[#allocation4 + $0x50] sm:$0xff]
      %3115 = vst [vmem:[#allocation5 + $0xc0] sm:$0xff] %v3109
      %3116 = vst [vmem:[#allocation5 + $0xc8] sm:$0xff] %v3110
      %3117 = vst [vmem:[#allocation5 + $0xd0] sm:$0xff] %v3111
      %3118 = vst [vmem:[#allocation5 + $0xd8] sm:$0xff] %v3112
      %3119 = vst [vmem:[#allocation5 + $0xe0] sm:$0xff] %v3113
      %3120 = vst [vmem:[#allocation5 + $0xe8] sm:$0xff] %v3114
      %v3121 = vld [vmem:[#allocation4 + $0x8] sm:$0xff]
      %v3122 = vld [vmem:[#allocation4 + $0x10] sm:$0xff]
      %v3123 = vld [vmem:[#allocation4 + $0x18] sm:$0xff]
      %v3124 = vld [vmem:[#allocation4 + $0x28] sm:$0xff]
      %v3125 = vld [vmem:[#allocation4 + $0x30] sm:$0xff]
      %v3126 = vld [vmem:[#allocation4 + $0x38] sm:$0xff]
      %v3127 = vld [vmem:[#allocation4 + $0x48] sm:$0xff]
      %v3128 = vld [vmem:[#allocation4 + $0x50] sm:$0xff]
      %v3129 = vld [vmem:[#allocation4 + $0x58] sm:$0xff]
      %v3130 = vmul.f32 %v3121, %v1425
      %v3131 = vmul.f32 %v3122, %v1428
      %v3132 = vmul.f32 %v3123, %v1427
      %v3133 = vmul.f32 %v3124, %v1425
      %v3134 = vmul.f32 %v3125, %v1428
      %v3135 = vmul.f32 %v3126, %v1427
      %v3136 = vmul.f32 %v3127, %v1425
      %v3137 = vmul.f32 %v3128, %v1428
      %v3138 = vmul.f32 %v3129, %v1427
      %3148 = vrot.lane.b32.xlu0 %v3130, 127
      %v3149 = vpop.permute.xlu0 %3148
      %3150 = vrot.lane.b32.xlu0 %v3131, 127
      %v3151 = vpop.permute.xlu0 %3150
      %3152 = vrot.lane.b32.xlu0 %v3132, 127
      %v3153 = vpop.permute.xlu0 %3152
      %3154 = vrot.lane.b32.xlu0 %v3133, 127
      %v3155 = vpop.permute.xlu0 %3154
      %3156 = vrot.lane.b32.xlu0 %v3134, 127
      %v3157 = vpop.permute.xlu0 %3156
      %3158 = vrot.lane.b32.xlu0 %v3135, 127
      %v3159 = vpop.permute.xlu0 %3158
      %3160 = vrot.lane.b32.xlu0 %v3136, 127
      %v3161 = vpop.permute.xlu0 %3160
      %3162 = vrot.lane.b32.xlu0 %v3137, 127
      %v3163 = vpop.permute.xlu0 %3162
      %3164 = vrot.lane.b32.xlu0 %v3138, 127
      %v3165 = vpop.permute.xlu0 %3164
      %v3166 = vsel %vm548, %v3149, %v3151
      %v3167 = vsel %vm548, %v3151, %v3153
      %v3168 = vsel %vm548, %v3155, %v3157
      %v3169 = vsel %vm548, %v3157, %v3159
      %v3170 = vsel %vm548, %v3161, %v3163
      %v3171 = vsel %vm548, %v3163, %v3165
      %3178 = vst [vmem:[#allocation5 + $0xf0] sm:$0xff] %v3166
      %3179 = vst [vmem:[#allocation5 + $0xf8] sm:$0xff] %v3167
      %3180 = vst [vmem:[#allocation5 + $0x100] sm:$0xff] %v3168
      %3181 = vst [vmem:[#allocation5 + $0x108] sm:$0xff] %v3169
      %3182 = vst [vmem:[#allocation5 + $0x110] sm:$0xff] %v3170
      %3183 = vst [vmem:[#allocation5 + $0x118] sm:$0xff] %v3171
      %v3184 = vld [vmem:[#allocation4 + $0x8] sm:$0xff]
      %v3185 = vld [vmem:[#allocation4 + $0x10] sm:$0xff]
      %v3186 = vld [vmem:[#allocation4 + $0x18] sm:$0xff]
      %v3187 = vld [vmem:[#allocation4 + $0x28] sm:$0xff]
      %v3188 = vld [vmem:[#allocation4 + $0x30] sm:$0xff]
      %v3189 = vld [vmem:[#allocation4 + $0x38] sm:$0xff]
      %v3190 = vld [vmem:[#allocation4 + $0x48] sm:$0xff]
      %v3191 = vld [vmem:[#allocation4 + $0x50] sm:$0xff]
      %v3192 = vld [vmem:[#allocation4 + $0x58] sm:$0xff]
      %v3193 = vmul.f32 %v3184, %v1575
      %v3194 = vmul.f32 %v3185, %v1578
      %v3195 = vmul.f32 %v3186, %v1577
      %v3196 = vmul.f32 %v3187, %v1575
      %v3197 = vmul.f32 %v3188, %v1578
      %v3198 = vmul.f32 %v3189, %v1577
      %v3199 = vmul.f32 %v3190, %v1575
      %v3200 = vmul.f32 %v3191, %v1578
      %v3201 = vmul.f32 %v3192, %v1577
      %3211 = vrot.lane.b32.xlu0 %v3193, 113
      %v3212 = vpop.permute.xlu0 %3211
      %3213 = vrot.lane.b32.xlu0 %v3194, 113
      %v3214 = vpop.permute.xlu0 %3213
      %3215 = vrot.lane.b32.xlu0 %v3195, 113
      %v3216 = vpop.permute.xlu0 %3215
      %3217 = vrot.lane.b32.xlu0 %v3196, 113
      %v3218 = vpop.permute.xlu0 %3217
      %3219 = vrot.lane.b32.xlu0 %v3197, 113
      %v3220 = vpop.permute.xlu0 %3219
      %3221 = vrot.lane.b32.xlu0 %v3198, 113
      %v3222 = vpop.permute.xlu0 %3221
      %3223 = vrot.lane.b32.xlu0 %v3199, 113
      %v3224 = vpop.permute.xlu0 %3223
      %3225 = vrot.lane.b32.xlu0 %v3200, 113
      %v3226 = vpop.permute.xlu0 %3225
      %3227 = vrot.lane.b32.xlu0 %v3201, 113
      %v3228 = vpop.permute.xlu0 %3227
      %v3229 = vsel %vm561, %v3212, %v3214
      %v3230 = vsel %vm561, %v3214, %v3216
      %v3231 = vsel %vm561, %v3218, %v3220
      %v3232 = vsel %vm561, %v3220, %v3222
      %v3233 = vsel %vm561, %v3224, %v3226
      %v3234 = vsel %vm561, %v3226, %v3228
      %3241 = vst [vmem:[#allocation5 + $0x120] sm:$0xff] %v3229
      %3242 = vst [vmem:[#allocation5 + $0x128] sm:$0xff] %v3230
      %3243 = vst [vmem:[#allocation5 + $0x130] sm:$0xff] %v3231
      %3244 = vst [vmem:[#allocation5 + $0x138] sm:$0xff] %v3232
      %3245 = vst [vmem:[#allocation5 + $0x140] sm:$0xff] %v3233
      %3246 = vst [vmem:[#allocation5 + $0x148] sm:$0xff] %v3234
      %v3247 = vld [vmem:[#allocation4 + $0x8] sm:$0xff]
      %v3248 = vld [vmem:[#allocation4 + $0x10] sm:$0xff]
      %v3249 = vld [vmem:[#allocation4 + $0x18] sm:$0xff]
      %v3250 = vld [vmem:[#allocation4 + $0x28] sm:$0xff]
      %v3251 = vld [vmem:[#allocation4 + $0x30] sm:$0xff]
      %v3252 = vld [vmem:[#allocation4 + $0x38] sm:$0xff]
      %v3253 = vld [vmem:[#allocation4 + $0x48] sm:$0xff]
      %v3254 = vld [vmem:[#allocation4 + $0x50] sm:$0xff]
      %v3255 = vld [vmem:[#allocation4 + $0x58] sm:$0xff]
      %3265 = vrot.lane.b32.xlu0 %v3247, 112
      %v3266 = vpop.permute.xlu0 %3265
      %3267 = vrot.lane.b32.xlu0 %v3248, 112
      %v3268 = vpop.permute.xlu0 %3267
      %3269 = vrot.lane.b32.xlu0 %v3249, 112
      %v3270 = vpop.permute.xlu0 %3269
      %3271 = vrot.lane.b32.xlu0 %v3250, 112
      %v3272 = vpop.permute.xlu0 %3271
      %3273 = vrot.lane.b32.xlu0 %v3251, 112
      %v3274 = vpop.permute.xlu0 %3273
      %3275 = vrot.lane.b32.xlu0 %v3252, 112
      %v3276 = vpop.permute.xlu0 %3275
      %3277 = vrot.lane.b32.xlu0 %v3253, 112
      %v3278 = vpop.permute.xlu0 %3277
      %3279 = vrot.lane.b32.xlu0 %v3254, 112
      %v3280 = vpop.permute.xlu0 %3279
      %3281 = vrot.lane.b32.xlu0 %v3255, 112
      %v3282 = vpop.permute.xlu0 %3281
      %v3283 = vsel %vm599, %v3266, %v3268
      %v3284 = vsel %vm599, %v3268, %v3270
      %v3285 = vsel %vm599, %v3272, %v3274
      %v3286 = vsel %vm599, %v3274, %v3276
      %v3287 = vsel %vm599, %v3278, %v3280
      %v3288 = vsel %vm599, %v3280, %v3282
      %3295 = vst [vmem:[#allocation5 + $0x150] sm:$0xff] %v3283
      %3296 = vst [vmem:[#allocation5 + $0x158] sm:$0xff] %v3284
      %3297 = vst [vmem:[#allocation5 + $0x160] sm:$0xff] %v3285
      %3298 = vst [vmem:[#allocation5 + $0x168] sm:$0xff] %v3286
      %3299 = vst [vmem:[#allocation5 + $0x170] sm:$0xff] %v3287
      %3300 = vst [vmem:[#allocation5 + $0x178] sm:$0xff] %v3288
      %v3301 = vld [vmem:[#allocation4 + $0x8] sm:$0xff]
      %v3302 = vld [vmem:[#allocation4 + $0x10] sm:$0xff]
      %v3303 = vld [vmem:[#allocation4 + $0x18] sm:$0xff]
      %v3304 = vld [vmem:[#allocation4 + $0x28] sm:$0xff]
      %v3305 = vld [vmem:[#allocation4 + $0x30] sm:$0xff]
      %v3306 = vld [vmem:[#allocation4 + $0x38] sm:$0xff]
      %v3307 = vld [vmem:[#allocation4 + $0x48] sm:$0xff]
      %v3308 = vld [vmem:[#allocation4 + $0x50] sm:$0xff]
      %v3309 = vld [vmem:[#allocation4 + $0x58] sm:$0xff]
      %v3310 = vmul.f32 %v3301, %v1661
      %v3311 = vmul.f32 %v3302, %v1664
      %v3312 = vmul.f32 %v3303, %v1663
      %v3313 = vmul.f32 %v3304, %v1661
      %v3314 = vmul.f32 %v3305, %v1664
      %v3315 = vmul.f32 %v3306, %v1663
      %v3316 = vmul.f32 %v3307, %v1661
      %v3317 = vmul.f32 %v3308, %v1664
      %v3318 = vmul.f32 %v3309, %v1663
      %3328 = vrot.lane.b32.xlu0 %v3310, 111
      %v3329 = vpop.permute.xlu0 %3328
      %3330 = vrot.lane.b32.xlu0 %v3311, 111
      %v3331 = vpop.permute.xlu0 %3330
      %3332 = vrot.lane.b32.xlu0 %v3312, 111
      %v3333 = vpop.permute.xlu0 %3332
      %3334 = vrot.lane.b32.xlu0 %v3313, 111
      %v3335 = vpop.permute.xlu0 %3334
      %3336 = vrot.lane.b32.xlu0 %v3314, 111
      %v3337 = vpop.permute.xlu0 %3336
      %3338 = vrot.lane.b32.xlu0 %v3315, 111
      %v3339 = vpop.permute.xlu0 %3338
      %3340 = vrot.lane.b32.xlu0 %v3316, 111
      %v3341 = vpop.permute.xlu0 %3340
      %3342 = vrot.lane.b32.xlu0 %v3317, 111
      %v3343 = vpop.permute.xlu0 %3342
      %3344 = vrot.lane.b32.xlu0 %v3318, 111
      %v3345 = vpop.permute.xlu0 %3344
      %v3346 = vsel %vm533, %v3329, %v3331
      %v3347 = vsel %vm533, %v3331, %v3333
      %v3348 = vsel %vm533, %v3335, %v3337
      %v3349 = vsel %vm533, %v3337, %v3339
      %v3350 = vsel %vm533, %v3341, %v3343
      %v3351 = vsel %vm533, %v3343, %v3345
      %3358 = vst [vmem:[#allocation5 + $0x180] sm:$0xff] %v3346
      %3359 = vst [vmem:[#allocation5 + $0x188] sm:$0xff] %v3347
      %3360 = vst [vmem:[#allocation5 + $0x190] sm:$0xff] %v3348
      %3361 = vst [vmem:[#allocation5 + $0x198] sm:$0xff] %v3349
      %3362 = vst [vmem:[#allocation5 + $0x1a0] sm:$0xff] %v3350
      %3363 = vst [vmem:[#allocation5 + $0x1a8] sm:$0xff] %v3351
      %v3364 = vld [vmem:[%s5] sm:$0xff]
      %v3365 = vld [vmem:[%s5 + $0x8] sm:$0xff]
      %v3366 = vld [vmem:[%s5 + $0x10] sm:$0xff]
      %v3367 = vld [vmem:[%s5 + $0x18] sm:$0xff]
      %v3368 = vld [vmem:[%s5 + $0x20] sm:$0xff]
      %v3369 = vld [vmem:[%s5 + $0x28] sm:$0xff]
      %v3370 = vld [vmem:[#allocation5] sm:$0xff]
      %v3371 = vld [vmem:[#allocation5 + $0x8] sm:$0xff]
      %v3372 = vld [vmem:[#allocation5 + $0x10] sm:$0xff]
      %v3373 = vld [vmem:[#allocation5 + $0x18] sm:$0xff]
      %v3374 = vld [vmem:[#allocation5 + $0x20] sm:$0xff]
      %v3375 = vld [vmem:[#allocation5 + $0x28] sm:$0xff]
      %v3376 = vld [vmem:[#allocation5 + $0x30] sm:$0xff]
      %v3377 = vld [vmem:[#allocation5 + $0x38] sm:$0xff]
      %v3378 = vld [vmem:[#allocation5 + $0x40] sm:$0xff]
      %v3379 = vld [vmem:[#allocation5 + $0x48] sm:$0xff]
      %v3380 = vld [vmem:[#allocation5 + $0x50] sm:$0xff]
      %v3381 = vld [vmem:[#allocation5 + $0x58] sm:$0xff]
      %v3382 = vld [vmem:[#allocation5 + $0x60] sm:$0xff]
      %v3383 = vld [vmem:[#allocation5 + $0x68] sm:$0xff]
      %v3384 = vld [vmem:[#allocation5 + $0x70] sm:$0xff]
      %v3385 = vld [vmem:[#allocation5 + $0x78] sm:$0xff]
      %v3386 = vld [vmem:[#allocation5 + $0x80] sm:$0xff]
      %v3387 = vld [vmem:[#allocation5 + $0x88] sm:$0xff]
      %v3388 = vld [vmem:[#allocation5 + $0x90] sm:$0xff]
      %v3389 = vld [vmem:[#allocation5 + $0x98] sm:$0xff]
      %v3390 = vld [vmem:[#allocation5 + $0xa0] sm:$0xff]
      %v3391 = vld [vmem:[#allocation5 + $0xa8] sm:$0xff]
      %v3392 = vld [vmem:[#allocation5 + $0xb0] sm:$0xff]
      %v3393 = vld [vmem:[#allocation5 + $0xb8] sm:$0xff]
      %v3394 = vld [vmem:[#allocation5 + $0xc0] sm:$0xff]
      %v3395 = vld [vmem:[#allocation5 + $0xc8] sm:$0xff]
      %v3396 = vld [vmem:[#allocation5 + $0xd0] sm:$0xff]
      %v3397 = vld [vmem:[#allocation5 + $0xd8] sm:$0xff]
      %v3398 = vld [vmem:[#allocation5 + $0xe0] sm:$0xff]
      %v3399 = vld [vmem:[#allocation5 + $0xe8] sm:$0xff]
      %v3400 = vld [vmem:[#allocation5 + $0xf0] sm:$0xff]
      %v3401 = vld [vmem:[#allocation5 + $0xf8] sm:$0xff]
      %v3402 = vld [vmem:[#allocation5 + $0x100] sm:$0xff]
      %v3403 = vld [vmem:[#allocation5 + $0x108] sm:$0xff]
      %v3404 = vld [vmem:[#allocation5 + $0x110] sm:$0xff]
      %v3405 = vld [vmem:[#allocation5 + $0x118] sm:$0xff]
      %v3406 = vld [vmem:[#allocation5 + $0x120] sm:$0xff]
      %v3407 = vld [vmem:[#allocation5 + $0x128] sm:$0xff]
      %v3408 = vld [vmem:[#allocation5 + $0x130] sm:$0xff]
      %v3409 = vld [vmem:[#allocation5 + $0x138] sm:$0xff]
      %v3410 = vld [vmem:[#allocation5 + $0x140] sm:$0xff]
      %v3411 = vld [vmem:[#allocation5 + $0x148] sm:$0xff]
      %v3412 = vld [vmem:[#allocation5 + $0x150] sm:$0xff]
      %v3413 = vld [vmem:[#allocation5 + $0x158] sm:$0xff]
      %v3414 = vld [vmem:[#allocation5 + $0x160] sm:$0xff]
      %v3415 = vld [vmem:[#allocation5 + $0x168] sm:$0xff]
      %v3416 = vld [vmem:[#allocation5 + $0x170] sm:$0xff]
      %v3417 = vld [vmem:[#allocation5 + $0x178] sm:$0xff]
      %v3418 = vld [vmem:[#allocation5 + $0x180] sm:$0xff]
      %v3419 = vld [vmem:[#allocation5 + $0x188] sm:$0xff]
      %v3420 = vld [vmem:[#allocation5 + $0x190] sm:$0xff]
      %v3421 = vld [vmem:[#allocation5 + $0x198] sm:$0xff]
      %v3422 = vld [vmem:[#allocation5 + $0x1a0] sm:$0xff]
      %v3423 = vld [vmem:[#allocation5 + $0x1a8] sm:$0xff]
      %v3424 = vld [vmem:[%s10] sm:$0xff]
      %v3425 = vld [vmem:[%s10 + $0x8] sm:$0xff]
      %v3426 = vld [vmem:[%s10 + $0x10] sm:$0xff]
      %3428 = vset.pattern.permute.xlu0 0
      %3429 = vperm.xlu0 %3428, %v3424
      %v3430 = vpop.permute.xlu0 %3429
      %3433 = vset.pattern.permute.xlu0 0
      %3434 = vperm.xlu0 %3433, %v3425
      %v3435 = vpop.permute.xlu0 %3434
      %3438 = vset.pattern.permute.xlu0 0
      %3439 = vperm.xlu0 %3438, %v3426
      %v3440 = vpop.permute.xlu0 %3439
      %vm3442 = vcmask 719872
      %v3444 = vsel %vm3442, %v3365, 0
      %v3447 = vsel %vm3442, %v3367, 0
      %v3450 = vsel %vm3442, %v3369, 0
      %3452 = vmatpush.msra.mxu0 %v3400
      %3453 = vmatpush.msra.mxu0 %v3398
      %3454 = vmatpush.msra.mxu0 %v3396
      %3455 = vmatpush.msra.mxu0 %v3394
      %3456 = vmatpush.msra.mxu0 %v3392
      %3457 = vmatpush.msra.mxu0 %v3390
      %3458 = vmatpush.msra.mxu0 %v3388
      %3459 = vmatpush.msra.mxu0 %v3386
      %3460 = vmatpush.msra.mxu0 %v3384
      %3461 = vmatpush.msra.mxu0 %v3382
      %3462 = vmatpush.msra.mxu0 %v3380
      %3463 = vmatpush.msra.mxu0 %v3378
      %3464 = vmatpush.msra.mxu0 %v3376
      %3465 = vmatpush.msra.mxu0 %v3374
      %3466 = vmatpush.msra.mxu0 %v3372
      %3467 = vmatpush.msra.mxu0 %v3370
      %3468 = vmatmul.f32.gmra.mxu0 %v3364
      %v3469 = vpop.f32.mrf.mxu0
      %v3470 = vadd.f32 %v3430, %v3469
      %3471 = vmatmul.f32.gmra.mxu0 %v3366
      %v3472 = vpop.f32.mrf.mxu0
      %v3473 = vadd.f32 %v3435, %v3472
      %3474 = vmatmul.f32.gmra.mxu0 %v3368
      %v3475 = vpop.f32.mrf.mxu0
      %v3476 = vadd.f32 %v3440, %v3475
      %3477 = vdwg.mxu0
      %3478 = vmatpush.msra.mxu0 0.0
      %3479 = vmatpush.msra.mxu0 0.0
      %3480 = vmatpush.msra.mxu0 0.0
      %3481 = vmatpush.msra.mxu0 0.0
      %3482 = vmatpush.msra.mxu0 0.0
      %3483 = vmatpush.msra.mxu0 %v3422
      %3484 = vmatpush.msra.mxu0 %v3420
      %3485 = vmatpush.msra.mxu0 %v3418
      %3486 = vmatpush.msra.mxu0 %v3416
      %3487 = vmatpush.msra.mxu0 %v3414
      %3488 = vmatpush.msra.mxu0 %v3412
      %3489 = vmatpush.msra.mxu0 %v3410
      %3490 = vmatpush.msra.mxu0 %v3408
      %3491 = vmatpush.msra.mxu0 %v3406
      %3492 = vmatpush.msra.mxu0 %v3404
      %3493 = vmatpush.msra.mxu0 %v3402
      %3494 = vmatmul.f32.gmra.mxu0 %v3444
      %v3495 = vpop.f32.mrf.mxu0
      %v3496 = vadd.f32 %v3470, %v3495
      %3497 = vmatmul.f32.gmra.mxu0 %v3447
      %v3498 = vpop.f32.mrf.mxu0
      %v3499 = vadd.f32 %v3473, %v3498
      %3500 = vmatmul.f32.gmra.mxu0 %v3450
      %v3501 = vpop.f32.mrf.mxu0
      %v3502 = vadd.f32 %v3476, %v3501
      %3503 = vdwg.mxu0
      %3504 = vmatpush.msra.mxu0 %v3401
      %3505 = vmatpush.msra.mxu0 %v3399
      %3506 = vmatpush.msra.mxu0 %v3397
      %3507 = vmatpush.msra.mxu0 %v3395
      %3508 = vmatpush.msra.mxu0 %v3393
      %3509 = vmatpush.msra.mxu0 %v3391
      %3510 = vmatpush.msra.mxu0 %v3389
      %3511 = vmatpush.msra.mxu0 %v3387
      %3512 = vmatpush.msra.mxu0 %v3385
      %3513 = vmatpush.msra.mxu0 %v3383
      %3514 = vmatpush.msra.mxu0 %v3381
      %3515 = vmatpush.msra.mxu0 %v3379
      %3516 = vmatpush.msra.mxu0 %v3377
      %3517 = vmatpush.msra.mxu0 %v3375
      %3518 = vmatpush.msra.mxu0 %v3373
      %3519 = vmatpush.msra.mxu0 %v3371
      %3520 = vmatmul.f32.gmra.mxu0 %v3364
      %v3521 = vpop.f32.mrf.mxu0
      %v3522 = vadd.f32 %v3430, %v3521
      %3523 = vmatmul.f32.gmra.mxu0 %v3366
      %v3524 = vpop.f32.mrf.mxu0
      %v3525 = vadd.f32 %v3435, %v3524
      %3526 = vmatmul.f32.gmra.mxu0 %v3368
      %v3527 = vpop.f32.mrf.mxu0
      %v3528 = vadd.f32 %v3440, %v3527
      %3529 = vdwg.mxu0
      %3530 = vmatpush.msra.mxu0 0.0
      %3531 = vmatpush.msra.mxu0 0.0
      %3532 = vmatpush.msra.mxu0 0.0
      %3533 = vmatpush.msra.mxu0 0.0
      %3534 = vmatpush.msra.mxu0 0.0
      %3535 = vmatpush.msra.mxu0 %v3423
      %3536 = vmatpush.msra.mxu0 %v3421
      %3537 = vmatpush.msra.mxu0 %v3419
      %3538 = vmatpush.msra.mxu0 %v3417
      %3539 = vmatpush.msra.mxu0 %v3415
      %3540 = vmatpush.msra.mxu0 %v3413
      %3541 = vmatpush.msra.mxu0 %v3411
      %3542 = vmatpush.msra.mxu0 %v3409
      %3543 = vmatpush.msra.mxu0 %v3407
      %3544 = vmatpush.msra.mxu0 %v3405
      %3545 = vmatpush.msra.mxu0 %v3403
      %3546 = vmatmul.f32.gmra.mxu0 %v3444
      %v3547 = vpop.f32.mrf.mxu0
      %v3548 = vadd.f32 %v3522, %v3547
      %3549 = vmatmul.f32.gmra.mxu0 %v3447
      %v3550 = vpop.f32.mrf.mxu0
      %v3551 = vadd.f32 %v3525, %v3550
      %3552 = vmatmul.f32.gmra.mxu0 %v3450
      %v3553 = vpop.f32.mrf.mxu0
      %v3554 = vadd.f32 %v3528, %v3553
      %3555 = vdwg.mxu0
      %3556 = vst [vmem:[%s386 + $0x80] sm:$0xff] %v3496
      %3557 = vst [vmem:[%s386 + $0x88] sm:$0xff] %v3548
      %3558 = vst [vmem:[%s386 + $0x90] sm:$0xff] %v3499
      %3559 = vst [vmem:[%s386 + $0x98] sm:$0xff] %v3551
      %3560 = vst [vmem:[%s386 + $0xa0] sm:$0xff] %v3502
      %3561 = vst [vmem:[%s386 + $0xa8] sm:$0xff] %v3554
      %p3562 = scmp.lt.s32.totalorder %s22, 1
      %s3563 = scalar_select %p3562, %s22, 1
      %s3564 = smul.addr %s3563, 22
      %s3565 = smul.addr %s3564, 8
      %s3566 = scalar_lea.vmem %s11, %s3565
      // Predicated region
      $region65: #{inception_forward.1} parent=63 // pred_check
        %p3567 = pneg %p276
      $region66: #{inception_forward.1} parent=63 // pred_check_branch
        %3569 = sbr.rel (%p3567) target = $region68
      $region67: #{inception_forward.1} parent=63 // pred_region
        _
      $region68: #{inception_forward.1} parent=63 // pred_fallthru
        _
    $region64: #{inception_forward.1} parent=5 // pred_fallthru
      _
    %p3570 = scmp.le.s32.totalorder 2, %s17
    // Predicated region
    $region69: #{inception_forward.1} parent=5 // pred_check
      %p3571 = pneg %p3570
    $region70: #{inception_forward.1} parent=5 // pred_check_branch
      %3573 = sbr.rel (%p3571) target = $region72
    $region71: #{inception_forward.1} parent=5 // pred_region
      %s3574 = ssub.s32 %s17, 2
      // Predicated region
      $region73: #{inception_forward.1} parent=71 // pred_check
        %p3575 = pneg %p282
      $region74: #{inception_forward.1} parent=71 // pred_check_branch
        %3577 = sbr.rel (%p3575) target = $region76
      $region75: #{inception_forward.1} parent=71 // pred_region
        %p3578 = scmp.lt.s32.totalorder %s23, 1
        %s3579 = scalar_select %p3578, %s23, 1
        %s3580 = smul.addr %s3579, 22
        %s3581 = smul.addr %s3580, 8
        %s3582 = scalar_lea.vmem %s11, %s3581
      $region76: #{inception_forward.1} parent=71 // pred_fallthru
        _
    $region72: #{inception_forward.1} parent=5 // pred_fallthru
      _
  $region6: #{inception_forward.1} parent=0 // loop_footer
    %s21 = sadd.s32 1, %s17
  $region7: #{inception_forward.1} parent=0 // loop_footer_branch
    %16 = sbr.rel target = $region3
  $region8: #{inception_forward.1} parent=0 // loop_exit
    _

</llo_original>
